<compile_context>
chip_gen: v7x
topology: tpu7x:2x2x1
jax: 0.10.0
libtpu: 0.0.40
codegen_flags: <defaults>
</compile_context>

<pallas_src>
import jax
import jax.numpy as jnp
from jax.experimental import pallas as pl
from jax.experimental.pallas import tpu as pltpu


# ----------------------------------------------------------------------------
# Fused bidirectional GRU layer (+ final linear/tanh) — single kernel.
# ----------------------------------------------------------------------------
def _make_bigru_layer_kernel(T: int, B: int, H: int):
    def _sigmoid(x):
        return 1.0 / (1.0 + jnp.exp(-x))

    def kernel(lens_ref, x_ref, wih_ref, bih_ref, whh_ref, bhh_ref,
               wlin_ref, blin_ref, out_ref, hid_ref):
        lens = lens_ref[...]                                   # (B, 1) int32

        # --- hoisted input->hidden gates: ONE big MXU matmul, both dirs -----
        # x_ref: (T*B, D), wih_ref: (D, 6H) = [W_ih_fwd^T | W_ih_bwd^T]
        gi_all = jnp.dot(x_ref[...], wih_ref[...],
                         preferred_element_type=jnp.float32) + bih_ref[...]

        def cell(gi, gh, h):
            r = _sigmoid(gi[:, 0 * H:1 * H] + gh[:, 0 * H:1 * H])
            z = _sigmoid(gi[:, 1 * H:2 * H] + gh[:, 1 * H:2 * H])
            n = jnp.tanh(gi[:, 2 * H:3 * H] + r * gh[:, 2 * H:3 * H])
            return (1.0 - z) * n + z * h

        h_f = jnp.zeros((B, H), jnp.float32)
        h_b = jnp.zeros((B, H), jnp.float32)

        # Statically unrolled recurrence (T is small & static). Only the
        # h-dependent (B,2H)x(2H,6H) matmul sits on the serial critical path.
        for s in range(T):
            t_f = s                 # forward walks 0 .. T-1
            t_b = T - 1 - s         # backward walks T-1 .. 0
            h_cat = jnp.concatenate([h_f, h_b], axis=-1)        # (B, 2H)
            # block-diagonal recurrent weights: both directions in one matmul
            gh = jnp.dot(h_cat, whh_ref[...],
                         preferred_element_type=jnp.float32) + bhh_ref[...]
            gi_f = gi_all[t_f * B:(t_f + 1) * B, 0:3 * H]
            gi_b = gi_all[t_b * B:(t_b + 1) * B, 3 * H:6 * H]
            hn_f = cell(gi_f, gh[:, 0:3 * H], h_f)
            hn_b = cell(gi_b, gh[:, 3 * H:6 * H], h_b)

            mask_f = lens > t_f                                 # (B, 1) bool
            mask_b = lens > t_b
            h_f = jnp.where(mask_f, hn_f, h_f)                  # freeze past len
            h_b = jnp.where(mask_b, hn_b, h_b)                  # 0 until len-1

            # packed-sequence outputs: padded positions are zero
            out_ref[t_f * B:(t_f + 1) * B, 0:H] = jnp.where(
                mask_f, hn_f, jnp.zeros_like(hn_f))
            out_ref[t_b * B:(t_b + 1) * B, H:2 * H] = jnp.where(
                mask_b, hn_b, jnp.zeros_like(hn_b))

        # fused hidden = tanh(Linear(cat(h_fwd, h_bwd)))
        h_last = jnp.concatenate([h_f, h_b], axis=-1)           # (B, 2H)
        hid_ref[...] = jnp.tanh(
            jnp.dot(h_last, wlin_ref[...],
                    preferred_element_type=jnp.float32) + blin_ref[...])

    return kernel


def bigru_layer(x_flat, lens, layer_w, w_lin_t, b_lin, *, T, B, H):
    """x_flat: (T*B, D_in). Returns (out_flat (T*B, 2H), hidden (B, H))."""
    D = x_flat.shape[1]
    kernel = _make_bigru_layer_kernel(T, B, H)
    out_flat, hidden = pl.pallas_call(
        kernel,
        out_shape=(
            jax.ShapeDtypeStruct((T * B, 2 * H), jnp.float32),
            jax.ShapeDtypeStruct((B, H), jnp.float32),
        ),
        grid=(1,),
        in_specs=[
            pl.BlockSpec((B, 1), lambda i: (0, 0)),             # lens
            pl.BlockSpec((T * B, D), lambda i: (0, 0)),         # x (time-flat)
            pl.BlockSpec((D, 6 * H), lambda i: (0, 0)),         # [Wih_f^T|Wih_b^T]
            pl.BlockSpec((1, 6 * H), lambda i: (0, 0)),         # [bih_f|bih_b]
            pl.BlockSpec((2 * H, 6 * H), lambda i: (0, 0)),     # block-diag Whh^T
            pl.BlockSpec((1, 6 * H), lambda i: (0, 0)),         # [bhh_f|bhh_b]
            pl.BlockSpec((2 * H, H), lambda i: (0, 0)),         # linear W^T
            pl.BlockSpec((1, H), lambda i: (0, 0)),             # linear b
        ],
        out_specs=(
            pl.BlockSpec((T * B, 2 * H), lambda i: (0, 0)),
            pl.BlockSpec((B, H), lambda i: (0, 0)),
        ),
        compiler_params=pltpu.CompilerParams(
            dimension_semantics=("arbitrary",)),
    )(lens, x_flat,
      layer_w["w_ih_cat"], layer_w["b_ih_cat"],
      layer_w["w_hh_bd"], layer_w["b_hh_cat"],
      w_lin_t, b_lin)
    return out_flat, hidden


# ----------------------------------------------------------------------------
# Encoder forward
# ----------------------------------------------------------------------------
def encoder_forward(params, input_ids, input_len):
    T, B = input_ids.shape
    H = params["embedding"].shape[1]

    # Embedding lookup (gather) — plain-XLA glue feeding the Pallas kernels.
    emb = jnp.take(params["embedding"], input_ids, axis=0)       # (T, B, H)
    # TODO(synk): nn.Dropout(0.1) — identity under eval semantics.
    x_flat = emb.reshape(T * B, H).astype(jnp.float32)
    lens = input_len.reshape(B, 1).astype(jnp.int32)

    hidden = None
    for layer_w in params["gru_layers"]:
        # Linear/tanh is fused into every layer kernel for spec uniformity;
        # only the last layer's `hidden` is consumed (extra cost is a tiny
        # (B,2H)x(2H,H) matmul per non-final layer).
        x_flat, hidden = bigru_layer(
            x_flat, lens, layer_w, params["linear_w_t"], params["linear_b"],
            T=T, B=B, H=H)
        # TODO(synk): inter-layer GRU dropout — identity under eval semantics.

    rnn_output = x_flat.reshape(T, B, 2 * H)                     # (T, B, 2H)
    return rnn_output, hidden


# ----------------------------------------------------------------------------
# Deterministic parameter construction (PyTorch layouts, packed for the kernel)
# ----------------------------------------------------------------------------
def init_params(key, vocab, hidden, n_layer):
    counter = [0]

    def rnd(shape, scale=0.1):
        counter[0] += 1
        k = jax.random.fold_in(key, counter[0])
        return (scale * jax.random.normal(k, shape)).astype(jnp.float32)

    H = hidden
    params = {
        "embedding": rnd((vocab, H)),        # embedding_size == hidden_size
        "gru_layers": [],
    }
    for layer in range(n_layer):
        d_in = H if layer == 0 else 2 * H
        w_ih, w_hh, b_ih, b_hh = {}, {}, {}, {}
        for d in ("fwd", "bwd"):
            w_ih[d] = rnd((3 * H, d_in))     # PyTorch weight_ih_l{k}[_reverse]
            w_hh[d] = rnd((3 * H, H))        # PyTorch weight_hh_l{k}[_reverse]
            b_ih[d] = rnd((3 * H,))
            b_hh[d] = rnd((3 * H,))
        # Pack for the fused kernel:
        w_ih_cat = jnp.concatenate([w_ih["fwd"].T, w_ih["bwd"].T], axis=1)  # (d_in, 6H)
        b_ih_cat = jnp.concatenate([b_ih["fwd"], b_ih["bwd"]])[None, :]     # (1, 6H)
        w_hh_bd = jnp.zeros((2 * H, 6 * H), jnp.float32)                    # block-diag
        w_hh_bd = w_hh_bd.at[:H, :3 * H].set(w_hh["fwd"].T)
        w_hh_bd = w_hh_bd.at[H:, 3 * H:].set(w_hh["bwd"].T)
        b_hh_cat = jnp.concatenate([b_hh["fwd"], b_hh["bwd"]])[None, :]     # (1, 6H)
        params["gru_layers"].append(dict(
            w_ih_cat=w_ih_cat, b_ih_cat=b_ih_cat,
            w_hh_bd=w_hh_bd, b_hh_cat=b_hh_cat))

    params["linear_w_t"] = rnd((H, 2 * H)).T        # nn.Linear(2H, H) weight^T
    params["linear_b"] = rnd((H,))[None, :]         # (1, H)
    return params


if __name__ == "__main__":
    T, B, H = 8, 4, 32
    VOCAB, N_LAYER = 16, 2

    key = jax.random.PRNGKey(0)
    kp, kid = jax.random.split(key)
    params = init_params(kp, VOCAB, H, N_LAYER)

    input_ids = jax.random.randint(kid, (T, B), 0, VOCAB, dtype=jnp.int32)
    # max length == T so the padded length matches pad_packed_sequence output.
    input_len = jnp.array([T, 5, 3, 6], dtype=jnp.int32)

    rnn_output, hidden = encoder_forward(params, input_ids, input_len)
    jax.block_until_ready((rnn_output, hidden))

    assert rnn_output.shape == (T, B, 2 * H)
    assert hidden.shape == (B, H)
    print("KERNEL_OK")
</pallas_src>

<mosaic_0001>
module attributes {stable_mosaic.version = 11 : i64} {
  func.func @kernel(%arg0: i32, %arg1: memref<4x1xi32, #tpu.memory_space<vmem>>, %arg2: memref<32x32xf32, #tpu.memory_space<vmem>>, %arg3: memref<32x192xf32, #tpu.memory_space<vmem>>, %arg4: memref<1x192xf32, #tpu.memory_space<vmem>>, %arg5: memref<64x192xf32, #tpu.memory_space<vmem>>, %arg6: memref<1x192xf32, #tpu.memory_space<vmem>>, %arg7: memref<64x32xf32, #tpu.memory_space<vmem>>, %arg8: memref<1x32xf32, #tpu.memory_space<vmem>>, %arg9: memref<32x64xf32, #tpu.memory_space<vmem>>, %arg10: memref<4x32xf32, #tpu.memory_space<vmem>>) attributes {dimension_semantics = [#tpu.dimension_semantics<arbitrary>], iteration_bounds = array<i64: 1>, scalar_prefetch = 0 : i64, scratch_operands = 0 : i64, tpu.core_type = #tpu.core_type<tc>, window_params = [{pipeline_mode = #tpu.pipeline_mode<synchronous>, transform_indices = @transform_0, window_bounds = array<i64: 4, 1>}, {pipeline_mode = #tpu.pipeline_mode<synchronous>, transform_indices = @transform_1, window_bounds = array<i64: 32, 32>}, {pipeline_mode = #tpu.pipeline_mode<synchronous>, transform_indices = @transform_2, window_bounds = array<i64: 32, 192>}, {pipeline_mode = #tpu.pipeline_mode<synchronous>, transform_indices = @transform_3, window_bounds = array<i64: 1, 192>}, {pipeline_mode = #tpu.pipeline_mode<synchronous>, transform_indices = @transform_4, window_bounds = array<i64: 64, 192>}, {pipeline_mode = #tpu.pipeline_mode<synchronous>, transform_indices = @transform_5, window_bounds = array<i64: 1, 192>}, {pipeline_mode = #tpu.pipeline_mode<synchronous>, transform_indices = @transform_6, window_bounds = array<i64: 64, 32>}, {pipeline_mode = #tpu.pipeline_mode<synchronous>, transform_indices = @transform_7, window_bounds = array<i64: 1, 32>}, {pipeline_mode = #tpu.pipeline_mode<synchronous>, transform_indices = @transform_8, window_bounds = array<i64: 32, 64>}, {pipeline_mode = #tpu.pipeline_mode<synchronous>, transform_indices = @transform_9, window_bounds = array<i64: 4, 32>}]} {
    %c0 = arith.constant 0 : index
    %c0_0 = arith.constant 0 : index
    %0 = vector.load %arg1[%c0, %c0_0] : memref<4x1xi32, #tpu.memory_space<vmem>>, vector<4x1xi32>
    %c0_1 = arith.constant 0 : index
    %c0_2 = arith.constant 0 : index
    %1 = vector.load %arg2[%c0_1, %c0_2] : memref<32x32xf32, #tpu.memory_space<vmem>>, vector<32x32xf32>
    %c0_3 = arith.constant 0 : index
    %c0_4 = arith.constant 0 : index
    %2 = vector.load %arg3[%c0_3, %c0_4] : memref<32x192xf32, #tpu.memory_space<vmem>>, vector<32x192xf32>
    %cst = arith.constant dense<0.000000e+00> : vector<32x192xf32>
    %3 = tpu.matmul %1, %2, %cst {dimension_numbers = #tpu.dot_dimension_numbers<[1], [0], [0], [1], [0, 0, 1, 1], [], []>} : vector<32x32xf32>, vector<32x192xf32>, vector<32x192xf32> -> vector<32x192xf32>
    %c0_5 = arith.constant 0 : index
    %c0_6 = arith.constant 0 : index
    %4 = vector.load %arg4[%c0_5, %c0_6] : memref<1x192xf32, #tpu.memory_space<vmem>>, vector<1x192xf32>
    %5 = vector.broadcast %4 : vector<1x192xf32> to vector<32x192xf32>
    %6 = arith.addf %3, %5 : vector<32x192xf32>
    %cst_7 = arith.constant 0.000000e+00 : f32
    %7 = vector.broadcast %cst_7 : f32 to vector<4x32xf32>
    %cst_8 = arith.constant 0.000000e+00 : f32
    %8 = vector.broadcast %cst_8 : f32 to vector<4x32xf32>
    %9 = tpu.concatenate %7, %8 in 1 : vector<4x32xf32>, vector<4x32xf32> -> vector<4x64xf32>
    %c0_9 = arith.constant 0 : index
    %c0_10 = arith.constant 0 : index
    %10 = vector.load %arg5[%c0_9, %c0_10] : memref<64x192xf32, #tpu.memory_space<vmem>>, vector<64x192xf32>
    %cst_11 = arith.constant dense<0.000000e+00> : vector<4x192xf32>
    %11 = tpu.matmul %9, %10, %cst_11 {dimension_numbers = #tpu.dot_dimension_numbers<[1], [0], [0], [1], [0, 0, 1, 1], [], []>} : vector<4x64xf32>, vector<64x192xf32>, vector<4x192xf32> -> vector<4x192xf32>
    %c0_12 = arith.constant 0 : index
    %c0_13 = arith.constant 0 : index
    %12 = vector.load %arg6[%c0_12, %c0_13] : memref<1x192xf32, #tpu.memory_space<vmem>>, vector<1x192xf32>
    %13 = vector.broadcast %12 : vector<1x192xf32> to vector<4x192xf32>
    %14 = arith.addf %11, %13 : vector<4x192xf32>
    %15 = vector.extract_strided_slice %6 {offsets = [0, 0], sizes = [4, 96], strides = [1, 1]} : vector<32x192xf32> to vector<4x96xf32>
    %16 = vector.extract_strided_slice %6 {offsets = [28, 96], sizes = [4, 96], strides = [1, 1]} : vector<32x192xf32> to vector<4x96xf32>
    %17 = vector.extract_strided_slice %14 {offsets = [0, 0], sizes = [4, 96], strides = [1, 1]} : vector<4x192xf32> to vector<4x96xf32>
    %18 = vector.extract_strided_slice %15 {offsets = [0, 0], sizes = [4, 32], strides = [1, 1]} : vector<4x96xf32> to vector<4x32xf32>
    %19 = vector.extract_strided_slice %17 {offsets = [0, 0], sizes = [4, 32], strides = [1, 1]} : vector<4x96xf32> to vector<4x32xf32>
    %20 = arith.addf %18, %19 : vector<4x32xf32>
    %cst_14 = arith.constant 0.000000e+00 : f32
    %21 = vector.broadcast %cst_14 : f32 to vector<4x32xf32>
    %22 = arith.subf %21, %20 : vector<4x32xf32>
    %23 = math.exp %22 : vector<4x32xf32>
    %cst_15 = arith.constant 1.000000e+00 : f32
    %24 = vector.broadcast %cst_15 : f32 to vector<4x32xf32>
    %25 = arith.addf %24, %23 : vector<4x32xf32>
    %cst_16 = arith.constant 1.000000e+00 : f32
    %26 = vector.broadcast %cst_16 : f32 to vector<4x32xf32>
    %27 = arith.divf %26, %25 : vector<4x32xf32>
    %28 = vector.extract_strided_slice %15 {offsets = [0, 32], sizes = [4, 32], strides = [1, 1]} : vector<4x96xf32> to vector<4x32xf32>
    %29 = vector.extract_strided_slice %17 {offsets = [0, 32], sizes = [4, 32], strides = [1, 1]} : vector<4x96xf32> to vector<4x32xf32>
    %30 = arith.addf %28, %29 : vector<4x32xf32>
    %cst_17 = arith.constant 0.000000e+00 : f32
    %31 = vector.broadcast %cst_17 : f32 to vector<4x32xf32>
    %32 = arith.subf %31, %30 : vector<4x32xf32>
    %33 = math.exp %32 : vector<4x32xf32>
    %cst_18 = arith.constant 1.000000e+00 : f32
    %34 = vector.broadcast %cst_18 : f32 to vector<4x32xf32>
    %35 = arith.addf %34, %33 : vector<4x32xf32>
    %cst_19 = arith.constant 1.000000e+00 : f32
    %36 = vector.broadcast %cst_19 : f32 to vector<4x32xf32>
    %37 = arith.divf %36, %35 : vector<4x32xf32>
    %38 = vector.extract_strided_slice %15 {offsets = [0, 64], sizes = [4, 32], strides = [1, 1]} : vector<4x96xf32> to vector<4x32xf32>
    %39 = vector.extract_strided_slice %17 {offsets = [0, 64], sizes = [4, 32], strides = [1, 1]} : vector<4x96xf32> to vector<4x32xf32>
    %40 = arith.mulf %27, %39 : vector<4x32xf32>
    %41 = arith.addf %38, %40 : vector<4x32xf32>
    %42 = math.tanh %41 : vector<4x32xf32>
    %cst_20 = arith.constant 1.000000e+00 : f32
    %43 = vector.broadcast %cst_20 : f32 to vector<4x32xf32>
    %44 = arith.subf %43, %37 : vector<4x32xf32>
    %45 = arith.mulf %44, %42 : vector<4x32xf32>
    %46 = arith.mulf %37, %7 : vector<4x32xf32>
    %47 = arith.addf %45, %46 : vector<4x32xf32>
    %48 = vector.extract_strided_slice %14 {offsets = [0, 96], sizes = [4, 96], strides = [1, 1]} : vector<4x192xf32> to vector<4x96xf32>
    %49 = vector.extract_strided_slice %16 {offsets = [0, 0], sizes = [4, 32], strides = [1, 1]} : vector<4x96xf32> to vector<4x32xf32>
    %50 = vector.extract_strided_slice %48 {offsets = [0, 0], sizes = [4, 32], strides = [1, 1]} : vector<4x96xf32> to vector<4x32xf32>
    %51 = arith.addf %49, %50 : vector<4x32xf32>
    %cst_21 = arith.constant 0.000000e+00 : f32
    %52 = vector.broadcast %cst_21 : f32 to vector<4x32xf32>
    %53 = arith.subf %52, %51 : vector<4x32xf32>
    %54 = math.exp %53 : vector<4x32xf32>
    %cst_22 = arith.constant 1.000000e+00 : f32
    %55 = vector.broadcast %cst_22 : f32 to vector<4x32xf32>
    %56 = arith.addf %55, %54 : vector<4x32xf32>
    %cst_23 = arith.constant 1.000000e+00 : f32
    %57 = vector.broadcast %cst_23 : f32 to vector<4x32xf32>
    %58 = arith.divf %57, %56 : vector<4x32xf32>
    %59 = vector.extract_strided_slice %16 {offsets = [0, 32], sizes = [4, 32], strides = [1, 1]} : vector<4x96xf32> to vector<4x32xf32>
    %60 = vector.extract_strided_slice %48 {offsets = [0, 32], sizes = [4, 32], strides = [1, 1]} : vector<4x96xf32> to vector<4x32xf32>
    %61 = arith.addf %59, %60 : vector<4x32xf32>
    %cst_24 = arith.constant 0.000000e+00 : f32
    %62 = vector.broadcast %cst_24 : f32 to vector<4x32xf32>
    %63 = arith.subf %62, %61 : vector<4x32xf32>
    %64 = math.exp %63 : vector<4x32xf32>
    %cst_25 = arith.constant 1.000000e+00 : f32
    %65 = vector.broadcast %cst_25 : f32 to vector<4x32xf32>
    %66 = arith.addf %65, %64 : vector<4x32xf32>
    %cst_26 = arith.constant 1.000000e+00 : f32
    %67 = vector.broadcast %cst_26 : f32 to vector<4x32xf32>
    %68 = arith.divf %67, %66 : vector<4x32xf32>
    %69 = vector.extract_strided_slice %16 {offsets = [0, 64], sizes = [4, 32], strides = [1, 1]} : vector<4x96xf32> to vector<4x32xf32>
    %70 = vector.extract_strided_slice %48 {offsets = [0, 64], sizes = [4, 32], strides = [1, 1]} : vector<4x96xf32> to vector<4x32xf32>
    %71 = arith.mulf %58, %70 : vector<4x32xf32>
    %72 = arith.addf %69, %71 : vector<4x32xf32>
    %73 = math.tanh %72 : vector<4x32xf32>
    %cst_27 = arith.constant 1.000000e+00 : f32
    %74 = vector.broadcast %cst_27 : f32 to vector<4x32xf32>
    %75 = arith.subf %74, %68 : vector<4x32xf32>
    %76 = arith.mulf %75, %73 : vector<4x32xf32>
    %77 = arith.mulf %68, %8 : vector<4x32xf32>
    %78 = arith.addf %76, %77 : vector<4x32xf32>
    %c0_i32 = arith.constant 0 : i32
    %79 = vector.broadcast %c0_i32 : i32 to vector<4x1xi32>
    %80 = arith.cmpi sgt, %0, %79 : vector<4x1xi32>
    %c7_i32 = arith.constant 7 : i32
    %81 = vector.broadcast %c7_i32 : i32 to vector<4x1xi32>
    %82 = arith.cmpi sgt, %0, %81 : vector<4x1xi32>
    %83 = vector.shape_cast %80 : vector<4x1xi1> to vector<4x1xi1>
    %84 = vector.broadcast %83 : vector<4x1xi1> to vector<4x32xi1>
    %85 = arith.select %84, %47, %7 : vector<4x32xi1>, vector<4x32xf32>
    %86 = vector.shape_cast %82 : vector<4x1xi1> to vector<4x1xi1>
    %87 = vector.broadcast %86 : vector<4x1xi1> to vector<4x32xi1>
    %88 = arith.select %87, %78, %8 : vector<4x32xi1>, vector<4x32xf32>
    %cst_28 = arith.constant 0.000000e+00 : f32
    %89 = vector.broadcast %cst_28 : f32 to vector<4x32xf32>
    %90 = vector.shape_cast %80 : vector<4x1xi1> to vector<4x1xi1>
    %91 = vector.broadcast %90 : vector<4x1xi1> to vector<4x32xi1>
    %92 = arith.select %91, %47, %89 : vector<4x32xi1>, vector<4x32xf32>
    %c0_29 = arith.constant 0 : index
    %c0_30 = arith.constant 0 : index
    %93 = vector.load %arg9[%c0_29, %c0_30] : memref<32x64xf32, #tpu.memory_space<vmem>>, vector<4x32xf32>
    tpu.vector_store %arg9[%c0_29, %c0_30], %92 {strides = array<i32>} : memref<32x64xf32, #tpu.memory_space<vmem>>, vector<4x32xf32>,
    %cst_31 = arith.constant 0.000000e+00 : f32
    %94 = vector.broadcast %cst_31 : f32 to vector<4x32xf32>
    %95 = vector.shape_cast %82 : vector<4x1xi1> to vector<4x1xi1>
    %96 = vector.broadcast %95 : vector<4x1xi1> to vector<4x32xi1>
    %97 = arith.select %96, %78, %94 : vector<4x32xi1>, vector<4x32xf32>
    %c28 = arith.constant 28 : index
    %c32 = arith.constant 32 : index
    %98 = vector.load %arg9[%c28, %c32] : memref<32x64xf32, #tpu.memory_space<vmem>>, vector<4x32xf32>
    tpu.vector_store %arg9[%c28, %c32], %97 {strides = array<i32>} : memref<32x64xf32, #tpu.memory_space<vmem>>, vector<4x32xf32>,
    %99 = tpu.concatenate %85, %88 in 1 : vector<4x32xf32>, vector<4x32xf32> -> vector<4x64xf32>
    %c0_32 = arith.constant 0 : index
    %c0_33 = arith.constant 0 : index
    %100 = vector.load %arg5[%c0_32, %c0_33] : memref<64x192xf32, #tpu.memory_space<vmem>>, vector<64x192xf32>
    %cst_34 = arith.constant dense<0.000000e+00> : vector<4x192xf32>
    %101 = tpu.matmul %99, %100, %cst_34 {dimension_numbers = #tpu.dot_dimension_numbers<[1], [0], [0], [1], [0, 0, 1, 1], [], []>} : vector<4x64xf32>, vector<64x192xf32>, vector<4x192xf32> -> vector<4x192xf32>
    %c0_35 = arith.constant 0 : index
    %c0_36 = arith.constant 0 : index
    %102 = vector.load %arg6[%c0_35, %c0_36] : memref<1x192xf32, #tpu.memory_space<vmem>>, vector<1x192xf32>
    %103 = vector.broadcast %102 : vector<1x192xf32> to vector<4x192xf32>
    %104 = arith.addf %101, %103 : vector<4x192xf32>
    %105 = vector.extract_strided_slice %6 {offsets = [4, 0], sizes = [4, 96], strides = [1, 1]} : vector<32x192xf32> to vector<4x96xf32>
    %106 = vector.extract_strided_slice %6 {offsets = [24, 96], sizes = [4, 96], strides = [1, 1]} : vector<32x192xf32> to vector<4x96xf32>
    %107 = vector.extract_strided_slice %104 {offsets = [0, 0], sizes = [4, 96], strides = [1, 1]} : vector<4x192xf32> to vector<4x96xf32>
    %108 = vector.extract_strided_slice %105 {offsets = [0, 0], sizes = [4, 32], strides = [1, 1]} : vector<4x96xf32> to vector<4x32xf32>
    %109 = vector.extract_strided_slice %107 {offsets = [0, 0], sizes = [4, 32], strides = [1, 1]} : vector<4x96xf32> to vector<4x32xf32>
    %110 = arith.addf %108, %109 : vector<4x32xf32>
    %cst_37 = arith.constant 0.000000e+00 : f32
    %111 = vector.broadcast %cst_37 : f32 to vector<4x32xf32>
    %112 = arith.subf %111, %110 : vector<4x32xf32>
    %113 = math.exp %112 : vector<4x32xf32>
    %cst_38 = arith.constant 1.000000e+00 : f32
    %114 = vector.broadcast %cst_38 : f32 to vector<4x32xf32>
    %115 = arith.addf %114, %113 : vector<4x32xf32>
    %cst_39 = arith.constant 1.000000e+00 : f32
    %116 = vector.broadcast %cst_39 : f32 to vector<4x32xf32>
    %117 = arith.divf %116, %115 : vector<4x32xf32>
    %118 = vector.extract_strided_slice %105 {offsets = [0, 32], sizes = [4, 32], strides = [1, 1]} : vector<4x96xf32> to vector<4x32xf32>
    %119 = vector.extract_strided_slice %107 {offsets = [0, 32], sizes = [4, 32], strides = [1, 1]} : vector<4x96xf32> to vector<4x32xf32>
    %120 = arith.addf %118, %119 : vector<4x32xf32>
    %cst_40 = arith.constant 0.000000e+00 : f32
    %121 = vector.broadcast %cst_40 : f32 to vector<4x32xf32>
    %122 = arith.subf %121, %120 : vector<4x32xf32>
    %123 = math.exp %122 : vector<4x32xf32>
    %cst_41 = arith.constant 1.000000e+00 : f32
    %124 = vector.broadcast %cst_41 : f32 to vector<4x32xf32>
    %125 = arith.addf %124, %123 : vector<4x32xf32>
    %cst_42 = arith.constant 1.000000e+00 : f32
    %126 = vector.broadcast %cst_42 : f32 to vector<4x32xf32>
    %127 = arith.divf %126, %125 : vector<4x32xf32>
    %128 = vector.extract_strided_slice %105 {offsets = [0, 64], sizes = [4, 32], strides = [1, 1]} : vector<4x96xf32> to vector<4x32xf32>
    %129 = vector.extract_strided_slice %107 {offsets = [0, 64], sizes = [4, 32], strides = [1, 1]} : vector<4x96xf32> to vector<4x32xf32>
    %130 = arith.mulf %117, %129 : vector<4x32xf32>
    %131 = arith.addf %128, %130 : vector<4x32xf32>
    %132 = math.tanh %131 : vector<4x32xf32>
    %cst_43 = arith.constant 1.000000e+00 : f32
    %133 = vector.broadcast %cst_43 : f32 to vector<4x32xf32>
    %134 = arith.subf %133, %127 : vector<4x32xf32>
    %135 = arith.mulf %134, %132 : vector<4x32xf32>
    %136 = arith.mulf %127, %85 : vector<4x32xf32>
    %137 = arith.addf %135, %136 : vector<4x32xf32>
    %138 = vector.extract_strided_slice %104 {offsets = [0, 96], sizes = [4, 96], strides = [1, 1]} : vector<4x192xf32> to vector<4x96xf32>
    %139 = vector.extract_strided_slice %106 {offsets = [0, 0], sizes = [4, 32], strides = [1, 1]} : vector<4x96xf32> to vector<4x32xf32>
    %140 = vector.extract_strided_slice %138 {offsets = [0, 0], sizes = [4, 32], strides = [1, 1]} : vector<4x96xf32> to vector<4x32xf32>
    %141 = arith.addf %139, %140 : vector<4x32xf32>
    %cst_44 = arith.constant 0.000000e+00 : f32
    %142 = vector.broadcast %cst_44 : f32 to vector<4x32xf32>
    %143 = arith.subf %142, %141 : vector<4x32xf32>
    %144 = math.exp %143 : vector<4x32xf32>
    %cst_45 = arith.constant 1.000000e+00 : f32
    %145 = vector.broadcast %cst_45 : f32 to vector<4x32xf32>
    %146 = arith.addf %145, %144 : vector<4x32xf32>
    %cst_46 = arith.constant 1.000000e+00 : f32
    %147 = vector.broadcast %cst_46 : f32 to vector<4x32xf32>
    %148 = arith.divf %147, %146 : vector<4x32xf32>
    %149 = vector.extract_strided_slice %106 {offsets = [0, 32], sizes = [4, 32], strides = [1, 1]} : vector<4x96xf32> to vector<4x32xf32>
    %150 = vector.extract_strided_slice %138 {offsets = [0, 32], sizes = [4, 32], strides = [1, 1]} : vector<4x96xf32> to vector<4x32xf32>
    %151 = arith.addf %149, %150 : vector<4x32xf32>
    %cst_47 = arith.constant 0.000000e+00 : f32
    %152 = vector.broadcast %cst_47 : f32 to vector<4x32xf32>
    %153 = arith.subf %152, %151 : vector<4x32xf32>
    %154 = math.exp %153 : vector<4x32xf32>
    %cst_48 = arith.constant 1.000000e+00 : f32
    %155 = vector.broadcast %cst_48 : f32 to vector<4x32xf32>
    %156 = arith.addf %155, %154 : vector<4x32xf32>
    %cst_49 = arith.constant 1.000000e+00 : f32
    %157 = vector.broadcast %cst_49 : f32 to vector<4x32xf32>
    %158 = arith.divf %157, %156 : vector<4x32xf32>
    %159 = vector.extract_strided_slice %106 {offsets = [0, 64], sizes = [4, 32], strides = [1, 1]} : vector<4x96xf32> to vector<4x32xf32>
    %160 = vector.extract_strided_slice %138 {offsets = [0, 64], sizes = [4, 32], strides = [1, 1]} : vector<4x96xf32> to vector<4x32xf32>
    %161 = arith.mulf %148, %160 : vector<4x32xf32>
    %162 = arith.addf %159, %161 : vector<4x32xf32>
    %163 = math.tanh %162 : vector<4x32xf32>
    %cst_50 = arith.constant 1.000000e+00 : f32
    %164 = vector.broadcast %cst_50 : f32 to vector<4x32xf32>
    %165 = arith.subf %164, %158 : vector<4x32xf32>
    %166 = arith.mulf %165, %163 : vector<4x32xf32>
    %167 = arith.mulf %158, %88 : vector<4x32xf32>
    %168 = arith.addf %166, %167 : vector<4x32xf32>
    %c1_i32 = arith.constant 1 : i32
    %169 = vector.broadcast %c1_i32 : i32 to vector<4x1xi32>
    %170 = arith.cmpi sgt, %0, %169 : vector<4x1xi32>
    %c6_i32 = arith.constant 6 : i32
    %171 = vector.broadcast %c6_i32 : i32 to vector<4x1xi32>
    %172 = arith.cmpi sgt, %0, %171 : vector<4x1xi32>
    %173 = vector.shape_cast %170 : vector<4x1xi1> to vector<4x1xi1>
    %174 = vector.broadcast %173 : vector<4x1xi1> to vector<4x32xi1>
    %175 = arith.select %174, %137, %85 : vector<4x32xi1>, vector<4x32xf32>
    %176 = vector.shape_cast %172 : vector<4x1xi1> to vector<4x1xi1>
    %177 = vector.broadcast %176 : vector<4x1xi1> to vector<4x32xi1>
    %178 = arith.select %177, %168, %88 : vector<4x32xi1>, vector<4x32xf32>
    %cst_51 = arith.constant 0.000000e+00 : f32
    %179 = vector.broadcast %cst_51 : f32 to vector<4x32xf32>
    %180 = vector.shape_cast %170 : vector<4x1xi1> to vector<4x1xi1>
    %181 = vector.broadcast %180 : vector<4x1xi1> to vector<4x32xi1>
    %182 = arith.select %181, %137, %179 : vector<4x32xi1>, vector<4x32xf32>
    %c4 = arith.constant 4 : index
    %c0_52 = arith.constant 0 : index
    %183 = vector.load %arg9[%c4, %c0_52] : memref<32x64xf32, #tpu.memory_space<vmem>>, vector<4x32xf32>
    tpu.vector_store %arg9[%c4, %c0_52], %182 {strides = array<i32>} : memref<32x64xf32, #tpu.memory_space<vmem>>, vector<4x32xf32>,
    %cst_53 = arith.constant 0.000000e+00 : f32
    %184 = vector.broadcast %cst_53 : f32 to vector<4x32xf32>
    %185 = vector.shape_cast %172 : vector<4x1xi1> to vector<4x1xi1>
    %186 = vector.broadcast %185 : vector<4x1xi1> to vector<4x32xi1>
    %187 = arith.select %186, %168, %184 : vector<4x32xi1>, vector<4x32xf32>
    %c24 = arith.constant 24 : index
    %c32_54 = arith.constant 32 : index
    %188 = vector.load %arg9[%c24, %c32_54] : memref<32x64xf32, #tpu.memory_space<vmem>>, vector<4x32xf32>
    tpu.vector_store %arg9[%c24, %c32_54], %187 {strides = array<i32>} : memref<32x64xf32, #tpu.memory_space<vmem>>, vector<4x32xf32>,
    %189 = tpu.concatenate %175, %178 in 1 : vector<4x32xf32>, vector<4x32xf32> -> vector<4x64xf32>
    %c0_55 = arith.constant 0 : index
    %c0_56 = arith.constant 0 : index
    %190 = vector.load %arg5[%c0_55, %c0_56] : memref<64x192xf32, #tpu.memory_space<vmem>>, vector<64x192xf32>
    %cst_57 = arith.constant dense<0.000000e+00> : vector<4x192xf32>
    %191 = tpu.matmul %189, %190, %cst_57 {dimension_numbers = #tpu.dot_dimension_numbers<[1], [0], [0], [1], [0, 0, 1, 1], [], []>} : vector<4x64xf32>, vector<64x192xf32>, vector<4x192xf32> -> vector<4x192xf32>
    %c0_58 = arith.constant 0 : index
    %c0_59 = arith.constant 0 : index
    %192 = vector.load %arg6[%c0_58, %c0_59] : memref<1x192xf32, #tpu.memory_space<vmem>>, vector<1x192xf32>
    %193 = vector.broadcast %192 : vector<1x192xf32> to vector<4x192xf32>
    %194 = arith.addf %191, %193 : vector<4x192xf32>
    %195 = vector.extract_strided_slice %6 {offsets = [8, 0], sizes = [4, 96], strides = [1, 1]} : vector<32x192xf32> to vector<4x96xf32>
    %196 = vector.extract_strided_slice %6 {offsets = [20, 96], sizes = [4, 96], strides = [1, 1]} : vector<32x192xf32> to vector<4x96xf32>
    %197 = vector.extract_strided_slice %194 {offsets = [0, 0], sizes = [4, 96], strides = [1, 1]} : vector<4x192xf32> to vector<4x96xf32>
    %198 = vector.extract_strided_slice %195 {offsets = [0, 0], sizes = [4, 32], strides = [1, 1]} : vector<4x96xf32> to vector<4x32xf32>
    %199 = vector.extract_strided_slice %197 {offsets = [0, 0], sizes = [4, 32], strides = [1, 1]} : vector<4x96xf32> to vector<4x32xf32>
    %200 = arith.addf %198, %199 : vector<4x32xf32>
    %cst_60 = arith.constant 0.000000e+00 : f32
    %201 = vector.broadcast %cst_60 : f32 to vector<4x32xf32>
    %202 = arith.subf %201, %200 : vector<4x32xf32>
    %203 = math.exp %202 : vector<4x32xf32>
    %cst_61 = arith.constant 1.000000e+00 : f32
    %204 = vector.broadcast %cst_61 : f32 to vector<4x32xf32>
    %205 = arith.addf %204, %203 : vector<4x32xf32>
    %cst_62 = arith.constant 1.000000e+00 : f32
    %206 = vector.broadcast %cst_62 : f32 to vector<4x32xf32>
    %207 = arith.divf %206, %205 : vector<4x32xf32>
    %208 = vector.extract_strided_slice %195 {offsets = [0, 32], sizes = [4, 32], strides = [1, 1]} : vector<4x96xf32> to vector<4x32xf32>
    %209 = vector.extract_strided_slice %197 {offsets = [0, 32], sizes = [4, 32], strides = [1, 1]} : vector<4x96xf32> to vector<4x32xf32>
    %210 = arith.addf %208, %209 : vector<4x32xf32>
    %cst_63 = arith.constant 0.000000e+00 : f32
    %211 = vector.broadcast %cst_63 : f32 to vector<4x32xf32>
    %212 = arith.subf %211, %210 : vector<4x32xf32>
    %213 = math.exp %212 : vector<4x32xf32>
    %cst_64 = arith.constant 1.000000e+00 : f32
    %214 = vector.broadcast %cst_64 : f32 to vector<4x32xf32>
    %215 = arith.addf %214, %213 : vector<4x32xf32>
    %cst_65 = arith.constant 1.000000e+00 : f32
    %216 = vector.broadcast %cst_65 : f32 to vector<4x32xf32>
    %217 = arith.divf %216, %215 : vector<4x32xf32>
    %218 = vector.extract_strided_slice %195 {offsets = [0, 64], sizes = [4, 32], strides = [1, 1]} : vector<4x96xf32> to vector<4x32xf32>
    %219 = vector.extract_strided_slice %197 {offsets = [0, 64], sizes = [4, 32], strides = [1, 1]} : vector<4x96xf32> to vector<4x32xf32>
    %220 = arith.mulf %207, %219 : vector<4x32xf32>
    %221 = arith.addf %218, %220 : vector<4x32xf32>
    %222 = math.tanh %221 : vector<4x32xf32>
    %cst_66 = arith.constant 1.000000e+00 : f32
    %223 = vector.broadcast %cst_66 : f32 to vector<4x32xf32>
    %224 = arith.subf %223, %217 : vector<4x32xf32>
    %225 = arith.mulf %224, %222 : vector<4x32xf32>
    %226 = arith.mulf %217, %175 : vector<4x32xf32>
    %227 = arith.addf %225, %226 : vector<4x32xf32>
    %228 = vector.extract_strided_slice %194 {offsets = [0, 96], sizes = [4, 96], strides = [1, 1]} : vector<4x192xf32> to vector<4x96xf32>
    %229 = vector.extract_strided_slice %196 {offsets = [0, 0], sizes = [4, 32], strides = [1, 1]} : vector<4x96xf32> to vector<4x32xf32>
    %230 = vector.extract_strided_slice %228 {offsets = [0, 0], sizes = [4, 32], strides = [1, 1]} : vector<4x96xf32> to vector<4x32xf32>
    %231 = arith.addf %229, %230 : vector<4x32xf32>
    %cst_67 = arith.constant 0.000000e+00 : f32
    %232 = vector.broadcast %cst_67 : f32 to vector<4x32xf32>
    %233 = arith.subf %232, %231 : vector<4x32xf32>
    %234 = math.exp %233 : vector<4x32xf32>
    %cst_68 = arith.constant 1.000000e+00 : f32
    %235 = vector.broadcast %cst_68 : f32 to vector<4x32xf32>
    %236 = arith.addf %235, %234 : vector<4x32xf32>
    %cst_69 = arith.constant 1.000000e+00 : f32
    %237 = vector.broadcast %cst_69 : f32 to vector<4x32xf32>
    %238 = arith.divf %237, %236 : vector<4x32xf32>
    %239 = vector.extract_strided_slice %196 {offsets = [0, 32], sizes = [4, 32], strides = [1, 1]} : vector<4x96xf32> to vector<4x32xf32>
    %240 = vector.extract_strided_slice %228 {offsets = [0, 32], sizes = [4, 32], strides = [1, 1]} : vector<4x96xf32> to vector<4x32xf32>
    %241 = arith.addf %239, %240 : vector<4x32xf32>
    %cst_70 = arith.constant 0.000000e+00 : f32
    %242 = vector.broadcast %cst_70 : f32 to vector<4x32xf32>
    %243 = arith.subf %242, %241 : vector<4x32xf32>
    %244 = math.exp %243 : vector<4x32xf32>
    %cst_71 = arith.constant 1.000000e+00 : f32
    %245 = vector.broadcast %cst_71 : f32 to vector<4x32xf32>
    %246 = arith.addf %245, %244 : vector<4x32xf32>
    %cst_72 = arith.constant 1.000000e+00 : f32
    %247 = vector.broadcast %cst_72 : f32 to vector<4x32xf32>
    %248 = arith.divf %247, %246 : vector<4x32xf32>
    %249 = vector.extract_strided_slice %196 {offsets = [0, 64], sizes = [4, 32], strides = [1, 1]} : vector<4x96xf32> to vector<4x32xf32>
    %250 = vector.extract_strided_slice %228 {offsets = [0, 64], sizes = [4, 32], strides = [1, 1]} : vector<4x96xf32> to vector<4x32xf32>
    %251 = arith.mulf %238, %250 : vector<4x32xf32>
    %252 = arith.addf %249, %251 : vector<4x32xf32>
    %253 = math.tanh %252 : vector<4x32xf32>
    %cst_73 = arith.constant 1.000000e+00 : f32
    %254 = vector.broadcast %cst_73 : f32 to vector<4x32xf32>
    %255 = arith.subf %254, %248 : vector<4x32xf32>
    %256 = arith.mulf %255, %253 : vector<4x32xf32>
    %257 = arith.mulf %248, %178 : vector<4x32xf32>
    %258 = arith.addf %256, %257 : vector<4x32xf32>
    %c2_i32 = arith.constant 2 : i32
    %259 = vector.broadcast %c2_i32 : i32 to vector<4x1xi32>
    %260 = arith.cmpi sgt, %0, %259 : vector<4x1xi32>
    %c5_i32 = arith.constant 5 : i32
    %261 = vector.broadcast %c5_i32 : i32 to vector<4x1xi32>
    %262 = arith.cmpi sgt, %0, %261 : vector<4x1xi32>
    %263 = vector.shape_cast %260 : vector<4x1xi1> to vector<4x1xi1>
    %264 = vector.broadcast %263 : vector<4x1xi1> to vector<4x32xi1>
    %265 = arith.select %264, %227, %175 : vector<4x32xi1>, vector<4x32xf32>
    %266 = vector.shape_cast %262 : vector<4x1xi1> to vector<4x1xi1>
    %267 = vector.broadcast %266 : vector<4x1xi1> to vector<4x32xi1>
    %268 = arith.select %267, %258, %178 : vector<4x32xi1>, vector<4x32xf32>
    %cst_74 = arith.constant 0.000000e+00 : f32
    %269 = vector.broadcast %cst_74 : f32 to vector<4x32xf32>
    %270 = vector.shape_cast %260 : vector<4x1xi1> to vector<4x1xi1>
    %271 = vector.broadcast %270 : vector<4x1xi1> to vector<4x32xi1>
    %272 = arith.select %271, %227, %269 : vector<4x32xi1>, vector<4x32xf32>
    %c8 = arith.constant 8 : index
    %c0_75 = arith.constant 0 : index
    %273 = vector.load %arg9[%c8, %c0_75] : memref<32x64xf32, #tpu.memory_space<vmem>>, vector<4x32xf32>
    tpu.vector_store %arg9[%c8, %c0_75], %272 {strides = array<i32>} : memref<32x64xf32, #tpu.memory_space<vmem>>, vector<4x32xf32>,
    %cst_76 = arith.constant 0.000000e+00 : f32
    %274 = vector.broadcast %cst_76 : f32 to vector<4x32xf32>
    %275 = vector.shape_cast %262 : vector<4x1xi1> to vector<4x1xi1>
    %276 = vector.broadcast %275 : vector<4x1xi1> to vector<4x32xi1>
    %277 = arith.select %276, %258, %274 : vector<4x32xi1>, vector<4x32xf32>
    %c20 = arith.constant 20 : index
    %c32_77 = arith.constant 32 : index
    %278 = vector.load %arg9[%c20, %c32_77] : memref<32x64xf32, #tpu.memory_space<vmem>>, vector<4x32xf32>
    tpu.vector_store %arg9[%c20, %c32_77], %277 {strides = array<i32>} : memref<32x64xf32, #tpu.memory_space<vmem>>, vector<4x32xf32>,
    %279 = tpu.concatenate %265, %268 in 1 : vector<4x32xf32>, vector<4x32xf32> -> vector<4x64xf32>
    %c0_78 = arith.constant 0 : index
    %c0_79 = arith.constant 0 : index
    %280 = vector.load %arg5[%c0_78, %c0_79] : memref<64x192xf32, #tpu.memory_space<vmem>>, vector<64x192xf32>
    %cst_80 = arith.constant dense<0.000000e+00> : vector<4x192xf32>
    %281 = tpu.matmul %279, %280, %cst_80 {dimension_numbers = #tpu.dot_dimension_numbers<[1], [0], [0], [1], [0, 0, 1, 1], [], []>} : vector<4x64xf32>, vector<64x192xf32>, vector<4x192xf32> -> vector<4x192xf32>
    %c0_81 = arith.constant 0 : index
    %c0_82 = arith.constant 0 : index
    %282 = vector.load %arg6[%c0_81, %c0_82] : memref<1x192xf32, #tpu.memory_space<vmem>>, vector<1x192xf32>
    %283 = vector.broadcast %282 : vector<1x192xf32> to vector<4x192xf32>
    %284 = arith.addf %281, %283 : vector<4x192xf32>
    %285 = vector.extract_strided_slice %6 {offsets = [12, 0], sizes = [4, 96], strides = [1, 1]} : vector<32x192xf32> to vector<4x96xf32>
    %286 = vector.extract_strided_slice %6 {offsets = [16, 96], sizes = [4, 96], strides = [1, 1]} : vector<32x192xf32> to vector<4x96xf32>
    %287 = vector.extract_strided_slice %284 {offsets = [0, 0], sizes = [4, 96], strides = [1, 1]} : vector<4x192xf32> to vector<4x96xf32>
    %288 = vector.extract_strided_slice %285 {offsets = [0, 0], sizes = [4, 32], strides = [1, 1]} : vector<4x96xf32> to vector<4x32xf32>
    %289 = vector.extract_strided_slice %287 {offsets = [0, 0], sizes = [4, 32], strides = [1, 1]} : vector<4x96xf32> to vector<4x32xf32>
    %290 = arith.addf %288, %289 : vector<4x32xf32>
    %cst_83 = arith.constant 0.000000e+00 : f32
    %291 = vector.broadcast %cst_83 : f32 to vector<4x32xf32>
    %292 = arith.subf %291, %290 : vector<4x32xf32>
    %293 = math.exp %292 : vector<4x32xf32>
    %cst_84 = arith.constant 1.000000e+00 : f32
    %294 = vector.broadcast %cst_84 : f32 to vector<4x32xf32>
    %295 = arith.addf %294, %293 : vector<4x32xf32>
    %cst_85 = arith.constant 1.000000e+00 : f32
    %296 = vector.broadcast %cst_85 : f32 to vector<4x32xf32>
    %297 = arith.divf %296, %295 : vector<4x32xf32>
    %298 = vector.extract_strided_slice %285 {offsets = [0, 32], sizes = [4, 32], strides = [1, 1]} : vector<4x96xf32> to vector<4x32xf32>
    %299 = vector.extract_strided_slice %287 {offsets = [0, 32], sizes = [4, 32], strides = [1, 1]} : vector<4x96xf32> to vector<4x32xf32>
    %300 = arith.addf %298, %299 : vector<4x32xf32>
    %cst_86 = arith.constant 0.000000e+00 : f32
    %301 = vector.broadcast %cst_86 : f32 to vector<4x32xf32>
    %302 = arith.subf %301, %300 : vector<4x32xf32>
    %303 = math.exp %302 : vector<4x32xf32>
    %cst_87 = arith.constant 1.000000e+00 : f32
    %304 = vector.broadcast %cst_87 : f32 to vector<4x32xf32>
    %305 = arith.addf %304, %303 : vector<4x32xf32>
    %cst_88 = arith.constant 1.000000e+00 : f32
    %306 = vector.broadcast %cst_88 : f32 to vector<4x32xf32>
    %307 = arith.divf %306, %305 : vector<4x32xf32>
    %308 = vector.extract_strided_slice %285 {offsets = [0, 64], sizes = [4, 32], strides = [1, 1]} : vector<4x96xf32> to vector<4x32xf32>
    %309 = vector.extract_strided_slice %287 {offsets = [0, 64], sizes = [4, 32], strides = [1, 1]} : vector<4x96xf32> to vector<4x32xf32>
    %310 = arith.mulf %297, %309 : vector<4x32xf32>
    %311 = arith.addf %308, %310 : vector<4x32xf32>
    %312 = math.tanh %311 : vector<4x32xf32>
    %cst_89 = arith.constant 1.000000e+00 : f32
    %313 = vector.broadcast %cst_89 : f32 to vector<4x32xf32>
    %314 = arith.subf %313, %307 : vector<4x32xf32>
    %315 = arith.mulf %314, %312 : vector<4x32xf32>
    %316 = arith.mulf %307, %265 : vector<4x32xf32>
    %317 = arith.addf %315, %316 : vector<4x32xf32>
    %318 = vector.extract_strided_slice %284 {offsets = [0, 96], sizes = [4, 96], strides = [1, 1]} : vector<4x192xf32> to vector<4x96xf32>
    %319 = vector.extract_strided_slice %286 {offsets = [0, 0], sizes = [4, 32], strides = [1, 1]} : vector<4x96xf32> to vector<4x32xf32>
    %320 = vector.extract_strided_slice %318 {offsets = [0, 0], sizes = [4, 32], strides = [1, 1]} : vector<4x96xf32> to vector<4x32xf32>
    %321 = arith.addf %319, %320 : vector<4x32xf32>
    %cst_90 = arith.constant 0.000000e+00 : f32
    %322 = vector.broadcast %cst_90 : f32 to vector<4x32xf32>
    %323 = arith.subf %322, %321 : vector<4x32xf32>
    %324 = math.exp %323 : vector<4x32xf32>
    %cst_91 = arith.constant 1.000000e+00 : f32
    %325 = vector.broadcast %cst_91 : f32 to vector<4x32xf32>
    %326 = arith.addf %325, %324 : vector<4x32xf32>
    %cst_92 = arith.constant 1.000000e+00 : f32
    %327 = vector.broadcast %cst_92 : f32 to vector<4x32xf32>
    %328 = arith.divf %327, %326 : vector<4x32xf32>
    %329 = vector.extract_strided_slice %286 {offsets = [0, 32], sizes = [4, 32], strides = [1, 1]} : vector<4x96xf32> to vector<4x32xf32>
    %330 = vector.extract_strided_slice %318 {offsets = [0, 32], sizes = [4, 32], strides = [1, 1]} : vector<4x96xf32> to vector<4x32xf32>
    %331 = arith.addf %329, %330 : vector<4x32xf32>
    %cst_93 = arith.constant 0.000000e+00 : f32
    %332 = vector.broadcast %cst_93 : f32 to vector<4x32xf32>
    %333 = arith.subf %332, %331 : vector<4x32xf32>
    %334 = math.exp %333 : vector<4x32xf32>
    %cst_94 = arith.constant 1.000000e+00 : f32
    %335 = vector.broadcast %cst_94 : f32 to vector<4x32xf32>
    %336 = arith.addf %335, %334 : vector<4x32xf32>
    %cst_95 = arith.constant 1.000000e+00 : f32
    %337 = vector.broadcast %cst_95 : f32 to vector<4x32xf32>
    %338 = arith.divf %337, %336 : vector<4x32xf32>
    %339 = vector.extract_strided_slice %286 {offsets = [0, 64], sizes = [4, 32], strides = [1, 1]} : vector<4x96xf32> to vector<4x32xf32>
    %340 = vector.extract_strided_slice %318 {offsets = [0, 64], sizes = [4, 32], strides = [1, 1]} : vector<4x96xf32> to vector<4x32xf32>
    %341 = arith.mulf %328, %340 : vector<4x32xf32>
    %342 = arith.addf %339, %341 : vector<4x32xf32>
    %343 = math.tanh %342 : vector<4x32xf32>
    %cst_96 = arith.constant 1.000000e+00 : f32
    %344 = vector.broadcast %cst_96 : f32 to vector<4x32xf32>
    %345 = arith.subf %344, %338 : vector<4x32xf32>
    %346 = arith.mulf %345, %343 : vector<4x32xf32>
    %347 = arith.mulf %338, %268 : vector<4x32xf32>
    %348 = arith.addf %346, %347 : vector<4x32xf32>
    %c3_i32 = arith.constant 3 : i32
    %349 = vector.broadcast %c3_i32 : i32 to vector<4x1xi32>
    %350 = arith.cmpi sgt, %0, %349 : vector<4x1xi32>
    %c4_i32 = arith.constant 4 : i32
    %351 = vector.broadcast %c4_i32 : i32 to vector<4x1xi32>
    %352 = arith.cmpi sgt, %0, %351 : vector<4x1xi32>
    %353 = vector.shape_cast %350 : vector<4x1xi1> to vector<4x1xi1>
    %354 = vector.broadcast %353 : vector<4x1xi1> to vector<4x32xi1>
    %355 = arith.select %354, %317, %265 : vector<4x32xi1>, vector<4x32xf32>
    %356 = vector.shape_cast %352 : vector<4x1xi1> to vector<4x1xi1>
    %357 = vector.broadcast %356 : vector<4x1xi1> to vector<4x32xi1>
    %358 = arith.select %357, %348, %268 : vector<4x32xi1>, vector<4x32xf32>
    %cst_97 = arith.constant 0.000000e+00 : f32
    %359 = vector.broadcast %cst_97 : f32 to vector<4x32xf32>
    %360 = vector.shape_cast %350 : vector<4x1xi1> to vector<4x1xi1>
    %361 = vector.broadcast %360 : vector<4x1xi1> to vector<4x32xi1>
    %362 = arith.select %361, %317, %359 : vector<4x32xi1>, vector<4x32xf32>
    %c12 = arith.constant 12 : index
    %c0_98 = arith.constant 0 : index
    %363 = vector.load %arg9[%c12, %c0_98] : memref<32x64xf32, #tpu.memory_space<vmem>>, vector<4x32xf32>
    tpu.vector_store %arg9[%c12, %c0_98], %362 {strides = array<i32>} : memref<32x64xf32, #tpu.memory_space<vmem>>, vector<4x32xf32>,
    %cst_99 = arith.constant 0.000000e+00 : f32
    %364 = vector.broadcast %cst_99 : f32 to vector<4x32xf32>
    %365 = vector.shape_cast %352 : vector<4x1xi1> to vector<4x1xi1>
    %366 = vector.broadcast %365 : vector<4x1xi1> to vector<4x32xi1>
    %367 = arith.select %366, %348, %364 : vector<4x32xi1>, vector<4x32xf32>
    %c16 = arith.constant 16 : index
    %c32_100 = arith.constant 32 : index
    %368 = vector.load %arg9[%c16, %c32_100] : memref<32x64xf32, #tpu.memory_space<vmem>>, vector<4x32xf32>
    tpu.vector_store %arg9[%c16, %c32_100], %367 {strides = array<i32>} : memref<32x64xf32, #tpu.memory_space<vmem>>, vector<4x32xf32>,
    %369 = tpu.concatenate %355, %358 in 1 : vector<4x32xf32>, vector<4x32xf32> -> vector<4x64xf32>
    %c0_101 = arith.constant 0 : index
    %c0_102 = arith.constant 0 : index
    %370 = vector.load %arg5[%c0_101, %c0_102] : memref<64x192xf32, #tpu.memory_space<vmem>>, vector<64x192xf32>
    %cst_103 = arith.constant dense<0.000000e+00> : vector<4x192xf32>
    %371 = tpu.matmul %369, %370, %cst_103 {dimension_numbers = #tpu.dot_dimension_numbers<[1], [0], [0], [1], [0, 0, 1, 1], [], []>} : vector<4x64xf32>, vector<64x192xf32>, vector<4x192xf32> -> vector<4x192xf32>
    %c0_104 = arith.constant 0 : index
    %c0_105 = arith.constant 0 : index
    %372 = vector.load %arg6[%c0_104, %c0_105] : memref<1x192xf32, #tpu.memory_space<vmem>>, vector<1x192xf32>
    %373 = vector.broadcast %372 : vector<1x192xf32> to vector<4x192xf32>
    %374 = arith.addf %371, %373 : vector<4x192xf32>
    %375 = vector.extract_strided_slice %6 {offsets = [16, 0], sizes = [4, 96], strides = [1, 1]} : vector<32x192xf32> to vector<4x96xf32>
    %376 = vector.extract_strided_slice %6 {offsets = [12, 96], sizes = [4, 96], strides = [1, 1]} : vector<32x192xf32> to vector<4x96xf32>
    %377 = vector.extract_strided_slice %374 {offsets = [0, 0], sizes = [4, 96], strides = [1, 1]} : vector<4x192xf32> to vector<4x96xf32>
    %378 = vector.extract_strided_slice %375 {offsets = [0, 0], sizes = [4, 32], strides = [1, 1]} : vector<4x96xf32> to vector<4x32xf32>
    %379 = vector.extract_strided_slice %377 {offsets = [0, 0], sizes = [4, 32], strides = [1, 1]} : vector<4x96xf32> to vector<4x32xf32>
    %380 = arith.addf %378, %379 : vector<4x32xf32>
    %cst_106 = arith.constant 0.000000e+00 : f32
    %381 = vector.broadcast %cst_106 : f32 to vector<4x32xf32>
    %382 = arith.subf %381, %380 : vector<4x32xf32>
    %383 = math.exp %382 : vector<4x32xf32>
    %cst_107 = arith.constant 1.000000e+00 : f32
    %384 = vector.broadcast %cst_107 : f32 to vector<4x32xf32>
    %385 = arith.addf %384, %383 : vector<4x32xf32>
    %cst_108 = arith.constant 1.000000e+00 : f32
    %386 = vector.broadcast %cst_108 : f32 to vector<4x32xf32>
    %387 = arith.divf %386, %385 : vector<4x32xf32>
    %388 = vector.extract_strided_slice %375 {offsets = [0, 32], sizes = [4, 32], strides = [1, 1]} : vector<4x96xf32> to vector<4x32xf32>
    %389 = vector.extract_strided_slice %377 {offsets = [0, 32], sizes = [4, 32], strides = [1, 1]} : vector<4x96xf32> to vector<4x32xf32>
    %390 = arith.addf %388, %389 : vector<4x32xf32>
    %cst_109 = arith.constant 0.000000e+00 : f32
    %391 = vector.broadcast %cst_109 : f32 to vector<4x32xf32>
    %392 = arith.subf %391, %390 : vector<4x32xf32>
    %393 = math.exp %392 : vector<4x32xf32>
    %cst_110 = arith.constant 1.000000e+00 : f32
    %394 = vector.broadcast %cst_110 : f32 to vector<4x32xf32>
    %395 = arith.addf %394, %393 : vector<4x32xf32>
    %cst_111 = arith.constant 1.000000e+00 : f32
    %396 = vector.broadcast %cst_111 : f32 to vector<4x32xf32>
    %397 = arith.divf %396, %395 : vector<4x32xf32>
    %398 = vector.extract_strided_slice %375 {offsets = [0, 64], sizes = [4, 32], strides = [1, 1]} : vector<4x96xf32> to vector<4x32xf32>
    %399 = vector.extract_strided_slice %377 {offsets = [0, 64], sizes = [4, 32], strides = [1, 1]} : vector<4x96xf32> to vector<4x32xf32>
    %400 = arith.mulf %387, %399 : vector<4x32xf32>
    %401 = arith.addf %398, %400 : vector<4x32xf32>
    %402 = math.tanh %401 : vector<4x32xf32>
    %cst_112 = arith.constant 1.000000e+00 : f32
    %403 = vector.broadcast %cst_112 : f32 to vector<4x32xf32>
    %404 = arith.subf %403, %397 : vector<4x32xf32>
    %405 = arith.mulf %404, %402 : vector<4x32xf32>
    %406 = arith.mulf %397, %355 : vector<4x32xf32>
    %407 = arith.addf %405, %406 : vector<4x32xf32>
    %408 = vector.extract_strided_slice %374 {offsets = [0, 96], sizes = [4, 96], strides = [1, 1]} : vector<4x192xf32> to vector<4x96xf32>
    %409 = vector.extract_strided_slice %376 {offsets = [0, 0], sizes = [4, 32], strides = [1, 1]} : vector<4x96xf32> to vector<4x32xf32>
    %410 = vector.extract_strided_slice %408 {offsets = [0, 0], sizes = [4, 32], strides = [1, 1]} : vector<4x96xf32> to vector<4x32xf32>
    %411 = arith.addf %409, %410 : vector<4x32xf32>
    %cst_113 = arith.constant 0.000000e+00 : f32
    %412 = vector.broadcast %cst_113 : f32 to vector<4x32xf32>
    %413 = arith.subf %412, %411 : vector<4x32xf32>
    %414 = math.exp %413 : vector<4x32xf32>
    %cst_114 = arith.constant 1.000000e+00 : f32
    %415 = vector.broadcast %cst_114 : f32 to vector<4x32xf32>
    %416 = arith.addf %415, %414 : vector<4x32xf32>
    %cst_115 = arith.constant 1.000000e+00 : f32
    %417 = vector.broadcast %cst_115 : f32 to vector<4x32xf32>
    %418 = arith.divf %417, %416 : vector<4x32xf32>
    %419 = vector.extract_strided_slice %376 {offsets = [0, 32], sizes = [4, 32], strides = [1, 1]} : vector<4x96xf32> to vector<4x32xf32>
    %420 = vector.extract_strided_slice %408 {offsets = [0, 32], sizes = [4, 32], strides = [1, 1]} : vector<4x96xf32> to vector<4x32xf32>
    %421 = arith.addf %419, %420 : vector<4x32xf32>
    %cst_116 = arith.constant 0.000000e+00 : f32
    %422 = vector.broadcast %cst_116 : f32 to vector<4x32xf32>
    %423 = arith.subf %422, %421 : vector<4x32xf32>
    %424 = math.exp %423 : vector<4x32xf32>
    %cst_117 = arith.constant 1.000000e+00 : f32
    %425 = vector.broadcast %cst_117 : f32 to vector<4x32xf32>
    %426 = arith.addf %425, %424 : vector<4x32xf32>
    %cst_118 = arith.constant 1.000000e+00 : f32
    %427 = vector.broadcast %cst_118 : f32 to vector<4x32xf32>
    %428 = arith.divf %427, %426 : vector<4x32xf32>
    %429 = vector.extract_strided_slice %376 {offsets = [0, 64], sizes = [4, 32], strides = [1, 1]} : vector<4x96xf32> to vector<4x32xf32>
    %430 = vector.extract_strided_slice %408 {offsets = [0, 64], sizes = [4, 32], strides = [1, 1]} : vector<4x96xf32> to vector<4x32xf32>
    %431 = arith.mulf %418, %430 : vector<4x32xf32>
    %432 = arith.addf %429, %431 : vector<4x32xf32>
    %433 = math.tanh %432 : vector<4x32xf32>
    %cst_119 = arith.constant 1.000000e+00 : f32
    %434 = vector.broadcast %cst_119 : f32 to vector<4x32xf32>
    %435 = arith.subf %434, %428 : vector<4x32xf32>
    %436 = arith.mulf %435, %433 : vector<4x32xf32>
    %437 = arith.mulf %428, %358 : vector<4x32xf32>
    %438 = arith.addf %436, %437 : vector<4x32xf32>
    %c4_i32_120 = arith.constant 4 : i32
    %439 = vector.broadcast %c4_i32_120 : i32 to vector<4x1xi32>
    %440 = arith.cmpi sgt, %0, %439 : vector<4x1xi32>
    %c3_i32_121 = arith.constant 3 : i32
    %441 = vector.broadcast %c3_i32_121 : i32 to vector<4x1xi32>
    %442 = arith.cmpi sgt, %0, %441 : vector<4x1xi32>
    %443 = vector.shape_cast %440 : vector<4x1xi1> to vector<4x1xi1>
    %444 = vector.broadcast %443 : vector<4x1xi1> to vector<4x32xi1>
    %445 = arith.select %444, %407, %355 : vector<4x32xi1>, vector<4x32xf32>
    %446 = vector.shape_cast %442 : vector<4x1xi1> to vector<4x1xi1>
    %447 = vector.broadcast %446 : vector<4x1xi1> to vector<4x32xi1>
    %448 = arith.select %447, %438, %358 : vector<4x32xi1>, vector<4x32xf32>
    %cst_122 = arith.constant 0.000000e+00 : f32
    %449 = vector.broadcast %cst_122 : f32 to vector<4x32xf32>
    %450 = vector.shape_cast %440 : vector<4x1xi1> to vector<4x1xi1>
    %451 = vector.broadcast %450 : vector<4x1xi1> to vector<4x32xi1>
    %452 = arith.select %451, %407, %449 : vector<4x32xi1>, vector<4x32xf32>
    %c16_123 = arith.constant 16 : index
    %c0_124 = arith.constant 0 : index
    %453 = vector.load %arg9[%c16_123, %c0_124] : memref<32x64xf32, #tpu.memory_space<vmem>>, vector<4x32xf32>
    tpu.vector_store %arg9[%c16_123, %c0_124], %452 {strides = array<i32>} : memref<32x64xf32, #tpu.memory_space<vmem>>, vector<4x32xf32>,
    %cst_125 = arith.constant 0.000000e+00 : f32
    %454 = vector.broadcast %cst_125 : f32 to vector<4x32xf32>
    %455 = vector.shape_cast %442 : vector<4x1xi1> to vector<4x1xi1>
    %456 = vector.broadcast %455 : vector<4x1xi1> to vector<4x32xi1>
    %457 = arith.select %456, %438, %454 : vector<4x32xi1>, vector<4x32xf32>
    %c12_126 = arith.constant 12 : index
    %c32_127 = arith.constant 32 : index
    %458 = vector.load %arg9[%c12_126, %c32_127] : memref<32x64xf32, #tpu.memory_space<vmem>>, vector<4x32xf32>
    tpu.vector_store %arg9[%c12_126, %c32_127], %457 {strides = array<i32>} : memref<32x64xf32, #tpu.memory_space<vmem>>, vector<4x32xf32>,
    %459 = tpu.concatenate %445, %448 in 1 : vector<4x32xf32>, vector<4x32xf32> -> vector<4x64xf32>
    %c0_128 = arith.constant 0 : index
    %c0_129 = arith.constant 0 : index
    %460 = vector.load %arg5[%c0_128, %c0_129] : memref<64x192xf32, #tpu.memory_space<vmem>>, vector<64x192xf32>
    %cst_130 = arith.constant dense<0.000000e+00> : vector<4x192xf32>
    %461 = tpu.matmul %459, %460, %cst_130 {dimension_numbers = #tpu.dot_dimension_numbers<[1], [0], [0], [1], [0, 0, 1, 1], [], []>} : vector<4x64xf32>, vector<64x192xf32>, vector<4x192xf32> -> vector<4x192xf32>
    %c0_131 = arith.constant 0 : index
    %c0_132 = arith.constant 0 : index
    %462 = vector.load %arg6[%c0_131, %c0_132] : memref<1x192xf32, #tpu.memory_space<vmem>>, vector<1x192xf32>
    %463 = vector.broadcast %462 : vector<1x192xf32> to vector<4x192xf32>
    %464 = arith.addf %461, %463 : vector<4x192xf32>
    %465 = vector.extract_strided_slice %6 {offsets = [20, 0], sizes = [4, 96], strides = [1, 1]} : vector<32x192xf32> to vector<4x96xf32>
    %466 = vector.extract_strided_slice %6 {offsets = [8, 96], sizes = [4, 96], strides = [1, 1]} : vector<32x192xf32> to vector<4x96xf32>
    %467 = vector.extract_strided_slice %464 {offsets = [0, 0], sizes = [4, 96], strides = [1, 1]} : vector<4x192xf32> to vector<4x96xf32>
    %468 = vector.extract_strided_slice %465 {offsets = [0, 0], sizes = [4, 32], strides = [1, 1]} : vector<4x96xf32> to vector<4x32xf32>
    %469 = vector.extract_strided_slice %467 {offsets = [0, 0], sizes = [4, 32], strides = [1, 1]} : vector<4x96xf32> to vector<4x32xf32>
    %470 = arith.addf %468, %469 : vector<4x32xf32>
    %cst_133 = arith.constant 0.000000e+00 : f32
    %471 = vector.broadcast %cst_133 : f32 to vector<4x32xf32>
    %472 = arith.subf %471, %470 : vector<4x32xf32>
    %473 = math.exp %472 : vector<4x32xf32>
    %cst_134 = arith.constant 1.000000e+00 : f32
    %474 = vector.broadcast %cst_134 : f32 to vector<4x32xf32>
    %475 = arith.addf %474, %473 : vector<4x32xf32>
    %cst_135 = arith.constant 1.000000e+00 : f32
    %476 = vector.broadcast %cst_135 : f32 to vector<4x32xf32>
    %477 = arith.divf %476, %475 : vector<4x32xf32>
    %478 = vector.extract_strided_slice %465 {offsets = [0, 32], sizes = [4, 32], strides = [1, 1]} : vector<4x96xf32> to vector<4x32xf32>
    %479 = vector.extract_strided_slice %467 {offsets = [0, 32], sizes = [4, 32], strides = [1, 1]} : vector<4x96xf32> to vector<4x32xf32>
    %480 = arith.addf %478, %479 : vector<4x32xf32>
    %cst_136 = arith.constant 0.000000e+00 : f32
    %481 = vector.broadcast %cst_136 : f32 to vector<4x32xf32>
    %482 = arith.subf %481, %480 : vector<4x32xf32>
    %483 = math.exp %482 : vector<4x32xf32>
    %cst_137 = arith.constant 1.000000e+00 : f32
    %484 = vector.broadcast %cst_137 : f32 to vector<4x32xf32>
    %485 = arith.addf %484, %483 : vector<4x32xf32>
    %cst_138 = arith.constant 1.000000e+00 : f32
    %486 = vector.broadcast %cst_138 : f32 to vector<4x32xf32>
    %487 = arith.divf %486, %485 : vector<4x32xf32>
    %488 = vector.extract_strided_slice %465 {offsets = [0, 64], sizes = [4, 32], strides = [1, 1]} : vector<4x96xf32> to vector<4x32xf32>
    %489 = vector.extract_strided_slice %467 {offsets = [0, 64], sizes = [4, 32], strides = [1, 1]} : vector<4x96xf32> to vector<4x32xf32>
    %490 = arith.mulf %477, %489 : vector<4x32xf32>
    %491 = arith.addf %488, %490 : vector<4x32xf32>
    %492 = math.tanh %491 : vector<4x32xf32>
    %cst_139 = arith.constant 1.000000e+00 : f32
    %493 = vector.broadcast %cst_139 : f32 to vector<4x32xf32>
    %494 = arith.subf %493, %487 : vector<4x32xf32>
    %495 = arith.mulf %494, %492 : vector<4x32xf32>
    %496 = arith.mulf %487, %445 : vector<4x32xf32>
    %497 = arith.addf %495, %496 : vector<4x32xf32>
    %498 = vector.extract_strided_slice %464 {offsets = [0, 96], sizes = [4, 96], strides = [1, 1]} : vector<4x192xf32> to vector<4x96xf32>
    %499 = vector.extract_strided_slice %466 {offsets = [0, 0], sizes = [4, 32], strides = [1, 1]} : vector<4x96xf32> to vector<4x32xf32>
    %500 = vector.extract_strided_slice %498 {offsets = [0, 0], sizes = [4, 32], strides = [1, 1]} : vector<4x96xf32> to vector<4x32xf32>
    %501 = arith.addf %499, %500 : vector<4x32xf32>
    %cst_140 = arith.constant 0.000000e+00 : f32
    %502 = vector.broadcast %cst_140 : f32 to vector<4x32xf32>
    %503 = arith.subf %502, %501 : vector<4x32xf32>
    %504 = math.exp %503 : vector<4x32xf32>
    %cst_141 = arith.constant 1.000000e+00 : f32
    %505 = vector.broadcast %cst_141 : f32 to vector<4x32xf32>
    %506 = arith.addf %505, %504 : vector<4x32xf32>
    %cst_142 = arith.constant 1.000000e+00 : f32
    %507 = vector.broadcast %cst_142 : f32 to vector<4x32xf32>
    %508 = arith.divf %507, %506 : vector<4x32xf32>
    %509 = vector.extract_strided_slice %466 {offsets = [0, 32], sizes = [4, 32], strides = [1, 1]} : vector<4x96xf32> to vector<4x32xf32>
    %510 = vector.extract_strided_slice %498 {offsets = [0, 32], sizes = [4, 32], strides = [1, 1]} : vector<4x96xf32> to vector<4x32xf32>
    %511 = arith.addf %509, %510 : vector<4x32xf32>
    %cst_143 = arith.constant 0.000000e+00 : f32
    %512 = vector.broadcast %cst_143 : f32 to vector<4x32xf32>
    %513 = arith.subf %512, %511 : vector<4x32xf32>
    %514 = math.exp %513 : vector<4x32xf32>
    %cst_144 = arith.constant 1.000000e+00 : f32
    %515 = vector.broadcast %cst_144 : f32 to vector<4x32xf32>
    %516 = arith.addf %515, %514 : vector<4x32xf32>
    %cst_145 = arith.constant 1.000000e+00 : f32
    %517 = vector.broadcast %cst_145 : f32 to vector<4x32xf32>
    %518 = arith.divf %517, %516 : vector<4x32xf32>
    %519 = vector.extract_strided_slice %466 {offsets = [0, 64], sizes = [4, 32], strides = [1, 1]} : vector<4x96xf32> to vector<4x32xf32>
    %520 = vector.extract_strided_slice %498 {offsets = [0, 64], sizes = [4, 32], strides = [1, 1]} : vector<4x96xf32> to vector<4x32xf32>
    %521 = arith.mulf %508, %520 : vector<4x32xf32>
    %522 = arith.addf %519, %521 : vector<4x32xf32>
    %523 = math.tanh %522 : vector<4x32xf32>
    %cst_146 = arith.constant 1.000000e+00 : f32
    %524 = vector.broadcast %cst_146 : f32 to vector<4x32xf32>
    %525 = arith.subf %524, %518 : vector<4x32xf32>
    %526 = arith.mulf %525, %523 : vector<4x32xf32>
    %527 = arith.mulf %518, %448 : vector<4x32xf32>
    %528 = arith.addf %526, %527 : vector<4x32xf32>
    %c5_i32_147 = arith.constant 5 : i32
    %529 = vector.broadcast %c5_i32_147 : i32 to vector<4x1xi32>
    %530 = arith.cmpi sgt, %0, %529 : vector<4x1xi32>
    %c2_i32_148 = arith.constant 2 : i32
    %531 = vector.broadcast %c2_i32_148 : i32 to vector<4x1xi32>
    %532 = arith.cmpi sgt, %0, %531 : vector<4x1xi32>
    %533 = vector.shape_cast %530 : vector<4x1xi1> to vector<4x1xi1>
    %534 = vector.broadcast %533 : vector<4x1xi1> to vector<4x32xi1>
    %535 = arith.select %534, %497, %445 : vector<4x32xi1>, vector<4x32xf32>
    %536 = vector.shape_cast %532 : vector<4x1xi1> to vector<4x1xi1>
    %537 = vector.broadcast %536 : vector<4x1xi1> to vector<4x32xi1>
    %538 = arith.select %537, %528, %448 : vector<4x32xi1>, vector<4x32xf32>
    %cst_149 = arith.constant 0.000000e+00 : f32
    %539 = vector.broadcast %cst_149 : f32 to vector<4x32xf32>
    %540 = vector.shape_cast %530 : vector<4x1xi1> to vector<4x1xi1>
    %541 = vector.broadcast %540 : vector<4x1xi1> to vector<4x32xi1>
    %542 = arith.select %541, %497, %539 : vector<4x32xi1>, vector<4x32xf32>
    %c20_150 = arith.constant 20 : index
    %c0_151 = arith.constant 0 : index
    %543 = vector.load %arg9[%c20_150, %c0_151] : memref<32x64xf32, #tpu.memory_space<vmem>>, vector<4x32xf32>
    tpu.vector_store %arg9[%c20_150, %c0_151], %542 {strides = array<i32>} : memref<32x64xf32, #tpu.memory_space<vmem>>, vector<4x32xf32>,
    %cst_152 = arith.constant 0.000000e+00 : f32
    %544 = vector.broadcast %cst_152 : f32 to vector<4x32xf32>
    %545 = vector.shape_cast %532 : vector<4x1xi1> to vector<4x1xi1>
    %546 = vector.broadcast %545 : vector<4x1xi1> to vector<4x32xi1>
    %547 = arith.select %546, %528, %544 : vector<4x32xi1>, vector<4x32xf32>
    %c8_153 = arith.constant 8 : index
    %c32_154 = arith.constant 32 : index
    %548 = vector.load %arg9[%c8_153, %c32_154] : memref<32x64xf32, #tpu.memory_space<vmem>>, vector<4x32xf32>
    tpu.vector_store %arg9[%c8_153, %c32_154], %547 {strides = array<i32>} : memref<32x64xf32, #tpu.memory_space<vmem>>, vector<4x32xf32>,
    %549 = tpu.concatenate %535, %538 in 1 : vector<4x32xf32>, vector<4x32xf32> -> vector<4x64xf32>
    %c0_155 = arith.constant 0 : index
    %c0_156 = arith.constant 0 : index
    %550 = vector.load %arg5[%c0_155, %c0_156] : memref<64x192xf32, #tpu.memory_space<vmem>>, vector<64x192xf32>
    %cst_157 = arith.constant dense<0.000000e+00> : vector<4x192xf32>
    %551 = tpu.matmul %549, %550, %cst_157 {dimension_numbers = #tpu.dot_dimension_numbers<[1], [0], [0], [1], [0, 0, 1, 1], [], []>} : vector<4x64xf32>, vector<64x192xf32>, vector<4x192xf32> -> vector<4x192xf32>
    %c0_158 = arith.constant 0 : index
    %c0_159 = arith.constant 0 : index
    %552 = vector.load %arg6[%c0_158, %c0_159] : memref<1x192xf32, #tpu.memory_space<vmem>>, vector<1x192xf32>
    %553 = vector.broadcast %552 : vector<1x192xf32> to vector<4x192xf32>
    %554 = arith.addf %551, %553 : vector<4x192xf32>
    %555 = vector.extract_strided_slice %6 {offsets = [24, 0], sizes = [4, 96], strides = [1, 1]} : vector<32x192xf32> to vector<4x96xf32>
    %556 = vector.extract_strided_slice %6 {offsets = [4, 96], sizes = [4, 96], strides = [1, 1]} : vector<32x192xf32> to vector<4x96xf32>
    %557 = vector.extract_strided_slice %554 {offsets = [0, 0], sizes = [4, 96], strides = [1, 1]} : vector<4x192xf32> to vector<4x96xf32>
    %558 = vector.extract_strided_slice %555 {offsets = [0, 0], sizes = [4, 32], strides = [1, 1]} : vector<4x96xf32> to vector<4x32xf32>
    %559 = vector.extract_strided_slice %557 {offsets = [0, 0], sizes = [4, 32], strides = [1, 1]} : vector<4x96xf32> to vector<4x32xf32>
    %560 = arith.addf %558, %559 : vector<4x32xf32>
    %cst_160 = arith.constant 0.000000e+00 : f32
    %561 = vector.broadcast %cst_160 : f32 to vector<4x32xf32>
    %562 = arith.subf %561, %560 : vector<4x32xf32>
    %563 = math.exp %562 : vector<4x32xf32>
    %cst_161 = arith.constant 1.000000e+00 : f32
    %564 = vector.broadcast %cst_161 : f32 to vector<4x32xf32>
    %565 = arith.addf %564, %563 : vector<4x32xf32>
    %cst_162 = arith.constant 1.000000e+00 : f32
    %566 = vector.broadcast %cst_162 : f32 to vector<4x32xf32>
    %567 = arith.divf %566, %565 : vector<4x32xf32>
    %568 = vector.extract_strided_slice %555 {offsets = [0, 32], sizes = [4, 32], strides = [1, 1]} : vector<4x96xf32> to vector<4x32xf32>
    %569 = vector.extract_strided_slice %557 {offsets = [0, 32], sizes = [4, 32], strides = [1, 1]} : vector<4x96xf32> to vector<4x32xf32>
    %570 = arith.addf %568, %569 : vector<4x32xf32>
    %cst_163 = arith.constant 0.000000e+00 : f32
    %571 = vector.broadcast %cst_163 : f32 to vector<4x32xf32>
    %572 = arith.subf %571, %570 : vector<4x32xf32>
    %573 = math.exp %572 : vector<4x32xf32>
    %cst_164 = arith.constant 1.000000e+00 : f32
    %574 = vector.broadcast %cst_164 : f32 to vector<4x32xf32>
    %575 = arith.addf %574, %573 : vector<4x32xf32>
    %cst_165 = arith.constant 1.000000e+00 : f32
    %576 = vector.broadcast %cst_165 : f32 to vector<4x32xf32>
    %577 = arith.divf %576, %575 : vector<4x32xf32>
    %578 = vector.extract_strided_slice %555 {offsets = [0, 64], sizes = [4, 32], strides = [1, 1]} : vector<4x96xf32> to vector<4x32xf32>
    %579 = vector.extract_strided_slice %557 {offsets = [0, 64], sizes = [4, 32], strides = [1, 1]} : vector<4x96xf32> to vector<4x32xf32>
    %580 = arith.mulf %567, %579 : vector<4x32xf32>
    %581 = arith.addf %578, %580 : vector<4x32xf32>
    %582 = math.tanh %581 : vector<4x32xf32>
    %cst_166 = arith.constant 1.000000e+00 : f32
    %583 = vector.broadcast %cst_166 : f32 to vector<4x32xf32>
    %584 = arith.subf %583, %577 : vector<4x32xf32>
    %585 = arith.mulf %584, %582 : vector<4x32xf32>
    %586 = arith.mulf %577, %535 : vector<4x32xf32>
    %587 = arith.addf %585, %586 : vector<4x32xf32>
    %588 = vector.extract_strided_slice %554 {offsets = [0, 96], sizes = [4, 96], strides = [1, 1]} : vector<4x192xf32> to vector<4x96xf32>
    %589 = vector.extract_strided_slice %556 {offsets = [0, 0], sizes = [4, 32], strides = [1, 1]} : vector<4x96xf32> to vector<4x32xf32>
    %590 = vector.extract_strided_slice %588 {offsets = [0, 0], sizes = [4, 32], strides = [1, 1]} : vector<4x96xf32> to vector<4x32xf32>
    %591 = arith.addf %589, %590 : vector<4x32xf32>
    %cst_167 = arith.constant 0.000000e+00 : f32
    %592 = vector.broadcast %cst_167 : f32 to vector<4x32xf32>
    %593 = arith.subf %592, %591 : vector<4x32xf32>
    %594 = math.exp %593 : vector<4x32xf32>
    %cst_168 = arith.constant 1.000000e+00 : f32
    %595 = vector.broadcast %cst_168 : f32 to vector<4x32xf32>
    %596 = arith.addf %595, %594 : vector<4x32xf32>
    %cst_169 = arith.constant 1.000000e+00 : f32
    %597 = vector.broadcast %cst_169 : f32 to vector<4x32xf32>
    %598 = arith.divf %597, %596 : vector<4x32xf32>
    %599 = vector.extract_strided_slice %556 {offsets = [0, 32], sizes = [4, 32], strides = [1, 1]} : vector<4x96xf32> to vector<4x32xf32>
    %600 = vector.extract_strided_slice %588 {offsets = [0, 32], sizes = [4, 32], strides = [1, 1]} : vector<4x96xf32> to vector<4x32xf32>
    %601 = arith.addf %599, %600 : vector<4x32xf32>
    %cst_170 = arith.constant 0.000000e+00 : f32
    %602 = vector.broadcast %cst_170 : f32 to vector<4x32xf32>
    %603 = arith.subf %602, %601 : vector<4x32xf32>
    %604 = math.exp %603 : vector<4x32xf32>
    %cst_171 = arith.constant 1.000000e+00 : f32
    %605 = vector.broadcast %cst_171 : f32 to vector<4x32xf32>
    %606 = arith.addf %605, %604 : vector<4x32xf32>
    %cst_172 = arith.constant 1.000000e+00 : f32
    %607 = vector.broadcast %cst_172 : f32 to vector<4x32xf32>
    %608 = arith.divf %607, %606 : vector<4x32xf32>
    %609 = vector.extract_strided_slice %556 {offsets = [0, 64], sizes = [4, 32], strides = [1, 1]} : vector<4x96xf32> to vector<4x32xf32>
    %610 = vector.extract_strided_slice %588 {offsets = [0, 64], sizes = [4, 32], strides = [1, 1]} : vector<4x96xf32> to vector<4x32xf32>
    %611 = arith.mulf %598, %610 : vector<4x32xf32>
    %612 = arith.addf %609, %611 : vector<4x32xf32>
    %613 = math.tanh %612 : vector<4x32xf32>
    %cst_173 = arith.constant 1.000000e+00 : f32
    %614 = vector.broadcast %cst_173 : f32 to vector<4x32xf32>
    %615 = arith.subf %614, %608 : vector<4x32xf32>
    %616 = arith.mulf %615, %613 : vector<4x32xf32>
    %617 = arith.mulf %608, %538 : vector<4x32xf32>
    %618 = arith.addf %616, %617 : vector<4x32xf32>
    %c6_i32_174 = arith.constant 6 : i32
    %619 = vector.broadcast %c6_i32_174 : i32 to vector<4x1xi32>
    %620 = arith.cmpi sgt, %0, %619 : vector<4x1xi32>
    %c1_i32_175 = arith.constant 1 : i32
    %621 = vector.broadcast %c1_i32_175 : i32 to vector<4x1xi32>
    %622 = arith.cmpi sgt, %0, %621 : vector<4x1xi32>
    %623 = vector.shape_cast %620 : vector<4x1xi1> to vector<4x1xi1>
    %624 = vector.broadcast %623 : vector<4x1xi1> to vector<4x32xi1>
    %625 = arith.select %624, %587, %535 : vector<4x32xi1>, vector<4x32xf32>
    %626 = vector.shape_cast %622 : vector<4x1xi1> to vector<4x1xi1>
    %627 = vector.broadcast %626 : vector<4x1xi1> to vector<4x32xi1>
    %628 = arith.select %627, %618, %538 : vector<4x32xi1>, vector<4x32xf32>
    %cst_176 = arith.constant 0.000000e+00 : f32
    %629 = vector.broadcast %cst_176 : f32 to vector<4x32xf32>
    %630 = vector.shape_cast %620 : vector<4x1xi1> to vector<4x1xi1>
    %631 = vector.broadcast %630 : vector<4x1xi1> to vector<4x32xi1>
    %632 = arith.select %631, %587, %629 : vector<4x32xi1>, vector<4x32xf32>
    %c24_177 = arith.constant 24 : index
    %c0_178 = arith.constant 0 : index
    %633 = vector.load %arg9[%c24_177, %c0_178] : memref<32x64xf32, #tpu.memory_space<vmem>>, vector<4x32xf32>
    tpu.vector_store %arg9[%c24_177, %c0_178], %632 {strides = array<i32>} : memref<32x64xf32, #tpu.memory_space<vmem>>, vector<4x32xf32>,
    %cst_179 = arith.constant 0.000000e+00 : f32
    %634 = vector.broadcast %cst_179 : f32 to vector<4x32xf32>
    %635 = vector.shape_cast %622 : vector<4x1xi1> to vector<4x1xi1>
    %636 = vector.broadcast %635 : vector<4x1xi1> to vector<4x32xi1>
    %637 = arith.select %636, %618, %634 : vector<4x32xi1>, vector<4x32xf32>
    %c4_180 = arith.constant 4 : index
    %c32_181 = arith.constant 32 : index
    %638 = vector.load %arg9[%c4_180, %c32_181] : memref<32x64xf32, #tpu.memory_space<vmem>>, vector<4x32xf32>
    tpu.vector_store %arg9[%c4_180, %c32_181], %637 {strides = array<i32>} : memref<32x64xf32, #tpu.memory_space<vmem>>, vector<4x32xf32>,
    %639 = tpu.concatenate %625, %628 in 1 : vector<4x32xf32>, vector<4x32xf32> -> vector<4x64xf32>
    %c0_182 = arith.constant 0 : index
    %c0_183 = arith.constant 0 : index
    %640 = vector.load %arg5[%c0_182, %c0_183] : memref<64x192xf32, #tpu.memory_space<vmem>>, vector<64x192xf32>
    %cst_184 = arith.constant dense<0.000000e+00> : vector<4x192xf32>
    %641 = tpu.matmul %639, %640, %cst_184 {dimension_numbers = #tpu.dot_dimension_numbers<[1], [0], [0], [1], [0, 0, 1, 1], [], []>} : vector<4x64xf32>, vector<64x192xf32>, vector<4x192xf32> -> vector<4x192xf32>
    %c0_185 = arith.constant 0 : index
    %c0_186 = arith.constant 0 : index
    %642 = vector.load %arg6[%c0_185, %c0_186] : memref<1x192xf32, #tpu.memory_space<vmem>>, vector<1x192xf32>
    %643 = vector.broadcast %642 : vector<1x192xf32> to vector<4x192xf32>
    %644 = arith.addf %641, %643 : vector<4x192xf32>
    %645 = vector.extract_strided_slice %6 {offsets = [28, 0], sizes = [4, 96], strides = [1, 1]} : vector<32x192xf32> to vector<4x96xf32>
    %646 = vector.extract_strided_slice %6 {offsets = [0, 96], sizes = [4, 96], strides = [1, 1]} : vector<32x192xf32> to vector<4x96xf32>
    %647 = vector.extract_strided_slice %644 {offsets = [0, 0], sizes = [4, 96], strides = [1, 1]} : vector<4x192xf32> to vector<4x96xf32>
    %648 = vector.extract_strided_slice %645 {offsets = [0, 0], sizes = [4, 32], strides = [1, 1]} : vector<4x96xf32> to vector<4x32xf32>
    %649 = vector.extract_strided_slice %647 {offsets = [0, 0], sizes = [4, 32], strides = [1, 1]} : vector<4x96xf32> to vector<4x32xf32>
    %650 = arith.addf %648, %649 : vector<4x32xf32>
    %cst_187 = arith.constant 0.000000e+00 : f32
    %651 = vector.broadcast %cst_187 : f32 to vector<4x32xf32>
    %652 = arith.subf %651, %650 : vector<4x32xf32>
    %653 = math.exp %652 : vector<4x32xf32>
    %cst_188 = arith.constant 1.000000e+00 : f32
    %654 = vector.broadcast %cst_188 : f32 to vector<4x32xf32>
    %655 = arith.addf %654, %653 : vector<4x32xf32>
    %cst_189 = arith.constant 1.000000e+00 : f32
    %656 = vector.broadcast %cst_189 : f32 to vector<4x32xf32>
    %657 = arith.divf %656, %655 : vector<4x32xf32>
    %658 = vector.extract_strided_slice %645 {offsets = [0, 32], sizes = [4, 32], strides = [1, 1]} : vector<4x96xf32> to vector<4x32xf32>
    %659 = vector.extract_strided_slice %647 {offsets = [0, 32], sizes = [4, 32], strides = [1, 1]} : vector<4x96xf32> to vector<4x32xf32>
    %660 = arith.addf %658, %659 : vector<4x32xf32>
    %cst_190 = arith.constant 0.000000e+00 : f32
    %661 = vector.broadcast %cst_190 : f32 to vector<4x32xf32>
    %662 = arith.subf %661, %660 : vector<4x32xf32>
    %663 = math.exp %662 : vector<4x32xf32>
    %cst_191 = arith.constant 1.000000e+00 : f32
    %664 = vector.broadcast %cst_191 : f32 to vector<4x32xf32>
    %665 = arith.addf %664, %663 : vector<4x32xf32>
    %cst_192 = arith.constant 1.000000e+00 : f32
    %666 = vector.broadcast %cst_192 : f32 to vector<4x32xf32>
    %667 = arith.divf %666, %665 : vector<4x32xf32>
    %668 = vector.extract_strided_slice %645 {offsets = [0, 64], sizes = [4, 32], strides = [1, 1]} : vector<4x96xf32> to vector<4x32xf32>
    %669 = vector.extract_strided_slice %647 {offsets = [0, 64], sizes = [4, 32], strides = [1, 1]} : vector<4x96xf32> to vector<4x32xf32>
    %670 = arith.mulf %657, %669 : vector<4x32xf32>
    %671 = arith.addf %668, %670 : vector<4x32xf32>
    %672 = math.tanh %671 : vector<4x32xf32>
    %cst_193 = arith.constant 1.000000e+00 : f32
    %673 = vector.broadcast %cst_193 : f32 to vector<4x32xf32>
    %674 = arith.subf %673, %667 : vector<4x32xf32>
    %675 = arith.mulf %674, %672 : vector<4x32xf32>
    %676 = arith.mulf %667, %625 : vector<4x32xf32>
    %677 = arith.addf %675, %676 : vector<4x32xf32>
    %678 = vector.extract_strided_slice %644 {offsets = [0, 96], sizes = [4, 96], strides = [1, 1]} : vector<4x192xf32> to vector<4x96xf32>
    %679 = vector.extract_strided_slice %646 {offsets = [0, 0], sizes = [4, 32], strides = [1, 1]} : vector<4x96xf32> to vector<4x32xf32>
    %680 = vector.extract_strided_slice %678 {offsets = [0, 0], sizes = [4, 32], strides = [1, 1]} : vector<4x96xf32> to vector<4x32xf32>
    %681 = arith.addf %679, %680 : vector<4x32xf32>
    %cst_194 = arith.constant 0.000000e+00 : f32
    %682 = vector.broadcast %cst_194 : f32 to vector<4x32xf32>
    %683 = arith.subf %682, %681 : vector<4x32xf32>
    %684 = math.exp %683 : vector<4x32xf32>
    %cst_195 = arith.constant 1.000000e+00 : f32
    %685 = vector.broadcast %cst_195 : f32 to vector<4x32xf32>
    %686 = arith.addf %685, %684 : vector<4x32xf32>
    %cst_196 = arith.constant 1.000000e+00 : f32
    %687 = vector.broadcast %cst_196 : f32 to vector<4x32xf32>
    %688 = arith.divf %687, %686 : vector<4x32xf32>
    %689 = vector.extract_strided_slice %646 {offsets = [0, 32], sizes = [4, 32], strides = [1, 1]} : vector<4x96xf32> to vector<4x32xf32>
    %690 = vector.extract_strided_slice %678 {offsets = [0, 32], sizes = [4, 32], strides = [1, 1]} : vector<4x96xf32> to vector<4x32xf32>
    %691 = arith.addf %689, %690 : vector<4x32xf32>
    %cst_197 = arith.constant 0.000000e+00 : f32
    %692 = vector.broadcast %cst_197 : f32 to vector<4x32xf32>
    %693 = arith.subf %692, %691 : vector<4x32xf32>
    %694 = math.exp %693 : vector<4x32xf32>
    %cst_198 = arith.constant 1.000000e+00 : f32
    %695 = vector.broadcast %cst_198 : f32 to vector<4x32xf32>
    %696 = arith.addf %695, %694 : vector<4x32xf32>
    %cst_199 = arith.constant 1.000000e+00 : f32
    %697 = vector.broadcast %cst_199 : f32 to vector<4x32xf32>
    %698 = arith.divf %697, %696 : vector<4x32xf32>
    %699 = vector.extract_strided_slice %646 {offsets = [0, 64], sizes = [4, 32], strides = [1, 1]} : vector<4x96xf32> to vector<4x32xf32>
    %700 = vector.extract_strided_slice %678 {offsets = [0, 64], sizes = [4, 32], strides = [1, 1]} : vector<4x96xf32> to vector<4x32xf32>
    %701 = arith.mulf %688, %700 : vector<4x32xf32>
    %702 = arith.addf %699, %701 : vector<4x32xf32>
    %703 = math.tanh %702 : vector<4x32xf32>
    %cst_200 = arith.constant 1.000000e+00 : f32
    %704 = vector.broadcast %cst_200 : f32 to vector<4x32xf32>
    %705 = arith.subf %704, %698 : vector<4x32xf32>
    %706 = arith.mulf %705, %703 : vector<4x32xf32>
    %707 = arith.mulf %698, %628 : vector<4x32xf32>
    %708 = arith.addf %706, %707 : vector<4x32xf32>
    %c7_i32_201 = arith.constant 7 : i32
    %709 = vector.broadcast %c7_i32_201 : i32 to vector<4x1xi32>
    %710 = arith.cmpi sgt, %0, %709 : vector<4x1xi32>
    %c0_i32_202 = arith.constant 0 : i32
    %711 = vector.broadcast %c0_i32_202 : i32 to vector<4x1xi32>
    %712 = arith.cmpi sgt, %0, %711 : vector<4x1xi32>
    %713 = vector.shape_cast %710 : vector<4x1xi1> to vector<4x1xi1>
    %714 = vector.broadcast %713 : vector<4x1xi1> to vector<4x32xi1>
    %715 = arith.select %714, %677, %625 : vector<4x32xi1>, vector<4x32xf32>
    %716 = vector.shape_cast %712 : vector<4x1xi1> to vector<4x1xi1>
    %717 = vector.broadcast %716 : vector<4x1xi1> to vector<4x32xi1>
    %718 = arith.select %717, %708, %628 : vector<4x32xi1>, vector<4x32xf32>
    %cst_203 = arith.constant 0.000000e+00 : f32
    %719 = vector.broadcast %cst_203 : f32 to vector<4x32xf32>
    %720 = vector.shape_cast %710 : vector<4x1xi1> to vector<4x1xi1>
    %721 = vector.broadcast %720 : vector<4x1xi1> to vector<4x32xi1>
    %722 = arith.select %721, %677, %719 : vector<4x32xi1>, vector<4x32xf32>
    %c28_204 = arith.constant 28 : index
    %c0_205 = arith.constant 0 : index
    %723 = vector.load %arg9[%c28_204, %c0_205] : memref<32x64xf32, #tpu.memory_space<vmem>>, vector<4x32xf32>
    tpu.vector_store %arg9[%c28_204, %c0_205], %722 {strides = array<i32>} : memref<32x64xf32, #tpu.memory_space<vmem>>, vector<4x32xf32>,
    %cst_206 = arith.constant 0.000000e+00 : f32
    %724 = vector.broadcast %cst_206 : f32 to vector<4x32xf32>
    %725 = vector.shape_cast %712 : vector<4x1xi1> to vector<4x1xi1>
    %726 = vector.broadcast %725 : vector<4x1xi1> to vector<4x32xi1>
    %727 = arith.select %726, %708, %724 : vector<4x32xi1>, vector<4x32xf32>
    %c0_207 = arith.constant 0 : index
    %c32_208 = arith.constant 32 : index
    %728 = vector.load %arg9[%c0_207, %c32_208] : memref<32x64xf32, #tpu.memory_space<vmem>>, vector<4x32xf32>
    tpu.vector_store %arg9[%c0_207, %c32_208], %727 {strides = array<i32>} : memref<32x64xf32, #tpu.memory_space<vmem>>, vector<4x32xf32>,
    %729 = tpu.concatenate %715, %718 in 1 : vector<4x32xf32>, vector<4x32xf32> -> vector<4x64xf32>
    %c0_209 = arith.constant 0 : index
    %c0_210 = arith.constant 0 : index
    %730 = vector.load %arg7[%c0_209, %c0_210] : memref<64x32xf32, #tpu.memory_space<vmem>>, vector<64x32xf32>
    %cst_211 = arith.constant dense<0.000000e+00> : vector<4x32xf32>
    %731 = tpu.matmul %729, %730, %cst_211 {dimension_numbers = #tpu.dot_dimension_numbers<[1], [0], [0], [1], [0, 0, 1, 1], [], []>} : vector<4x64xf32>, vector<64x32xf32>, vector<4x32xf32> -> vector<4x32xf32>
    %c0_212 = arith.constant 0 : index
    %c0_213 = arith.constant 0 : index
    %732 = vector.load %arg8[%c0_212, %c0_213] : memref<1x32xf32, #tpu.memory_space<vmem>>, vector<1x32xf32>
    %733 = vector.broadcast %732 : vector<1x32xf32> to vector<4x32xf32>
    %734 = arith.addf %731, %733 : vector<4x32xf32>
    %735 = math.tanh %734 : vector<4x32xf32>
    %c0_214 = arith.constant 0 : index
    %c0_215 = arith.constant 0 : index
    %736 = vector.load %arg10[%c0_214, %c0_215] : memref<4x32xf32, #tpu.memory_space<vmem>>, vector<4x32xf32>
    tpu.vector_store %arg10[%c0_214, %c0_215], %735 {strides = array<i32>} : memref<4x32xf32, #tpu.memory_space<vmem>>, vector<4x32xf32>,
    return
  }
  func.func @transform_0(%arg0: i32) -> (i32, i32) {
    %c0_i32 = arith.constant 0 : i32
    %c0_i32_0 = arith.constant 0 : i32
    %c0_i32_1 = arith.constant 0 : i32
    return %c0_i32, %c0_i32_0 : i32, i32
  }
  func.func @transform_1(%arg0: i32) -> (i32, i32) {
    %c0_i32 = arith.constant 0 : i32
    %c0_i32_0 = arith.constant 0 : i32
    %c0_i32_1 = arith.constant 0 : i32
    return %c0_i32, %c0_i32_0 : i32, i32
  }
  func.func @transform_2(%arg0: i32) -> (i32, i32) {
    %c0_i32 = arith.constant 0 : i32
    %c0_i32_0 = arith.constant 0 : i32
    %c0_i32_1 = arith.constant 0 : i32
    return %c0_i32, %c0_i32_0 : i32, i32
  }
  func.func @transform_3(%arg0: i32) -> (i32, i32) {
    %c0_i32 = arith.constant 0 : i32
    %c0_i32_0 = arith.constant 0 : i32
    %c0_i32_1 = arith.constant 0 : i32
    return %c0_i32, %c0_i32_0 : i32, i32
  }
  func.func @transform_4(%arg0: i32) -> (i32, i32) {
    %c0_i32 = arith.constant 0 : i32
    %c0_i32_0 = arith.constant 0 : i32
    %c0_i32_1 = arith.constant 0 : i32
    return %c0_i32, %c0_i32_0 : i32, i32
  }
  func.func @transform_5(%arg0: i32) -> (i32, i32) {
    %c0_i32 = arith.constant 0 : i32
    %c0_i32_0 = arith.constant 0 : i32
    %c0_i32_1 = arith.constant 0 : i32
    return %c0_i32, %c0_i32_0 : i32, i32
  }
  func.func @transform_6(%arg0: i32) -> (i32, i32) {
    %c0_i32 = arith.constant 0 : i32
    %c0_i32_0 = arith.constant 0 : i32
    %c0_i32_1 = arith.constant 0 : i32
    return %c0_i32, %c0_i32_0 : i32, i32
  }
  func.func @transform_7(%arg0: i32) -> (i32, i32) {
    %c0_i32 = arith.constant 0 : i32
    %c0_i32_0 = arith.constant 0 : i32
    %c0_i32_1 = arith.constant 0 : i32
    return %c0_i32, %c0_i32_0 : i32, i32
  }
  func.func @transform_8(%arg0: i32) -> (i32, i32) {
    %c0_i32 = arith.constant 0 : i32
    %c0_i32_0 = arith.constant 0 : i32
    %c0_i32_1 = arith.constant 0 : i32
    return %c0_i32, %c0_i32_0 : i32, i32
  }
  func.func @transform_9(%arg0: i32) -> (i32, i32) {
    %c0_i32 = arith.constant 0 : i32
    %c0_i32_0 = arith.constant 0 : i32
    %c0_i32_1 = arith.constant 0 : i32
    return %c0_i32, %c0_i32_0 : i32, i32
  }
}

</mosaic_0001>

<llo_original>
// kernel: tpu_custom_call.1
$region0: #{tpu_custom_call.1}
  #allocation0 [shape = 'u32[]', space=smem, size = 0x4, offset = 0x4, fixed_abs, tag = 'smem constant byte address 0x4 - core index']
  #allocation1 [shape = 'u32[144,128]{1,0:T(1,128)}', space=vmem, size = 0x12000, scoped, tag = 'internal scratch']
  %s0 = inlined_call_operand.vmem [shape: s32[4,1], index: 0, kind: input, shape index: {}]
  %s1 = inlined_call_operand.vmem [shape: f32[32,32], index: 1, kind: input, shape index: {}]
  %s2 = inlined_call_operand.vmem [shape: f32[32,192], index: 2, kind: input, shape index: {}]
  %s3 = inlined_call_operand.vmem [shape: f32[1,192], index: 3, kind: input, shape index: {}]
  %s4 = inlined_call_operand.hbm [shape: f32[64,192], index: 4, kind: input, shape index: {}]
  %s5 = inlined_call_operand.vmem [shape: f32[1,192], index: 5, kind: input, shape index: {}]
  %s6 = inlined_call_operand.vmem [shape: f32[64,32], index: 6, kind: input, shape index: {}]
  %s7 = inlined_call_operand.vmem [shape: f32[1,32], index: 7, kind: input, shape index: {}]
  %s8 = inlined_call_operand.hbm [shape: f32[32,64], index: 8, kind: output, shape index: {0}]
  %s9 = inlined_call_operand.hbm [shape: f32[4,32], index: 9, kind: output, shape index: {1}]
  %10 = xla_tuple %s8, %s9
  %s11 = sld [smem:[#allocation0]]
  $region54: #{tpu_custom_call.1} parent=0
    _
  %s13 = ssub.s32 1, %s11
  %s14 = scalar_select 0, %s13, %s11
  $region1: #{tpu_custom_call.1} parent=0
    #allocation2 [shape = 'u8[65536]{0}', space=vmem, size = 0x10000, scoped, tag = 'input window, operand 4, single buffered']
    #allocation3 [shape = 's32[1]{0}', space=sflag, size = 0x4, scoped, tag = 'scoped memory for tpu_custom_call.1']
    #allocation4 [shape = 's32[1]{0}', space=sflag, size = 0x4, scoped, tag = 'scoped memory for tpu_custom_call.1']
    #allocation5 [shape = 'u8[16384]{0}', space=vmem, size = 0x4000, scoped, tag = 'output window, operand 0, single buffered']
    #allocation6 [shape = 'u8[2048]{0}', space=vmem, size = 0x800, scoped, tag = 'output window, operand 1, single buffered']
    #allocation7 [shape = 's32[1]{0}', space=sflag, size = 0x4, scoped, tag = 'scoped memory for tpu_custom_call.1']
    %15 = vsyncpa [#allocation3], 0
    %16 = vsyncpa [#allocation4], 0
    %17 = vsyncpa [#allocation7], 0
    // Predicated region
    $region2: #{tpu_custom_call.1} parent=1 // pred_check
      _
    $region3: #{tpu_custom_call.1} parent=1 // pred_check_branch
      %19 = sbr.rel (0) target = $region5
    $region4: #{tpu_custom_call.1} parent=1 // pred_region
      _
    $region5: #{tpu_custom_call.1} parent=1 // pred_fallthru
      _
    // Predicated region
    $region6: #{tpu_custom_call.1} parent=1 // pred_check
      _
    $region7: #{tpu_custom_call.1} parent=1 // pred_check_branch
      %21 = sbr.rel (0) target = $region9
    $region8: #{tpu_custom_call.1} parent=1 // pred_region
      _
    $region9: #{tpu_custom_call.1} parent=1 // pred_fallthru
      _
    // Predicated region
    $region10: #{tpu_custom_call.1} parent=1 // pred_check
      _
    $region11: #{tpu_custom_call.1} parent=1 // pred_check_branch
      %23 = sbr.rel (0) target = $region13
    $region12: #{tpu_custom_call.1} parent=1 // pred_region
      _
    $region13: #{tpu_custom_call.1} parent=1 // pred_fallthru
      _
    // Predicated region
    $region14: #{tpu_custom_call.1} parent=1 // pred_check
      _
    $region15: #{tpu_custom_call.1} parent=1 // pred_check_branch
      %25 = sbr.rel (0) target = $region17
    $region16: #{tpu_custom_call.1} parent=1 // pred_region
      _
    $region17: #{tpu_custom_call.1} parent=1 // pred_fallthru
      _
    // Predicated region
    $region18: #{tpu_custom_call.1} parent=1 // pred_check
      _
    $region19: #{tpu_custom_call.1} parent=1 // pred_check_branch
      %27 = sbr.rel (0) target = $region21
    $region20: #{tpu_custom_call.1} parent=1 // pred_region
      %s29 = ssub.s32 2048, 2048
      %30 = vsyncadd [#allocation3], %s29
      %s31 = sshll.u32 [#allocation2], 4
      %s32 = int_to_ptr.vmem [resolvable:$true] %s31
      %37 = dma.hbm_to_vmem [thread:$0]  %s4, 2048, %s32, [#allocation3], 256, 256, 16
    $region21: #{tpu_custom_call.1} parent=1 // pred_fallthru
      _
    // Predicated region
    $region22: #{tpu_custom_call.1} parent=1 // pred_check
      _
    $region23: #{tpu_custom_call.1} parent=1 // pred_check_branch
      %39 = sbr.rel (0) target = $region25
    $region24: #{tpu_custom_call.1} parent=1 // pred_region
      _
    $region25: #{tpu_custom_call.1} parent=1 // pred_fallthru
      _
    // Predicated region
    $region26: #{tpu_custom_call.1} parent=1 // pred_check
      _
    $region27: #{tpu_custom_call.1} parent=1 // pred_check_branch
      %41 = sbr.rel (0) target = $region29
    $region28: #{tpu_custom_call.1} parent=1 // pred_region
      _
    $region29: #{tpu_custom_call.1} parent=1 // pred_fallthru
      _
    // Predicated region
    $region30: #{tpu_custom_call.1} parent=1 // pred_check
      _
    $region31: #{tpu_custom_call.1} parent=1 // pred_check_branch
      %43 = sbr.rel (0) target = $region33
    $region32: #{tpu_custom_call.1} parent=1 // pred_region
      _
    $region33: #{tpu_custom_call.1} parent=1 // pred_fallthru
      _
    // Predicated region
    $region34: #{tpu_custom_call.1} parent=1 // pred_check
      _
    $region35: #{tpu_custom_call.1} parent=1 // pred_check_branch
      %45 = sbr.rel (0) target = $region37
    $region36: #{tpu_custom_call.1} parent=1 // pred_region
      %46 = dma.done [#allocation3], 2048
    $region37: #{tpu_custom_call.1} parent=1 // pred_fallthru
      _
    %v47 = vld [vmem:[%s0] sm:$0xf]
    %v48 = vld [vmem:[%s1] sm:$0xff]
    %v49 = vld [vmem:[%s1 + $0x8] sm:$0xff]
    %v50 = vld [vmem:[%s1 + $0x10] sm:$0xff]
    %v51 = vld [vmem:[%s1 + $0x18] sm:$0xff]
    %v52 = vld [vmem:[%s2] sm:$0xff]
    %v53 = vld [vmem:[%s2 + $0x8] sm:$0xff]
    %v54 = vld [vmem:[%s2 + $0x10] sm:$0xff]
    %v55 = vld [vmem:[%s2 + $0x18] sm:$0xff]
    %v56 = vld [vmem:[%s2 + $0x20] sm:$0xff]
    %v57 = vld [vmem:[%s2 + $0x28] sm:$0xff]
    %v58 = vld [vmem:[%s2 + $0x30] sm:$0xff]
    %v59 = vld [vmem:[%s2 + $0x38] sm:$0xff]
    %v60 = vld [vmem:[%s3] sm:$0x3]
    %v62 = vlaneseq
    %v63 = vshrl.u32 %v62, 7
    %v64 = vsub.s32 0, %v63
    %v65 = vrot.slane %v60, %v64
    %v66 = vlaneseq
    %v67 = vshrl.u32 %v66, 7
    %v68 = vsub.s32 1, %v67
    %v69 = vrot.slane %v60, %v68
    %vm72 = vcmask 261120
    %v74 = vsel %vm72, %v48, 0
    %v77 = vsel %vm72, %v49, 0
    %v80 = vsel %vm72, %v50, 0
    %v83 = vsel %vm72, %v51, 0
    %85 = vmatprep.subr.mxu0 %v53
    %86 = vmatpush1.msra.mxu0 %v52
    %87 = vmatprep.subr.mxu0 %v55
    %88 = vmatpush1.msra.mxu0 %v54
    %89 = vmatprep.subr.mxu0 %v57
    %90 = vmatpush1.msra.mxu0 %v56
    %91 = vmatprep.subr.mxu0 %v59
    %92 = vmatpush1.msra.mxu0 %v58
    %93 = vmatprep.subr.mxu0 0.0
    %94 = vmatpush1.msra.mxu0 0.0
    %95 = vmatprep.subr.mxu0 0.0
    %96 = vmatpush1.msra.mxu0 0.0
    %97 = vmatprep.subr.mxu0 0.0
    %98 = vmatpush1.msra.mxu0 0.0
    %99 = vmatprep.subr.mxu0 0.0
    %100 = vmatpush1.msra.mxu0 0.0
    %101 = vmatprep.subr.mxu0 0.0
    %102 = vmatpush1.msra.mxu0 0.0
    %103 = vmatprep.subr.mxu0 0.0
    %104 = vmatpush1.msra.mxu0 0.0
    %105 = vmatprep.subr.mxu0 0.0
    %106 = vmatpush1.msra.mxu0 0.0
    %107 = vmatprep.subr.mxu0 0.0
    %108 = vmatpush1.msra.mxu0 0.0
    %109 = vmatprep.subr.mxu0 0.0
    %110 = vmatpush1.msra.mxu0 0.0
    %111 = vmatprep.subr.mxu0 0.0
    %112 = vmatpush1.msra.mxu0 0.0
    %113 = vmatprep.subr.mxu0 0.0
    %114 = vmatpush1.msra.mxu0 0.0
    %115 = vmatprep.subr.mxu0 0.0
    %116 = vmatpush1.msra.mxu0 0.0
    %117 = vmatprep.subr.mxu0 0.0
    %118 = vmatpush1.msra.mxu0 0.0
    %119 = vmatprep.subr.mxu0 0.0
    %120 = vmatpush1.msra.mxu0 0.0
    %121 = vmatprep.subr.mxu0 0.0
    %122 = vmatpush1.msra.mxu0 0.0
    %123 = vmatprep.subr.mxu0 0.0
    %124 = vmatpush1.msra.mxu0 0.0
    %125 = vmatprep.subr.mxu0 0.0
    %126 = vmatpush1.msra.mxu0 0.0
    %127 = vmatprep.subr.mxu0 0.0
    %128 = vmatpush1.msra.mxu0 0.0
    %129 = vmatprep.subr.mxu0 0.0
    %130 = vmatpush1.msra.mxu0 0.0
    %131 = vmatprep.subr.mxu0 0.0
    %132 = vmatpush1.msra.mxu0 0.0
    %133 = vmatprep.subr.mxu0 0.0
    %134 = vmatpush1.msra.mxu0 0.0
    %135 = vmatprep.subr.mxu0 0.0
    %136 = vmatpush1.msra.mxu0 0.0
    %137 = vmatprep.subr.mxu0 0.0
    %138 = vmatpush1.msra.mxu0 0.0
    %139 = vmatprep.subr.mxu0 0.0
    %140 = vmatpush1.msra.mxu0 0.0
    %141 = vmatprep.subr.mxu0 0.0
    %142 = vmatpush1.msra.mxu0 0.0
    %143 = vmatprep.subr.mxu0 0.0
    %144 = vmatpush1.msra.mxu0 0.0
    %145 = vmatprep.subr.mxu0 0.0
    %146 = vmatpush1.msra.mxu0 0.0
    %147 = vmatprep.subr.mxu0 0.0
    %148 = vmatpush1.msra.mxu0 0.0
    %149 = vmatprep.mubr.f32.mxu0 0.0
    %150 = vmatmul.mubr.f32.gmra.mrb[0].mxu0 %v74
    %v151 = vpop.f32.mrb[0].mxu0
    %v152 = vadd.f32 %v65, %v151
    %v153 = vpop.f32.mrb[0].mxu0
    %v154 = vadd.f32 %v69, %v153
    %155 = vmatprep.mubr.f32.mxu0 0.0
    %156 = vmatmul.mubr.f32.gmra.mrb[0].mxu0 %v77
    %v157 = vpop.f32.mrb[0].mxu0
    %v158 = vadd.f32 %v65, %v157
    %v159 = vpop.f32.mrb[0].mxu0
    %v160 = vadd.f32 %v69, %v159
    %161 = vmatprep.mubr.f32.mxu0 0.0
    %162 = vmatmul.mubr.f32.gmra.mrb[0].mxu0 %v80
    %v163 = vpop.f32.mrb[0].mxu0
    %v164 = vadd.f32 %v65, %v163
    %v165 = vpop.f32.mrb[0].mxu0
    %v166 = vadd.f32 %v69, %v165
    %167 = vmatprep.mubr.f32.mxu0 0.0
    %168 = vmatmul.mubr.f32.gmra.mrb[0].mxu0 %v83
    %v169 = vpop.f32.mrb[0].mxu0
    %v170 = vadd.f32 %v65, %v169
    %v171 = vpop.f32.mrb[0].mxu0
    %v172 = vadd.f32 %v69, %v171
    %173 = vdwg.mxu0
    %v174 = vld [vmem:[#allocation2] sm:$0xff]
    %v175 = vld [vmem:[#allocation2 + $0x8] sm:$0xff]
    %v176 = vld [vmem:[#allocation2 + $0x10] sm:$0xff]
    %v177 = vld [vmem:[#allocation2 + $0x18] sm:$0xff]
    %v178 = vld [vmem:[#allocation2 + $0x20] sm:$0xff]
    %v179 = vld [vmem:[#allocation2 + $0x28] sm:$0xff]
    %v180 = vld [vmem:[#allocation2 + $0x30] sm:$0xff]
    %v181 = vld [vmem:[#allocation2 + $0x38] sm:$0xff]
    %v182 = vld [vmem:[#allocation2 + $0x40] sm:$0xff]
    %v183 = vld [vmem:[#allocation2 + $0x48] sm:$0xff]
    %v184 = vld [vmem:[#allocation2 + $0x50] sm:$0xff]
    %v185 = vld [vmem:[#allocation2 + $0x58] sm:$0xff]
    %v186 = vld [vmem:[#allocation2 + $0x60] sm:$0xff]
    %v187 = vld [vmem:[#allocation2 + $0x68] sm:$0xff]
    %v188 = vld [vmem:[#allocation2 + $0x70] sm:$0xff]
    %v189 = vld [vmem:[#allocation2 + $0x78] sm:$0xff]
    %v190 = vld [vmem:[%s5] sm:$0x3]
    %v192 = vlaneseq
    %v193 = vshrl.u32 %v192, 7
    %v194 = vsub.s32 0, %v193
    %v195 = vrot.slane %v190, %v194
    %v196 = vlaneseq
    %v197 = vshrl.u32 %v196, 7
    %v198 = vsub.s32 1, %v197
    %v199 = vrot.slane %v190, %v198
    %vm202 = vcmask 523264
    %v204 = vsel %vm202, 0.0, 0
    %206 = vmatprep.subr.mxu0 %v175
    %207 = vmatpush1.msra.mxu0 %v174
    %208 = vmatprep.subr.mxu0 %v177
    %209 = vmatpush1.msra.mxu0 %v176
    %210 = vmatprep.subr.mxu0 %v179
    %211 = vmatpush1.msra.mxu0 %v178
    %212 = vmatprep.subr.mxu0 %v181
    %213 = vmatpush1.msra.mxu0 %v180
    %214 = vmatprep.subr.mxu0 %v183
    %215 = vmatpush1.msra.mxu0 %v182
    %216 = vmatprep.subr.mxu0 %v185
    %217 = vmatpush1.msra.mxu0 %v184
    %218 = vmatprep.subr.mxu0 %v187
    %219 = vmatpush1.msra.mxu0 %v186
    %220 = vmatprep.subr.mxu0 %v189
    %221 = vmatpush1.msra.mxu0 %v188
    %222 = vmatprep.subr.mxu0 0.0
    %223 = vmatpush1.msra.mxu0 0.0
    %224 = vmatprep.subr.mxu0 0.0
    %225 = vmatpush1.msra.mxu0 0.0
    %226 = vmatprep.subr.mxu0 0.0
    %227 = vmatpush1.msra.mxu0 0.0
    %228 = vmatprep.subr.mxu0 0.0
    %229 = vmatpush1.msra.mxu0 0.0
    %230 = vmatprep.subr.mxu0 0.0
    %231 = vmatpush1.msra.mxu0 0.0
    %232 = vmatprep.subr.mxu0 0.0
    %233 = vmatpush1.msra.mxu0 0.0
    %234 = vmatprep.subr.mxu0 0.0
    %235 = vmatpush1.msra.mxu0 0.0
    %236 = vmatprep.subr.mxu0 0.0
    %237 = vmatpush1.msra.mxu0 0.0
    %238 = vmatprep.subr.mxu0 0.0
    %239 = vmatpush1.msra.mxu0 0.0
    %240 = vmatprep.subr.mxu0 0.0
    %241 = vmatpush1.msra.mxu0 0.0
    %242 = vmatprep.subr.mxu0 0.0
    %243 = vmatpush1.msra.mxu0 0.0
    %244 = vmatprep.subr.mxu0 0.0
    %245 = vmatpush1.msra.mxu0 0.0
    %246 = vmatprep.subr.mxu0 0.0
    %247 = vmatpush1.msra.mxu0 0.0
    %248 = vmatprep.subr.mxu0 0.0
    %249 = vmatpush1.msra.mxu0 0.0
    %250 = vmatprep.subr.mxu0 0.0
    %251 = vmatpush1.msra.mxu0 0.0
    %252 = vmatprep.subr.mxu0 0.0
    %253 = vmatpush1.msra.mxu0 0.0
    %254 = vmatprep.subr.mxu0 0.0
    %255 = vmatpush1.msra.mxu0 0.0
    %256 = vmatprep.subr.mxu0 0.0
    %257 = vmatpush1.msra.mxu0 0.0
    %258 = vmatprep.subr.mxu0 0.0
    %259 = vmatpush1.msra.mxu0 0.0
    %260 = vmatprep.subr.mxu0 0.0
    %261 = vmatpush1.msra.mxu0 0.0
    %262 = vmatprep.subr.mxu0 0.0
    %263 = vmatpush1.msra.mxu0 0.0
    %264 = vmatprep.subr.mxu0 0.0
    %265 = vmatpush1.msra.mxu0 0.0
    %266 = vmatprep.subr.mxu0 0.0
    %267 = vmatpush1.msra.mxu0 0.0
    %268 = vmatprep.subr.mxu0 0.0
    %269 = vmatpush1.msra.mxu0 0.0
    %270 = vmatprep.mubr.f32.mxu0 0.0
    %271 = vmatmul.mubr.f32.gmra.mrb[0].mxu0 %v204
    %v272 = vpop.f32.mrb[0].mxu0
    %v273 = vadd.f32 %v195, %v272
    %v274 = vpop.f32.mrb[0].mxu0
    %v275 = vadd.f32 %v199, %v274
    %276 = vdwg.mxu0
    %v277 = vadd.f32 %v152, %v273
    %v278 = vsub.f32 0.0, %v277
    %v279 = vmul.f32 %v278, 1.442695
    %v280 = vpow.pop %v279
    %v281 = vadd.f32 %v280, 1.0
    %v282 = vrcp.pop %v281
    %v283 = vmul.f32 1.0, %v282
    %285 = vrot.lane.b32.xlu0 %v273, 64
    %v286 = vpop.permute.xlu0 %285
    %v288 = vmul.f32 %v283, %v286
    %290 = vrot.lane.b32.xlu0 %v288, 64
    %v291 = vpop.permute.xlu0 %290
    %v293 = vadd.f32 %v152, %v291
    %v294 = vtanh.pop %v293
    %v295 = vsub.f32 1.0, %v283
    %297 = vrot.lane.b32.xlu0 %v294, 96
    %v298 = vpop.permute.xlu0 %297
    %v300 = vmul.f32 %v295, %v298
    %v301 = vmul.f32 %v283, 0.0
    %v302 = vadd.f32 %v300, %v301
    %v303 = vrot.slane %v273, 4
    %v305 = vadd.f32 %v170, %v303
    %v306 = vsub.f32 0.0, %v305
    %v307 = vmul.f32 %v306, 1.442695
    %v308 = vpow.pop %v307
    %v309 = vadd.f32 %v308, 1.0
    %v310 = vrcp.pop %v309
    %v311 = vmul.f32 1.0, %v310
    %v313 = vrot.slane %v275, 4
    %v315 = vadd.f32 %v172, %v313
    %v316 = vsub.f32 0.0, %v315
    %v317 = vmul.f32 %v316, 1.442695
    %v318 = vpow.pop %v317
    %v319 = vadd.f32 %v318, 1.0
    %v320 = vrcp.pop %v319
    %v321 = vmul.f32 1.0, %v320
    %322 = vrot.lane.b32.xlu0 %v313, 64
    %v323 = vpop.permute.xlu0 %322
    %v325 = vmul.f32 %v311, %v323
    %327 = vrot.lane.b32.xlu0 %v325, 64
    %v328 = vpop.permute.xlu0 %327
    %v330 = vadd.f32 %v172, %v328
    %v331 = vtanh.pop %v330
    %v332 = vsub.f32 1.0, %v321
    %334 = vrot.lane.b32.xlu0 %v331, 96
    %v335 = vpop.permute.xlu0 %334
    %v337 = vmul.f32 %v332, %v335
    %v338 = vmul.f32 %v321, 0.0
    %v339 = vadd.f32 %v337, %v338
    %vm340 = vcmp.gt.s32.totalorder %v47, 0
    %vm341 = vcmp.gt.s32.totalorder %v47, 7
    %v342 = vsel %vm340, 1, 0
    %343 = vset.pattern.permute.xlu0 0
    %344 = vperm.xlu0 %343, %v342
    %v345 = vpop.permute.xlu0 %344
    %vm346 = vcmp.eq.s32.totalorder %v345, 1
    %v347 = vsel %vm346, %v302, 0.0
    %v348 = vsel %vm341, 1, 0
    %349 = vset.pattern.permute.xlu0 0
    %350 = vperm.xlu0 %349, %v348
    %v351 = vpop.permute.xlu0 %350
    %vm352 = vcmp.eq.s32.totalorder %v351, 1
    %v354 = vrot.slane %v339, 4
    %v356 = vsel %vm352, %v354, 0.0
    %358 = vrot.lane.b32.xlu0 %v347, 96
    %v359 = vpop.permute.xlu0 %358
    %vm361 = vcmask 257024
    %362 = vst.msk [vmem:[#allocation5] sm:$0xf] %vm361, %v359
    %364 = vrot.lane.b32.xlu0 %v356, 32
    %v365 = vpop.permute.xlu0 %364
    %vm367 = vcmask 519424
    %368 = vst.msk [vmem:[#allocation5 + $0x1c] sm:$0xf] %vm367, %v365
    %v369 = vsel %vm72, %v359, %v365
    %v370 = vld [vmem:[#allocation2] sm:$0xff]
    %v371 = vld [vmem:[#allocation2 + $0x8] sm:$0xff]
    %v372 = vld [vmem:[#allocation2 + $0x10] sm:$0xff]
    %v373 = vld [vmem:[#allocation2 + $0x18] sm:$0xff]
    %v374 = vld [vmem:[#allocation2 + $0x20] sm:$0xff]
    %v375 = vld [vmem:[#allocation2 + $0x28] sm:$0xff]
    %v376 = vld [vmem:[#allocation2 + $0x30] sm:$0xff]
    %v377 = vld [vmem:[#allocation2 + $0x38] sm:$0xff]
    %v378 = vld [vmem:[#allocation2 + $0x40] sm:$0xff]
    %v379 = vld [vmem:[#allocation2 + $0x48] sm:$0xff]
    %v380 = vld [vmem:[#allocation2 + $0x50] sm:$0xff]
    %v381 = vld [vmem:[#allocation2 + $0x58] sm:$0xff]
    %v382 = vld [vmem:[#allocation2 + $0x60] sm:$0xff]
    %v383 = vld [vmem:[#allocation2 + $0x68] sm:$0xff]
    %v384 = vld [vmem:[#allocation2 + $0x70] sm:$0xff]
    %v385 = vld [vmem:[#allocation2 + $0x78] sm:$0xff]
    %v386 = vld [vmem:[%s5] sm:$0x3]
    %v388 = vlaneseq
    %v389 = vshrl.u32 %v388, 7
    %v390 = vsub.s32 0, %v389
    %v391 = vrot.slane %v386, %v390
    %v392 = vlaneseq
    %v393 = vshrl.u32 %v392, 7
    %v394 = vsub.s32 1, %v393
    %v395 = vrot.slane %v386, %v394
    %v399 = vsel %vm202, %v369, 0
    %401 = vmatprep.subr.mxu0 %v371
    %402 = vmatpush1.msra.mxu0 %v370
    %403 = vmatprep.subr.mxu0 %v373
    %404 = vmatpush1.msra.mxu0 %v372
    %405 = vmatprep.subr.mxu0 %v375
    %406 = vmatpush1.msra.mxu0 %v374
    %407 = vmatprep.subr.mxu0 %v377
    %408 = vmatpush1.msra.mxu0 %v376
    %409 = vmatprep.subr.mxu0 %v379
    %410 = vmatpush1.msra.mxu0 %v378
    %411 = vmatprep.subr.mxu0 %v381
    %412 = vmatpush1.msra.mxu0 %v380
    %413 = vmatprep.subr.mxu0 %v383
    %414 = vmatpush1.msra.mxu0 %v382
    %415 = vmatprep.subr.mxu0 %v385
    %416 = vmatpush1.msra.mxu0 %v384
    %417 = vmatprep.subr.mxu0 0.0
    %418 = vmatpush1.msra.mxu0 0.0
    %419 = vmatprep.subr.mxu0 0.0
    %420 = vmatpush1.msra.mxu0 0.0
    %421 = vmatprep.subr.mxu0 0.0
    %422 = vmatpush1.msra.mxu0 0.0
    %423 = vmatprep.subr.mxu0 0.0
    %424 = vmatpush1.msra.mxu0 0.0
    %425 = vmatprep.subr.mxu0 0.0
    %426 = vmatpush1.msra.mxu0 0.0
    %427 = vmatprep.subr.mxu0 0.0
    %428 = vmatpush1.msra.mxu0 0.0
    %429 = vmatprep.subr.mxu0 0.0
    %430 = vmatpush1.msra.mxu0 0.0
    %431 = vmatprep.subr.mxu0 0.0
    %432 = vmatpush1.msra.mxu0 0.0
    %433 = vmatprep.subr.mxu0 0.0
    %434 = vmatpush1.msra.mxu0 0.0
    %435 = vmatprep.subr.mxu0 0.0
    %436 = vmatpush1.msra.mxu0 0.0
    %437 = vmatprep.subr.mxu0 0.0
    %438 = vmatpush1.msra.mxu0 0.0
    %439 = vmatprep.subr.mxu0 0.0
    %440 = vmatpush1.msra.mxu0 0.0
    %441 = vmatprep.subr.mxu0 0.0
    %442 = vmatpush1.msra.mxu0 0.0
    %443 = vmatprep.subr.mxu0 0.0
    %444 = vmatpush1.msra.mxu0 0.0
    %445 = vmatprep.subr.mxu0 0.0
    %446 = vmatpush1.msra.mxu0 0.0
    %447 = vmatprep.subr.mxu0 0.0
    %448 = vmatpush1.msra.mxu0 0.0
    %449 = vmatprep.subr.mxu0 0.0
    %450 = vmatpush1.msra.mxu0 0.0
    %451 = vmatprep.subr.mxu0 0.0
    %452 = vmatpush1.msra.mxu0 0.0
    %453 = vmatprep.subr.mxu0 0.0
    %454 = vmatpush1.msra.mxu0 0.0
    %455 = vmatprep.subr.mxu0 0.0
    %456 = vmatpush1.msra.mxu0 0.0
    %457 = vmatprep.subr.mxu0 0.0
    %458 = vmatpush1.msra.mxu0 0.0
    %459 = vmatprep.subr.mxu0 0.0
    %460 = vmatpush1.msra.mxu0 0.0
    %461 = vmatprep.subr.mxu0 0.0
    %462 = vmatpush1.msra.mxu0 0.0
    %463 = vmatprep.subr.mxu0 0.0
    %464 = vmatpush1.msra.mxu0 0.0
    %465 = vmatprep.mubr.f32.mxu0 0.0
    %466 = vmatmul.mubr.f32.gmra.mrb[0].mxu0 %v399
    %v467 = vpop.f32.mrb[0].mxu0
    %v468 = vadd.f32 %v391, %v467
    %v469 = vpop.f32.mrb[0].mxu0
    %v470 = vadd.f32 %v395, %v469
    %471 = vdwg.mxu0
    %v473 = vrot.slane %v468, 4
    %v475 = vadd.f32 %v152, %v473
    %v476 = vsub.f32 0.0, %v475
    %v477 = vmul.f32 %v476, 1.442695
    %v478 = vpow.pop %v477
    %v479 = vadd.f32 %v478, 1.0
    %v480 = vrcp.pop %v479
    %v481 = vmul.f32 1.0, %v480
    %482 = vrot.lane.b32.xlu0 %v473, 64
    %v483 = vpop.permute.xlu0 %482
    %v485 = vmul.f32 %v481, %v483
    %487 = vrot.lane.b32.xlu0 %v485, 64
    %v488 = vpop.permute.xlu0 %487
    %v490 = vadd.f32 %v152, %v488
    %v491 = vtanh.pop %v490
    %v492 = vsub.f32 1.0, %v481
    %494 = vrot.lane.b32.xlu0 %v491, 96
    %v495 = vpop.permute.xlu0 %494
    %v497 = vmul.f32 %v492, %v495
    %v498 = vrot.slane %v347, 4
    %v500 = vmul.f32 %v481, %v498
    %v501 = vadd.f32 %v497, %v500
    %v502 = vadd.f32 %v170, %v468
    %v503 = vsub.f32 0.0, %v502
    %v504 = vmul.f32 %v503, 1.442695
    %v505 = vpow.pop %v504
    %v506 = vadd.f32 %v505, 1.0
    %v507 = vrcp.pop %v506
    %v508 = vmul.f32 1.0, %v507
    %v509 = vadd.f32 %v172, %v470
    %v510 = vsub.f32 0.0, %v509
    %v511 = vmul.f32 %v510, 1.442695
    %v512 = vpow.pop %v511
    %v513 = vadd.f32 %v512, 1.0
    %v514 = vrcp.pop %v513
    %v515 = vmul.f32 1.0, %v514
    %517 = vrot.lane.b32.xlu0 %v470, 64
    %v518 = vpop.permute.xlu0 %517
    %v520 = vmul.f32 %v508, %v518
    %522 = vrot.lane.b32.xlu0 %v520, 64
    %v523 = vpop.permute.xlu0 %522
    %v525 = vadd.f32 %v172, %v523
    %v526 = vtanh.pop %v525
    %v527 = vsub.f32 1.0, %v515
    %529 = vrot.lane.b32.xlu0 %v526, 96
    %v530 = vpop.permute.xlu0 %529
    %v532 = vmul.f32 %v527, %v530
    %v533 = vmul.f32 %v515, %v356
    %v534 = vadd.f32 %v532, %v533
    %vm535 = vcmp.gt.s32.totalorder %v47, 1
    %vm536 = vcmp.gt.s32.totalorder %v47, 6
    %v537 = vsel %vm535, 1, 0
    %538 = vset.pattern.permute.xlu0 0
    %539 = vperm.xlu0 %538, %v537
    %v540 = vpop.permute.xlu0 %539
    %vm541 = vcmp.eq.s32.totalorder %v540, 1
    %v543 = vrot.slane %v501, 4
    %544 = vrot.lane.b32.xlu0 %v543, 96
    %v545 = vpop.permute.xlu0 %544
    %v547 = vsel %vm541, %v545, %v359
    %v548 = vsel %vm536, 1, 0
    %549 = vset.pattern.permute.xlu0 0
    %550 = vperm.xlu0 %549, %v548
    %v551 = vpop.permute.xlu0 %550
    %vm552 = vcmp.eq.s32.totalorder %v551, 1
    %v553 = vsel %vm552, %v534, %v356
    %v554 = vsel %vm541, %v545, 0.0
    %555 = vst.msk [vmem:[#allocation5 + $0x4] sm:$0xf] %vm361, %v554
    %v556 = vsel %vm552, %v534, 0.0
    %558 = vrot.lane.b32.xlu0 %v556, 32
    %v559 = vpop.permute.xlu0 %558
    %561 = vst.msk [vmem:[#allocation5 + $0x18] sm:$0xf] %vm367, %v559
    %563 = vrot.lane.b32.xlu0 %v553, 32
    %v564 = vpop.permute.xlu0 %563
    %v566 = vsel %vm72, %v547, %v564
    %v567 = vld [vmem:[#allocation2] sm:$0xff]
    %v568 = vld [vmem:[#allocation2 + $0x8] sm:$0xff]
    %v569 = vld [vmem:[#allocation2 + $0x10] sm:$0xff]
    %v570 = vld [vmem:[#allocation2 + $0x18] sm:$0xff]
    %v571 = vld [vmem:[#allocation2 + $0x20] sm:$0xff]
    %v572 = vld [vmem:[#allocation2 + $0x28] sm:$0xff]
    %v573 = vld [vmem:[#allocation2 + $0x30] sm:$0xff]
    %v574 = vld [vmem:[#allocation2 + $0x38] sm:$0xff]
    %v575 = vld [vmem:[#allocation2 + $0x40] sm:$0xff]
    %v576 = vld [vmem:[#allocation2 + $0x48] sm:$0xff]
    %v577 = vld [vmem:[#allocation2 + $0x50] sm:$0xff]
    %v578 = vld [vmem:[#allocation2 + $0x58] sm:$0xff]
    %v579 = vld [vmem:[#allocation2 + $0x60] sm:$0xff]
    %v580 = vld [vmem:[#allocation2 + $0x68] sm:$0xff]
    %v581 = vld [vmem:[#allocation2 + $0x70] sm:$0xff]
    %v582 = vld [vmem:[#allocation2 + $0x78] sm:$0xff]
    %v583 = vld [vmem:[%s5] sm:$0x3]
    %v585 = vlaneseq
    %v586 = vshrl.u32 %v585, 7
    %v587 = vsub.s32 0, %v586
    %v588 = vrot.slane %v583, %v587
    %v589 = vlaneseq
    %v590 = vshrl.u32 %v589, 7
    %v591 = vsub.s32 1, %v590
    %v592 = vrot.slane %v583, %v591
    %v596 = vsel %vm202, %v566, 0
    %598 = vmatprep.subr.mxu0 %v568
    %599 = vmatpush1.msra.mxu0 %v567
    %600 = vmatprep.subr.mxu0 %v570
    %601 = vmatpush1.msra.mxu0 %v569
    %602 = vmatprep.subr.mxu0 %v572
    %603 = vmatpush1.msra.mxu0 %v571
    %604 = vmatprep.subr.mxu0 %v574
    %605 = vmatpush1.msra.mxu0 %v573
    %606 = vmatprep.subr.mxu0 %v576
    %607 = vmatpush1.msra.mxu0 %v575
    %608 = vmatprep.subr.mxu0 %v578
    %609 = vmatpush1.msra.mxu0 %v577
    %610 = vmatprep.subr.mxu0 %v580
    %611 = vmatpush1.msra.mxu0 %v579
    %612 = vmatprep.subr.mxu0 %v582
    %613 = vmatpush1.msra.mxu0 %v581
    %614 = vmatprep.subr.mxu0 0.0
    %615 = vmatpush1.msra.mxu0 0.0
    %616 = vmatprep.subr.mxu0 0.0
    %617 = vmatpush1.msra.mxu0 0.0
    %618 = vmatprep.subr.mxu0 0.0
    %619 = vmatpush1.msra.mxu0 0.0
    %620 = vmatprep.subr.mxu0 0.0
    %621 = vmatpush1.msra.mxu0 0.0
    %622 = vmatprep.subr.mxu0 0.0
    %623 = vmatpush1.msra.mxu0 0.0
    %624 = vmatprep.subr.mxu0 0.0
    %625 = vmatpush1.msra.mxu0 0.0
    %626 = vmatprep.subr.mxu0 0.0
    %627 = vmatpush1.msra.mxu0 0.0
    %628 = vmatprep.subr.mxu0 0.0
    %629 = vmatpush1.msra.mxu0 0.0
    %630 = vmatprep.subr.mxu0 0.0
    %631 = vmatpush1.msra.mxu0 0.0
    %632 = vmatprep.subr.mxu0 0.0
    %633 = vmatpush1.msra.mxu0 0.0
    %634 = vmatprep.subr.mxu0 0.0
    %635 = vmatpush1.msra.mxu0 0.0
    %636 = vmatprep.subr.mxu0 0.0
    %637 = vmatpush1.msra.mxu0 0.0
    %638 = vmatprep.subr.mxu0 0.0
    %639 = vmatpush1.msra.mxu0 0.0
    %640 = vmatprep.subr.mxu0 0.0
    %641 = vmatpush1.msra.mxu0 0.0
    %642 = vmatprep.subr.mxu0 0.0
    %643 = vmatpush1.msra.mxu0 0.0
    %644 = vmatprep.subr.mxu0 0.0
    %645 = vmatpush1.msra.mxu0 0.0
    %646 = vmatprep.subr.mxu0 0.0
    %647 = vmatpush1.msra.mxu0 0.0
    %648 = vmatprep.subr.mxu0 0.0
    %649 = vmatpush1.msra.mxu0 0.0
    %650 = vmatprep.subr.mxu0 0.0
    %651 = vmatpush1.msra.mxu0 0.0
    %652 = vmatprep.subr.mxu0 0.0
    %653 = vmatpush1.msra.mxu0 0.0
    %654 = vmatprep.subr.mxu0 0.0
    %655 = vmatpush1.msra.mxu0 0.0
    %656 = vmatprep.subr.mxu0 0.0
    %657 = vmatpush1.msra.mxu0 0.0
    %658 = vmatprep.subr.mxu0 0.0
    %659 = vmatpush1.msra.mxu0 0.0
    %660 = vmatprep.subr.mxu0 0.0
    %661 = vmatpush1.msra.mxu0 0.0
    %662 = vmatprep.mubr.f32.mxu0 0.0
    %663 = vmatmul.mubr.f32.gmra.mrb[0].mxu0 %v596
    %v664 = vpop.f32.mrb[0].mxu0
    %v665 = vadd.f32 %v588, %v664
    %v666 = vpop.f32.mrb[0].mxu0
    %v667 = vadd.f32 %v592, %v666
    %668 = vdwg.mxu0
    %v669 = vadd.f32 %v158, %v665
    %v670 = vsub.f32 0.0, %v669
    %v671 = vmul.f32 %v670, 1.442695
    %v672 = vpow.pop %v671
    %v673 = vadd.f32 %v672, 1.0
    %v674 = vrcp.pop %v673
    %v675 = vmul.f32 1.0, %v674
    %677 = vrot.lane.b32.xlu0 %v665, 64
    %v678 = vpop.permute.xlu0 %677
    %v680 = vmul.f32 %v675, %v678
    %682 = vrot.lane.b32.xlu0 %v680, 64
    %v683 = vpop.permute.xlu0 %682
    %v685 = vadd.f32 %v158, %v683
    %v686 = vtanh.pop %v685
    %v687 = vsub.f32 1.0, %v675
    %689 = vrot.lane.b32.xlu0 %v686, 96
    %v690 = vpop.permute.xlu0 %689
    %v692 = vmul.f32 %v687, %v690
    %694 = vrot.lane.b32.xlu0 %v547, 32
    %v695 = vpop.permute.xlu0 %694
    %v697 = vmul.f32 %v675, %v695
    %v698 = vadd.f32 %v692, %v697
    %v699 = vrot.slane %v665, 4
    %v701 = vadd.f32 %v164, %v699
    %v702 = vsub.f32 0.0, %v701
    %v703 = vmul.f32 %v702, 1.442695
    %v704 = vpow.pop %v703
    %v705 = vadd.f32 %v704, 1.0
    %v706 = vrcp.pop %v705
    %v707 = vmul.f32 1.0, %v706
    %v709 = vrot.slane %v667, 4
    %v711 = vadd.f32 %v166, %v709
    %v712 = vsub.f32 0.0, %v711
    %v713 = vmul.f32 %v712, 1.442695
    %v714 = vpow.pop %v713
    %v715 = vadd.f32 %v714, 1.0
    %v716 = vrcp.pop %v715
    %v717 = vmul.f32 1.0, %v716
    %718 = vrot.lane.b32.xlu0 %v709, 64
    %v719 = vpop.permute.xlu0 %718
    %v721 = vmul.f32 %v707, %v719
    %723 = vrot.lane.b32.xlu0 %v721, 64
    %v724 = vpop.permute.xlu0 %723
    %v726 = vadd.f32 %v166, %v724
    %v727 = vtanh.pop %v726
    %v728 = vsub.f32 1.0, %v717
    %730 = vrot.lane.b32.xlu0 %v727, 96
    %v731 = vpop.permute.xlu0 %730
    %v733 = vmul.f32 %v728, %v731
    %v734 = vrot.slane %v553, 4
    %v736 = vmul.f32 %v717, %v734
    %v737 = vadd.f32 %v733, %v736
    %vm738 = vcmp.gt.s32.totalorder %v47, 2
    %vm739 = vcmp.gt.s32.totalorder %v47, 5
    %v740 = vsel %vm738, 1, 0
    %741 = vset.pattern.permute.xlu0 0
    %742 = vperm.xlu0 %741, %v740
    %v743 = vpop.permute.xlu0 %742
    %vm744 = vcmp.eq.s32.totalorder %v743, 1
    %v745 = vsel %vm744, %v698, %v695
    %v746 = vsel %vm739, 1, 0
    %747 = vset.pattern.permute.xlu0 0
    %748 = vperm.xlu0 %747, %v746
    %v749 = vpop.permute.xlu0 %748
    %vm750 = vcmp.eq.s32.totalorder %v749, 1
    %v752 = vrot.slane %v737, 4
    %v754 = vsel %vm750, %v752, %v553
    %v755 = vsel %vm744, %v698, 0.0
    %757 = vrot.lane.b32.xlu0 %v755, 96
    %v758 = vpop.permute.xlu0 %757
    %760 = vst.msk [vmem:[#allocation5 + $0x8] sm:$0xf] %vm361, %v758
    %v761 = vsel %vm750, %v752, 0.0
    %763 = vrot.lane.b32.xlu0 %v761, 32
    %v764 = vpop.permute.xlu0 %763
    %766 = vst.msk [vmem:[#allocation5 + $0x14] sm:$0xf] %vm367, %v764
    %768 = vrot.lane.b32.xlu0 %v745, 96
    %v769 = vpop.permute.xlu0 %768
    %772 = vrot.lane.b32.xlu0 %v754, 32
    %v773 = vpop.permute.xlu0 %772
    %v775 = vsel %vm72, %v769, %v773
    %v776 = vld [vmem:[#allocation2] sm:$0xff]
    %v777 = vld [vmem:[#allocation2 + $0x8] sm:$0xff]
    %v778 = vld [vmem:[#allocation2 + $0x10] sm:$0xff]
    %v779 = vld [vmem:[#allocation2 + $0x18] sm:$0xff]
    %v780 = vld [vmem:[#allocation2 + $0x20] sm:$0xff]
    %v781 = vld [vmem:[#allocation2 + $0x28] sm:$0xff]
    %v782 = vld [vmem:[#allocation2 + $0x30] sm:$0xff]
    %v783 = vld [vmem:[#allocation2 + $0x38] sm:$0xff]
    %v784 = vld [vmem:[#allocation2 + $0x40] sm:$0xff]
    %v785 = vld [vmem:[#allocation2 + $0x48] sm:$0xff]
    %v786 = vld [vmem:[#allocation2 + $0x50] sm:$0xff]
    %v787 = vld [vmem:[#allocation2 + $0x58] sm:$0xff]
    %v788 = vld [vmem:[#allocation2 + $0x60] sm:$0xff]
    %v789 = vld [vmem:[#allocation2 + $0x68] sm:$0xff]
    %v790 = vld [vmem:[#allocation2 + $0x70] sm:$0xff]
    %v791 = vld [vmem:[#allocation2 + $0x78] sm:$0xff]
    %v792 = vld [vmem:[%s5] sm:$0x3]
    %v794 = vlaneseq
    %v795 = vshrl.u32 %v794, 7
    %v796 = vsub.s32 0, %v795
    %v797 = vrot.slane %v792, %v796
    %v798 = vlaneseq
    %v799 = vshrl.u32 %v798, 7
    %v800 = vsub.s32 1, %v799
    %v801 = vrot.slane %v792, %v800
    %v805 = vsel %vm202, %v775, 0
    %807 = vmatprep.subr.mxu0 %v777
    %808 = vmatpush1.msra.mxu0 %v776
    %809 = vmatprep.subr.mxu0 %v779
    %810 = vmatpush1.msra.mxu0 %v778
    %811 = vmatprep.subr.mxu0 %v781
    %812 = vmatpush1.msra.mxu0 %v780
    %813 = vmatprep.subr.mxu0 %v783
    %814 = vmatpush1.msra.mxu0 %v782
    %815 = vmatprep.subr.mxu0 %v785
    %816 = vmatpush1.msra.mxu0 %v784
    %817 = vmatprep.subr.mxu0 %v787
    %818 = vmatpush1.msra.mxu0 %v786
    %819 = vmatprep.subr.mxu0 %v789
    %820 = vmatpush1.msra.mxu0 %v788
    %821 = vmatprep.subr.mxu0 %v791
    %822 = vmatpush1.msra.mxu0 %v790
    %823 = vmatprep.subr.mxu0 0.0
    %824 = vmatpush1.msra.mxu0 0.0
    %825 = vmatprep.subr.mxu0 0.0
    %826 = vmatpush1.msra.mxu0 0.0
    %827 = vmatprep.subr.mxu0 0.0
    %828 = vmatpush1.msra.mxu0 0.0
    %829 = vmatprep.subr.mxu0 0.0
    %830 = vmatpush1.msra.mxu0 0.0
    %831 = vmatprep.subr.mxu0 0.0
    %832 = vmatpush1.msra.mxu0 0.0
    %833 = vmatprep.subr.mxu0 0.0
    %834 = vmatpush1.msra.mxu0 0.0
    %835 = vmatprep.subr.mxu0 0.0
    %836 = vmatpush1.msra.mxu0 0.0
    %837 = vmatprep.subr.mxu0 0.0
    %838 = vmatpush1.msra.mxu0 0.0
    %839 = vmatprep.subr.mxu0 0.0
    %840 = vmatpush1.msra.mxu0 0.0
    %841 = vmatprep.subr.mxu0 0.0
    %842 = vmatpush1.msra.mxu0 0.0
    %843 = vmatprep.subr.mxu0 0.0
    %844 = vmatpush1.msra.mxu0 0.0
    %845 = vmatprep.subr.mxu0 0.0
    %846 = vmatpush1.msra.mxu0 0.0
    %847 = vmatprep.subr.mxu0 0.0
    %848 = vmatpush1.msra.mxu0 0.0
    %849 = vmatprep.subr.mxu0 0.0
    %850 = vmatpush1.msra.mxu0 0.0
    %851 = vmatprep.subr.mxu0 0.0
    %852 = vmatpush1.msra.mxu0 0.0
    %853 = vmatprep.subr.mxu0 0.0
    %854 = vmatpush1.msra.mxu0 0.0
    %855 = vmatprep.subr.mxu0 0.0
    %856 = vmatpush1.msra.mxu0 0.0
    %857 = vmatprep.subr.mxu0 0.0
    %858 = vmatpush1.msra.mxu0 0.0
    %859 = vmatprep.subr.mxu0 0.0
    %860 = vmatpush1.msra.mxu0 0.0
    %861 = vmatprep.subr.mxu0 0.0
    %862 = vmatpush1.msra.mxu0 0.0
    %863 = vmatprep.subr.mxu0 0.0
    %864 = vmatpush1.msra.mxu0 0.0
    %865 = vmatprep.subr.mxu0 0.0
    %866 = vmatpush1.msra.mxu0 0.0
    %867 = vmatprep.subr.mxu0 0.0
    %868 = vmatpush1.msra.mxu0 0.0
    %869 = vmatprep.subr.mxu0 0.0
    %870 = vmatpush1.msra.mxu0 0.0
    %871 = vmatprep.mubr.f32.mxu0 0.0
    %872 = vmatmul.mubr.f32.gmra.mrb[0].mxu0 %v805
    %v873 = vpop.f32.mrb[0].mxu0
    %v874 = vadd.f32 %v797, %v873
    %v875 = vpop.f32.mrb[0].mxu0
    %v876 = vadd.f32 %v801, %v875
    %877 = vdwg.mxu0
    %v879 = vrot.slane %v874, 4
    %v881 = vadd.f32 %v158, %v879
    %v882 = vsub.f32 0.0, %v881
    %v883 = vmul.f32 %v882, 1.442695
    %v884 = vpow.pop %v883
    %v885 = vadd.f32 %v884, 1.0
    %v886 = vrcp.pop %v885
    %v887 = vmul.f32 1.0, %v886
    %888 = vrot.lane.b32.xlu0 %v879, 64
    %v889 = vpop.permute.xlu0 %888
    %v891 = vmul.f32 %v887, %v889
    %893 = vrot.lane.b32.xlu0 %v891, 64
    %v894 = vpop.permute.xlu0 %893
    %v896 = vadd.f32 %v158, %v894
    %v897 = vtanh.pop %v896
    %v898 = vsub.f32 1.0, %v887
    %900 = vrot.lane.b32.xlu0 %v897, 96
    %v901 = vpop.permute.xlu0 %900
    %v903 = vmul.f32 %v898, %v901
    %v904 = vrot.slane %v745, 4
    %v906 = vmul.f32 %v887, %v904
    %v907 = vadd.f32 %v903, %v906
    %v908 = vadd.f32 %v164, %v874
    %v909 = vsub.f32 0.0, %v908
    %v910 = vmul.f32 %v909, 1.442695
    %v911 = vpow.pop %v910
    %v912 = vadd.f32 %v911, 1.0
    %v913 = vrcp.pop %v912
    %v914 = vmul.f32 1.0, %v913
    %v915 = vadd.f32 %v166, %v876
    %v916 = vsub.f32 0.0, %v915
    %v917 = vmul.f32 %v916, 1.442695
    %v918 = vpow.pop %v917
    %v919 = vadd.f32 %v918, 1.0
    %v920 = vrcp.pop %v919
    %v921 = vmul.f32 1.0, %v920
    %923 = vrot.lane.b32.xlu0 %v876, 64
    %v924 = vpop.permute.xlu0 %923
    %v926 = vmul.f32 %v914, %v924
    %928 = vrot.lane.b32.xlu0 %v926, 64
    %v929 = vpop.permute.xlu0 %928
    %v931 = vadd.f32 %v166, %v929
    %v932 = vtanh.pop %v931
    %v933 = vsub.f32 1.0, %v921
    %935 = vrot.lane.b32.xlu0 %v932, 96
    %v936 = vpop.permute.xlu0 %935
    %v938 = vmul.f32 %v933, %v936
    %v939 = vmul.f32 %v921, %v754
    %v940 = vadd.f32 %v938, %v939
    %vm941 = vcmp.gt.s32.totalorder %v47, 3
    %vm942 = vcmp.gt.s32.totalorder %v47, 4
    %v943 = vsel %vm941, 1, 0
    %944 = vset.pattern.permute.xlu0 0
    %945 = vperm.xlu0 %944, %v943
    %v946 = vpop.permute.xlu0 %945
    %vm947 = vcmp.eq.s32.totalorder %v946, 1
    %v949 = vrot.slane %v907, 4
    %950 = vrot.lane.b32.xlu0 %v949, 96
    %v951 = vpop.permute.xlu0 %950
    %v953 = vsel %vm947, %v951, %v769
    %v954 = vsel %vm942, 1, 0
    %955 = vset.pattern.permute.xlu0 0
    %956 = vperm.xlu0 %955, %v954
    %v957 = vpop.permute.xlu0 %956
    %vm958 = vcmp.eq.s32.totalorder %v957, 1
    %v959 = vsel %vm958, %v940, %v754
    %v960 = vsel %vm947, %v951, 0.0
    %961 = vst.msk [vmem:[#allocation5 + $0xc] sm:$0xf] %vm361, %v960
    %v962 = vsel %vm958, %v940, 0.0
    %964 = vrot.lane.b32.xlu0 %v962, 32
    %v965 = vpop.permute.xlu0 %964
    %967 = vst.msk [vmem:[#allocation5 + $0x10] sm:$0xf] %vm367, %v965
    %969 = vrot.lane.b32.xlu0 %v959, 32
    %v970 = vpop.permute.xlu0 %969
    %v972 = vsel %vm72, %v953, %v970
    %v973 = vld [vmem:[#allocation2] sm:$0xff]
    %v974 = vld [vmem:[#allocation2 + $0x8] sm:$0xff]
    %v975 = vld [vmem:[#allocation2 + $0x10] sm:$0xff]
    %v976 = vld [vmem:[#allocation2 + $0x18] sm:$0xff]
    %v977 = vld [vmem:[#allocation2 + $0x20] sm:$0xff]
    %v978 = vld [vmem:[#allocation2 + $0x28] sm:$0xff]
    %v979 = vld [vmem:[#allocation2 + $0x30] sm:$0xff]
    %v980 = vld [vmem:[#allocation2 + $0x38] sm:$0xff]
    %v981 = vld [vmem:[#allocation2 + $0x40] sm:$0xff]
    %v982 = vld [vmem:[#allocation2 + $0x48] sm:$0xff]
    %v983 = vld [vmem:[#allocation2 + $0x50] sm:$0xff]
    %v984 = vld [vmem:[#allocation2 + $0x58] sm:$0xff]
    %v985 = vld [vmem:[#allocation2 + $0x60] sm:$0xff]
    %v986 = vld [vmem:[#allocation2 + $0x68] sm:$0xff]
    %v987 = vld [vmem:[#allocation2 + $0x70] sm:$0xff]
    %v988 = vld [vmem:[#allocation2 + $0x78] sm:$0xff]
    %v989 = vld [vmem:[%s5] sm:$0x3]
    %v991 = vlaneseq
    %v992 = vshrl.u32 %v991, 7
    %v993 = vsub.s32 0, %v992
    %v994 = vrot.slane %v989, %v993
    %v995 = vlaneseq
    %v996 = vshrl.u32 %v995, 7
    %v997 = vsub.s32 1, %v996
    %v998 = vrot.slane %v989, %v997
    %v1002 = vsel %vm202, %v972, 0
    %1004 = vmatprep.subr.mxu0 %v974
    %1005 = vmatpush1.msra.mxu0 %v973
    %1006 = vmatprep.subr.mxu0 %v976
    %1007 = vmatpush1.msra.mxu0 %v975
    %1008 = vmatprep.subr.mxu0 %v978
    %1009 = vmatpush1.msra.mxu0 %v977
    %1010 = vmatprep.subr.mxu0 %v980
    %1011 = vmatpush1.msra.mxu0 %v979
    %1012 = vmatprep.subr.mxu0 %v982
    %1013 = vmatpush1.msra.mxu0 %v981
    %1014 = vmatprep.subr.mxu0 %v984
    %1015 = vmatpush1.msra.mxu0 %v983
    %1016 = vmatprep.subr.mxu0 %v986
    %1017 = vmatpush1.msra.mxu0 %v985
    %1018 = vmatprep.subr.mxu0 %v988
    %1019 = vmatpush1.msra.mxu0 %v987
    %1020 = vmatprep.subr.mxu0 0.0
    %1021 = vmatpush1.msra.mxu0 0.0
    %1022 = vmatprep.subr.mxu0 0.0
    %1023 = vmatpush1.msra.mxu0 0.0
    %1024 = vmatprep.subr.mxu0 0.0
    %1025 = vmatpush1.msra.mxu0 0.0
    %1026 = vmatprep.subr.mxu0 0.0
    %1027 = vmatpush1.msra.mxu0 0.0
    %1028 = vmatprep.subr.mxu0 0.0
    %1029 = vmatpush1.msra.mxu0 0.0
    %1030 = vmatprep.subr.mxu0 0.0
    %1031 = vmatpush1.msra.mxu0 0.0
    %1032 = vmatprep.subr.mxu0 0.0
    %1033 = vmatpush1.msra.mxu0 0.0
    %1034 = vmatprep.subr.mxu0 0.0
    %1035 = vmatpush1.msra.mxu0 0.0
    %1036 = vmatprep.subr.mxu0 0.0
    %1037 = vmatpush1.msra.mxu0 0.0
    %1038 = vmatprep.subr.mxu0 0.0
    %1039 = vmatpush1.msra.mxu0 0.0
    %1040 = vmatprep.subr.mxu0 0.0
    %1041 = vmatpush1.msra.mxu0 0.0
    %1042 = vmatprep.subr.mxu0 0.0
    %1043 = vmatpush1.msra.mxu0 0.0
    %1044 = vmatprep.subr.mxu0 0.0
    %1045 = vmatpush1.msra.mxu0 0.0
    %1046 = vmatprep.subr.mxu0 0.0
    %1047 = vmatpush1.msra.mxu0 0.0
    %1048 = vmatprep.subr.mxu0 0.0
    %1049 = vmatpush1.msra.mxu0 0.0
    %1050 = vmatprep.subr.mxu0 0.0
    %1051 = vmatpush1.msra.mxu0 0.0
    %1052 = vmatprep.subr.mxu0 0.0
    %1053 = vmatpush1.msra.mxu0 0.0
    %1054 = vmatprep.subr.mxu0 0.0
    %1055 = vmatpush1.msra.mxu0 0.0
    %1056 = vmatprep.subr.mxu0 0.0
    %1057 = vmatpush1.msra.mxu0 0.0
    %1058 = vmatprep.subr.mxu0 0.0
    %1059 = vmatpush1.msra.mxu0 0.0
    %1060 = vmatprep.subr.mxu0 0.0
    %1061 = vmatpush1.msra.mxu0 0.0
    %1062 = vmatprep.subr.mxu0 0.0
    %1063 = vmatpush1.msra.mxu0 0.0
    %1064 = vmatprep.subr.mxu0 0.0
    %1065 = vmatpush1.msra.mxu0 0.0
    %1066 = vmatprep.subr.mxu0 0.0
    %1067 = vmatpush1.msra.mxu0 0.0
    %1068 = vmatprep.mubr.f32.mxu0 0.0
    %1069 = vmatmul.mubr.f32.gmra.mrb[0].mxu0 %v1002
    %v1070 = vpop.f32.mrb[0].mxu0
    %v1071 = vadd.f32 %v994, %v1070
    %v1072 = vpop.f32.mrb[0].mxu0
    %v1073 = vadd.f32 %v998, %v1072
    %1074 = vdwg.mxu0
    %v1075 = vadd.f32 %v164, %v1071
    %v1076 = vsub.f32 0.0, %v1075
    %v1077 = vmul.f32 %v1076, 1.442695
    %v1078 = vpow.pop %v1077
    %v1079 = vadd.f32 %v1078, 1.0
    %v1080 = vrcp.pop %v1079
    %v1081 = vmul.f32 1.0, %v1080
    %1083 = vrot.lane.b32.xlu0 %v1071, 64
    %v1084 = vpop.permute.xlu0 %1083
    %v1086 = vmul.f32 %v1081, %v1084
    %1088 = vrot.lane.b32.xlu0 %v1086, 64
    %v1089 = vpop.permute.xlu0 %1088
    %v1091 = vadd.f32 %v164, %v1089
    %v1092 = vtanh.pop %v1091
    %v1093 = vsub.f32 1.0, %v1081
    %1095 = vrot.lane.b32.xlu0 %v1092, 96
    %v1096 = vpop.permute.xlu0 %1095
    %v1098 = vmul.f32 %v1093, %v1096
    %1100 = vrot.lane.b32.xlu0 %v953, 32
    %v1101 = vpop.permute.xlu0 %1100
    %v1103 = vmul.f32 %v1081, %v1101
    %v1104 = vadd.f32 %v1098, %v1103
    %v1105 = vrot.slane %v1071, 4
    %v1107 = vadd.f32 %v158, %v1105
    %v1108 = vsub.f32 0.0, %v1107
    %v1109 = vmul.f32 %v1108, 1.442695
    %v1110 = vpow.pop %v1109
    %v1111 = vadd.f32 %v1110, 1.0
    %v1112 = vrcp.pop %v1111
    %v1113 = vmul.f32 1.0, %v1112
    %v1115 = vrot.slane %v1073, 4
    %v1117 = vadd.f32 %v160, %v1115
    %v1118 = vsub.f32 0.0, %v1117
    %v1119 = vmul.f32 %v1118, 1.442695
    %v1120 = vpow.pop %v1119
    %v1121 = vadd.f32 %v1120, 1.0
    %v1122 = vrcp.pop %v1121
    %v1123 = vmul.f32 1.0, %v1122
    %1124 = vrot.lane.b32.xlu0 %v1115, 64
    %v1125 = vpop.permute.xlu0 %1124
    %v1127 = vmul.f32 %v1113, %v1125
    %1129 = vrot.lane.b32.xlu0 %v1127, 64
    %v1130 = vpop.permute.xlu0 %1129
    %v1132 = vadd.f32 %v160, %v1130
    %v1133 = vtanh.pop %v1132
    %v1134 = vsub.f32 1.0, %v1123
    %1136 = vrot.lane.b32.xlu0 %v1133, 96
    %v1137 = vpop.permute.xlu0 %1136
    %v1139 = vmul.f32 %v1134, %v1137
    %v1140 = vrot.slane %v959, 4
    %v1142 = vmul.f32 %v1123, %v1140
    %v1143 = vadd.f32 %v1139, %v1142
    %v1144 = vsel %vm958, %v1104, %v1101
    %v1146 = vrot.slane %v1143, 4
    %v1148 = vsel %vm947, %v1146, %v959
    %v1149 = vsel %vm958, %v1104, 0.0
    %1151 = vrot.lane.b32.xlu0 %v1149, 96
    %v1152 = vpop.permute.xlu0 %1151
    %1154 = vst.msk [vmem:[#allocation5 + $0x10] sm:$0xf] %vm361, %v1152
    %v1155 = vsel %vm947, %v1146, 0.0
    %1157 = vrot.lane.b32.xlu0 %v1155, 32
    %v1158 = vpop.permute.xlu0 %1157
    %1160 = vst.msk [vmem:[#allocation5 + $0xc] sm:$0xf] %vm367, %v1158
    %1162 = vrot.lane.b32.xlu0 %v1144, 96
    %v1163 = vpop.permute.xlu0 %1162
    %1166 = vrot.lane.b32.xlu0 %v1148, 32
    %v1167 = vpop.permute.xlu0 %1166
    %v1169 = vsel %vm72, %v1163, %v1167
    %v1170 = vld [vmem:[#allocation2] sm:$0xff]
    %v1171 = vld [vmem:[#allocation2 + $0x8] sm:$0xff]
    %v1172 = vld [vmem:[#allocation2 + $0x10] sm:$0xff]
    %v1173 = vld [vmem:[#allocation2 + $0x18] sm:$0xff]
    %v1174 = vld [vmem:[#allocation2 + $0x20] sm:$0xff]
    %v1175 = vld [vmem:[#allocation2 + $0x28] sm:$0xff]
    %v1176 = vld [vmem:[#allocation2 + $0x30] sm:$0xff]
    %v1177 = vld [vmem:[#allocation2 + $0x38] sm:$0xff]
    %v1178 = vld [vmem:[#allocation2 + $0x40] sm:$0xff]
    %v1179 = vld [vmem:[#allocation2 + $0x48] sm:$0xff]
    %v1180 = vld [vmem:[#allocation2 + $0x50] sm:$0xff]
    %v1181 = vld [vmem:[#allocation2 + $0x58] sm:$0xff]
    %v1182 = vld [vmem:[#allocation2 + $0x60] sm:$0xff]
    %v1183 = vld [vmem:[#allocation2 + $0x68] sm:$0xff]
    %v1184 = vld [vmem:[#allocation2 + $0x70] sm:$0xff]
    %v1185 = vld [vmem:[#allocation2 + $0x78] sm:$0xff]
    %v1186 = vld [vmem:[%s5] sm:$0x3]
    %v1188 = vlaneseq
    %v1189 = vshrl.u32 %v1188, 7
    %v1190 = vsub.s32 0, %v1189
    %v1191 = vrot.slane %v1186, %v1190
    %v1192 = vlaneseq
    %v1193 = vshrl.u32 %v1192, 7
    %v1194 = vsub.s32 1, %v1193
    %v1195 = vrot.slane %v1186, %v1194
    %v1199 = vsel %vm202, %v1169, 0
    %1201 = vmatprep.subr.mxu0 %v1171
    %1202 = vmatpush1.msra.mxu0 %v1170
    %1203 = vmatprep.subr.mxu0 %v1173
    %1204 = vmatpush1.msra.mxu0 %v1172
    %1205 = vmatprep.subr.mxu0 %v1175
    %1206 = vmatpush1.msra.mxu0 %v1174
    %1207 = vmatprep.subr.mxu0 %v1177
    %1208 = vmatpush1.msra.mxu0 %v1176
    %1209 = vmatprep.subr.mxu0 %v1179
    %1210 = vmatpush1.msra.mxu0 %v1178
    %1211 = vmatprep.subr.mxu0 %v1181
    %1212 = vmatpush1.msra.mxu0 %v1180
    %1213 = vmatprep.subr.mxu0 %v1183
    %1214 = vmatpush1.msra.mxu0 %v1182
    %1215 = vmatprep.subr.mxu0 %v1185
    %1216 = vmatpush1.msra.mxu0 %v1184
    %1217 = vmatprep.subr.mxu0 0.0
    %1218 = vmatpush1.msra.mxu0 0.0
    %1219 = vmatprep.subr.mxu0 0.0
    %1220 = vmatpush1.msra.mxu0 0.0
    %1221 = vmatprep.subr.mxu0 0.0
    %1222 = vmatpush1.msra.mxu0 0.0
    %1223 = vmatprep.subr.mxu0 0.0
    %1224 = vmatpush1.msra.mxu0 0.0
    %1225 = vmatprep.subr.mxu0 0.0
    %1226 = vmatpush1.msra.mxu0 0.0
    %1227 = vmatprep.subr.mxu0 0.0
    %1228 = vmatpush1.msra.mxu0 0.0
    %1229 = vmatprep.subr.mxu0 0.0
    %1230 = vmatpush1.msra.mxu0 0.0
    %1231 = vmatprep.subr.mxu0 0.0
    %1232 = vmatpush1.msra.mxu0 0.0
    %1233 = vmatprep.subr.mxu0 0.0
    %1234 = vmatpush1.msra.mxu0 0.0
    %1235 = vmatprep.subr.mxu0 0.0
    %1236 = vmatpush1.msra.mxu0 0.0
    %1237 = vmatprep.subr.mxu0 0.0
    %1238 = vmatpush1.msra.mxu0 0.0
    %1239 = vmatprep.subr.mxu0 0.0
    %1240 = vmatpush1.msra.mxu0 0.0
    %1241 = vmatprep.subr.mxu0 0.0
    %1242 = vmatpush1.msra.mxu0 0.0
    %1243 = vmatprep.subr.mxu0 0.0
    %1244 = vmatpush1.msra.mxu0 0.0
    %1245 = vmatprep.subr.mxu0 0.0
    %1246 = vmatpush1.msra.mxu0 0.0
    %1247 = vmatprep.subr.mxu0 0.0
    %1248 = vmatpush1.msra.mxu0 0.0
    %1249 = vmatprep.subr.mxu0 0.0
    %1250 = vmatpush1.msra.mxu0 0.0
    %1251 = vmatprep.subr.mxu0 0.0
    %1252 = vmatpush1.msra.mxu0 0.0
    %1253 = vmatprep.subr.mxu0 0.0
    %1254 = vmatpush1.msra.mxu0 0.0
    %1255 = vmatprep.subr.mxu0 0.0
    %1256 = vmatpush1.msra.mxu0 0.0
    %1257 = vmatprep.subr.mxu0 0.0
    %1258 = vmatpush1.msra.mxu0 0.0
    %1259 = vmatprep.subr.mxu0 0.0
    %1260 = vmatpush1.msra.mxu0 0.0
    %1261 = vmatprep.subr.mxu0 0.0
    %1262 = vmatpush1.msra.mxu0 0.0
    %1263 = vmatprep.subr.mxu0 0.0
    %1264 = vmatpush1.msra.mxu0 0.0
    %1265 = vmatprep.mubr.f32.mxu0 0.0
    %1266 = vmatmul.mubr.f32.gmra.mrb[0].mxu0 %v1199
    %v1267 = vpop.f32.mrb[0].mxu0
    %v1268 = vadd.f32 %v1191, %v1267
    %v1269 = vpop.f32.mrb[0].mxu0
    %v1270 = vadd.f32 %v1195, %v1269
    %1271 = vdwg.mxu0
    %v1273 = vrot.slane %v1268, 4
    %v1275 = vadd.f32 %v164, %v1273
    %v1276 = vsub.f32 0.0, %v1275
    %v1277 = vmul.f32 %v1276, 1.442695
    %v1278 = vpow.pop %v1277
    %v1279 = vadd.f32 %v1278, 1.0
    %v1280 = vrcp.pop %v1279
    %v1281 = vmul.f32 1.0, %v1280
    %1282 = vrot.lane.b32.xlu0 %v1273, 64
    %v1283 = vpop.permute.xlu0 %1282
    %v1285 = vmul.f32 %v1281, %v1283
    %1287 = vrot.lane.b32.xlu0 %v1285, 64
    %v1288 = vpop.permute.xlu0 %1287
    %v1290 = vadd.f32 %v164, %v1288
    %v1291 = vtanh.pop %v1290
    %v1292 = vsub.f32 1.0, %v1281
    %1294 = vrot.lane.b32.xlu0 %v1291, 96
    %v1295 = vpop.permute.xlu0 %1294
    %v1297 = vmul.f32 %v1292, %v1295
    %v1298 = vrot.slane %v1144, 4
    %v1300 = vmul.f32 %v1281, %v1298
    %v1301 = vadd.f32 %v1297, %v1300
    %v1302 = vadd.f32 %v158, %v1268
    %v1303 = vsub.f32 0.0, %v1302
    %v1304 = vmul.f32 %v1303, 1.442695
    %v1305 = vpow.pop %v1304
    %v1306 = vadd.f32 %v1305, 1.0
    %v1307 = vrcp.pop %v1306
    %v1308 = vmul.f32 1.0, %v1307
    %v1309 = vadd.f32 %v160, %v1270
    %v1310 = vsub.f32 0.0, %v1309
    %v1311 = vmul.f32 %v1310, 1.442695
    %v1312 = vpow.pop %v1311
    %v1313 = vadd.f32 %v1312, 1.0
    %v1314 = vrcp.pop %v1313
    %v1315 = vmul.f32 1.0, %v1314
    %1317 = vrot.lane.b32.xlu0 %v1270, 64
    %v1318 = vpop.permute.xlu0 %1317
    %v1320 = vmul.f32 %v1308, %v1318
    %1322 = vrot.lane.b32.xlu0 %v1320, 64
    %v1323 = vpop.permute.xlu0 %1322
    %v1325 = vadd.f32 %v160, %v1323
    %v1326 = vtanh.pop %v1325
    %v1327 = vsub.f32 1.0, %v1315
    %1329 = vrot.lane.b32.xlu0 %v1326, 96
    %v1330 = vpop.permute.xlu0 %1329
    %v1332 = vmul.f32 %v1327, %v1330
    %v1333 = vmul.f32 %v1315, %v1148
    %v1334 = vadd.f32 %v1332, %v1333
    %v1336 = vrot.slane %v1301, 4
    %1337 = vrot.lane.b32.xlu0 %v1336, 96
    %v1338 = vpop.permute.xlu0 %1337
    %v1340 = vsel %vm750, %v1338, %v1163
    %v1341 = vsel %vm744, %v1334, %v1148
    %v1342 = vsel %vm750, %v1338, 0.0
    %1343 = vst.msk [vmem:[#allocation5 + $0x14] sm:$0xf] %vm361, %v1342
    %v1344 = vsel %vm744, %v1334, 0.0
    %1346 = vrot.lane.b32.xlu0 %v1344, 32
    %v1347 = vpop.permute.xlu0 %1346
    %1349 = vst.msk [vmem:[#allocation5 + $0x8] sm:$0xf] %vm367, %v1347
    %1351 = vrot.lane.b32.xlu0 %v1341, 32
    %v1352 = vpop.permute.xlu0 %1351
    %v1354 = vsel %vm72, %v1340, %v1352
    %v1355 = vld [vmem:[#allocation2] sm:$0xff]
    %v1356 = vld [vmem:[#allocation2 + $0x8] sm:$0xff]
    %v1357 = vld [vmem:[#allocation2 + $0x10] sm:$0xff]
    %v1358 = vld [vmem:[#allocation2 + $0x18] sm:$0xff]
    %v1359 = vld [vmem:[#allocation2 + $0x20] sm:$0xff]
    %v1360 = vld [vmem:[#allocation2 + $0x28] sm:$0xff]
    %v1361 = vld [vmem:[#allocation2 + $0x30] sm:$0xff]
    %v1362 = vld [vmem:[#allocation2 + $0x38] sm:$0xff]
    %v1363 = vld [vmem:[#allocation2 + $0x40] sm:$0xff]
    %v1364 = vld [vmem:[#allocation2 + $0x48] sm:$0xff]
    %v1365 = vld [vmem:[#allocation2 + $0x50] sm:$0xff]
    %v1366 = vld [vmem:[#allocation2 + $0x58] sm:$0xff]
    %v1367 = vld [vmem:[#allocation2 + $0x60] sm:$0xff]
    %v1368 = vld [vmem:[#allocation2 + $0x68] sm:$0xff]
    %v1369 = vld [vmem:[#allocation2 + $0x70] sm:$0xff]
    %v1370 = vld [vmem:[#allocation2 + $0x78] sm:$0xff]
    %v1371 = vld [vmem:[%s5] sm:$0x3]
    %v1373 = vlaneseq
    %v1374 = vshrl.u32 %v1373, 7
    %v1375 = vsub.s32 0, %v1374
    %v1376 = vrot.slane %v1371, %v1375
    %v1377 = vlaneseq
    %v1378 = vshrl.u32 %v1377, 7
    %v1379 = vsub.s32 1, %v1378
    %v1380 = vrot.slane %v1371, %v1379
    %v1384 = vsel %vm202, %v1354, 0
    %1386 = vmatprep.subr.mxu0 %v1356
    %1387 = vmatpush1.msra.mxu0 %v1355
    %1388 = vmatprep.subr.mxu0 %v1358
    %1389 = vmatpush1.msra.mxu0 %v1357
    %1390 = vmatprep.subr.mxu0 %v1360
    %1391 = vmatpush1.msra.mxu0 %v1359
    %1392 = vmatprep.subr.mxu0 %v1362
    %1393 = vmatpush1.msra.mxu0 %v1361
    %1394 = vmatprep.subr.mxu0 %v1364
    %1395 = vmatpush1.msra.mxu0 %v1363
    %1396 = vmatprep.subr.mxu0 %v1366
    %1397 = vmatpush1.msra.mxu0 %v1365
    %1398 = vmatprep.subr.mxu0 %v1368
    %1399 = vmatpush1.msra.mxu0 %v1367
    %1400 = vmatprep.subr.mxu0 %v1370
    %1401 = vmatpush1.msra.mxu0 %v1369
    %1402 = vmatprep.subr.mxu0 0.0
    %1403 = vmatpush1.msra.mxu0 0.0
    %1404 = vmatprep.subr.mxu0 0.0
    %1405 = vmatpush1.msra.mxu0 0.0
    %1406 = vmatprep.subr.mxu0 0.0
    %1407 = vmatpush1.msra.mxu0 0.0
    %1408 = vmatprep.subr.mxu0 0.0
    %1409 = vmatpush1.msra.mxu0 0.0
    %1410 = vmatprep.subr.mxu0 0.0
    %1411 = vmatpush1.msra.mxu0 0.0
    %1412 = vmatprep.subr.mxu0 0.0
    %1413 = vmatpush1.msra.mxu0 0.0
    %1414 = vmatprep.subr.mxu0 0.0
    %1415 = vmatpush1.msra.mxu0 0.0
    %1416 = vmatprep.subr.mxu0 0.0
    %1417 = vmatpush1.msra.mxu0 0.0
    %1418 = vmatprep.subr.mxu0 0.0
    %1419 = vmatpush1.msra.mxu0 0.0
    %1420 = vmatprep.subr.mxu0 0.0
    %1421 = vmatpush1.msra.mxu0 0.0
    %1422 = vmatprep.subr.mxu0 0.0
    %1423 = vmatpush1.msra.mxu0 0.0
    %1424 = vmatprep.subr.mxu0 0.0
    %1425 = vmatpush1.msra.mxu0 0.0
    %1426 = vmatprep.subr.mxu0 0.0
    %1427 = vmatpush1.msra.mxu0 0.0
    %1428 = vmatprep.subr.mxu0 0.0
    %1429 = vmatpush1.msra.mxu0 0.0
    %1430 = vmatprep.subr.mxu0 0.0
    %1431 = vmatpush1.msra.mxu0 0.0
    %1432 = vmatprep.subr.mxu0 0.0
    %1433 = vmatpush1.msra.mxu0 0.0
    %1434 = vmatprep.subr.mxu0 0.0
    %1435 = vmatpush1.msra.mxu0 0.0
    %1436 = vmatprep.subr.mxu0 0.0
    %1437 = vmatpush1.msra.mxu0 0.0
    %1438 = vmatprep.subr.mxu0 0.0
    %1439 = vmatpush1.msra.mxu0 0.0
    %1440 = vmatprep.subr.mxu0 0.0
    %1441 = vmatpush1.msra.mxu0 0.0
    %1442 = vmatprep.subr.mxu0 0.0
    %1443 = vmatpush1.msra.mxu0 0.0
    %1444 = vmatprep.subr.mxu0 0.0
    %1445 = vmatpush1.msra.mxu0 0.0
    %1446 = vmatprep.subr.mxu0 0.0
    %1447 = vmatpush1.msra.mxu0 0.0
    %1448 = vmatprep.subr.mxu0 0.0
    %1449 = vmatpush1.msra.mxu0 0.0
    %1450 = vmatprep.mubr.f32.mxu0 0.0
    %1451 = vmatmul.mubr.f32.gmra.mrb[0].mxu0 %v1384
    %v1452 = vpop.f32.mrb[0].mxu0
    %v1453 = vadd.f32 %v1376, %v1452
    %v1454 = vpop.f32.mrb[0].mxu0
    %v1455 = vadd.f32 %v1380, %v1454
    %1456 = vdwg.mxu0
    %v1457 = vadd.f32 %v170, %v1453
    %v1458 = vsub.f32 0.0, %v1457
    %v1459 = vmul.f32 %v1458, 1.442695
    %v1460 = vpow.pop %v1459
    %v1461 = vadd.f32 %v1460, 1.0
    %v1462 = vrcp.pop %v1461
    %v1463 = vmul.f32 1.0, %v1462
    %1465 = vrot.lane.b32.xlu0 %v1453, 64
    %v1466 = vpop.permute.xlu0 %1465
    %v1468 = vmul.f32 %v1463, %v1466
    %1470 = vrot.lane.b32.xlu0 %v1468, 64
    %v1471 = vpop.permute.xlu0 %1470
    %v1473 = vadd.f32 %v170, %v1471
    %v1474 = vtanh.pop %v1473
    %v1475 = vsub.f32 1.0, %v1463
    %1477 = vrot.lane.b32.xlu0 %v1474, 96
    %v1478 = vpop.permute.xlu0 %1477
    %v1480 = vmul.f32 %v1475, %v1478
    %1482 = vrot.lane.b32.xlu0 %v1340, 32
    %v1483 = vpop.permute.xlu0 %1482
    %v1485 = vmul.f32 %v1463, %v1483
    %v1486 = vadd.f32 %v1480, %v1485
    %v1487 = vrot.slane %v1453, 4
    %v1489 = vadd.f32 %v152, %v1487
    %v1490 = vsub.f32 0.0, %v1489
    %v1491 = vmul.f32 %v1490, 1.442695
    %v1492 = vpow.pop %v1491
    %v1493 = vadd.f32 %v1492, 1.0
    %v1494 = vrcp.pop %v1493
    %v1495 = vmul.f32 1.0, %v1494
    %v1497 = vrot.slane %v1455, 4
    %v1499 = vadd.f32 %v154, %v1497
    %v1500 = vsub.f32 0.0, %v1499
    %v1501 = vmul.f32 %v1500, 1.442695
    %v1502 = vpow.pop %v1501
    %v1503 = vadd.f32 %v1502, 1.0
    %v1504 = vrcp.pop %v1503
    %v1505 = vmul.f32 1.0, %v1504
    %1506 = vrot.lane.b32.xlu0 %v1497, 64
    %v1507 = vpop.permute.xlu0 %1506
    %v1509 = vmul.f32 %v1495, %v1507
    %1511 = vrot.lane.b32.xlu0 %v1509, 64
    %v1512 = vpop.permute.xlu0 %1511
    %v1514 = vadd.f32 %v154, %v1512
    %v1515 = vtanh.pop %v1514
    %v1516 = vsub.f32 1.0, %v1505
    %1518 = vrot.lane.b32.xlu0 %v1515, 96
    %v1519 = vpop.permute.xlu0 %1518
    %v1521 = vmul.f32 %v1516, %v1519
    %v1522 = vrot.slane %v1341, 4
    %v1524 = vmul.f32 %v1505, %v1522
    %v1525 = vadd.f32 %v1521, %v1524
    %v1526 = vsel %vm552, %v1486, %v1483
    %v1528 = vrot.slane %v1525, 4
    %v1530 = vsel %vm541, %v1528, %v1341
    %v1531 = vsel %vm552, %v1486, 0.0
    %1533 = vrot.lane.b32.xlu0 %v1531, 96
    %v1534 = vpop.permute.xlu0 %1533
    %1536 = vst.msk [vmem:[#allocation5 + $0x18] sm:$0xf] %vm361, %v1534
    %v1537 = vsel %vm541, %v1528, 0.0
    %1539 = vrot.lane.b32.xlu0 %v1537, 32
    %v1540 = vpop.permute.xlu0 %1539
    %1542 = vst.msk [vmem:[#allocation5 + $0x4] sm:$0xf] %vm367, %v1540
    %1544 = vrot.lane.b32.xlu0 %v1526, 96
    %v1545 = vpop.permute.xlu0 %1544
    %1548 = vrot.lane.b32.xlu0 %v1530, 32
    %v1549 = vpop.permute.xlu0 %1548
    %v1551 = vsel %vm72, %v1545, %v1549
    %v1552 = vld [vmem:[#allocation2] sm:$0xff]
    %v1553 = vld [vmem:[#allocation2 + $0x8] sm:$0xff]
    %v1554 = vld [vmem:[#allocation2 + $0x10] sm:$0xff]
    %v1555 = vld [vmem:[#allocation2 + $0x18] sm:$0xff]
    %v1556 = vld [vmem:[#allocation2 + $0x20] sm:$0xff]
    %v1557 = vld [vmem:[#allocation2 + $0x28] sm:$0xff]
    %v1558 = vld [vmem:[#allocation2 + $0x30] sm:$0xff]
    %v1559 = vld [vmem:[#allocation2 + $0x38] sm:$0xff]
    %v1560 = vld [vmem:[#allocation2 + $0x40] sm:$0xff]
    %v1561 = vld [vmem:[#allocation2 + $0x48] sm:$0xff]
    %v1562 = vld [vmem:[#allocation2 + $0x50] sm:$0xff]
    %v1563 = vld [vmem:[#allocation2 + $0x58] sm:$0xff]
    %v1564 = vld [vmem:[#allocation2 + $0x60] sm:$0xff]
    %v1565 = vld [vmem:[#allocation2 + $0x68] sm:$0xff]
    %v1566 = vld [vmem:[#allocation2 + $0x70] sm:$0xff]
    %v1567 = vld [vmem:[#allocation2 + $0x78] sm:$0xff]
    %v1568 = vld [vmem:[%s5] sm:$0x3]
    %v1570 = vlaneseq
    %v1571 = vshrl.u32 %v1570, 7
    %v1572 = vsub.s32 0, %v1571
    %v1573 = vrot.slane %v1568, %v1572
    %v1574 = vlaneseq
    %v1575 = vshrl.u32 %v1574, 7
    %v1576 = vsub.s32 1, %v1575
    %v1577 = vrot.slane %v1568, %v1576
    %v1581 = vsel %vm202, %v1551, 0
    %1583 = vmatprep.subr.mxu0 %v1553
    %1584 = vmatpush1.msra.mxu0 %v1552
    %1585 = vmatprep.subr.mxu0 %v1555
    %1586 = vmatpush1.msra.mxu0 %v1554
    %1587 = vmatprep.subr.mxu0 %v1557
    %1588 = vmatpush1.msra.mxu0 %v1556
    %1589 = vmatprep.subr.mxu0 %v1559
    %1590 = vmatpush1.msra.mxu0 %v1558
    %1591 = vmatprep.subr.mxu0 %v1561
    %1592 = vmatpush1.msra.mxu0 %v1560
    %1593 = vmatprep.subr.mxu0 %v1563
    %1594 = vmatpush1.msra.mxu0 %v1562
    %1595 = vmatprep.subr.mxu0 %v1565
    %1596 = vmatpush1.msra.mxu0 %v1564
    %1597 = vmatprep.subr.mxu0 %v1567
    %1598 = vmatpush1.msra.mxu0 %v1566
    %1599 = vmatprep.subr.mxu0 0.0
    %1600 = vmatpush1.msra.mxu0 0.0
    %1601 = vmatprep.subr.mxu0 0.0
    %1602 = vmatpush1.msra.mxu0 0.0
    %1603 = vmatprep.subr.mxu0 0.0
    %1604 = vmatpush1.msra.mxu0 0.0
    %1605 = vmatprep.subr.mxu0 0.0
    %1606 = vmatpush1.msra.mxu0 0.0
    %1607 = vmatprep.subr.mxu0 0.0
    %1608 = vmatpush1.msra.mxu0 0.0
    %1609 = vmatprep.subr.mxu0 0.0
    %1610 = vmatpush1.msra.mxu0 0.0
    %1611 = vmatprep.subr.mxu0 0.0
    %1612 = vmatpush1.msra.mxu0 0.0
    %1613 = vmatprep.subr.mxu0 0.0
    %1614 = vmatpush1.msra.mxu0 0.0
    %1615 = vmatprep.subr.mxu0 0.0
    %1616 = vmatpush1.msra.mxu0 0.0
    %1617 = vmatprep.subr.mxu0 0.0
    %1618 = vmatpush1.msra.mxu0 0.0
    %1619 = vmatprep.subr.mxu0 0.0
    %1620 = vmatpush1.msra.mxu0 0.0
    %1621 = vmatprep.subr.mxu0 0.0
    %1622 = vmatpush1.msra.mxu0 0.0
    %1623 = vmatprep.subr.mxu0 0.0
    %1624 = vmatpush1.msra.mxu0 0.0
    %1625 = vmatprep.subr.mxu0 0.0
    %1626 = vmatpush1.msra.mxu0 0.0
    %1627 = vmatprep.subr.mxu0 0.0
    %1628 = vmatpush1.msra.mxu0 0.0
    %1629 = vmatprep.subr.mxu0 0.0
    %1630 = vmatpush1.msra.mxu0 0.0
    %1631 = vmatprep.subr.mxu0 0.0
    %1632 = vmatpush1.msra.mxu0 0.0
    %1633 = vmatprep.subr.mxu0 0.0
    %1634 = vmatpush1.msra.mxu0 0.0
    %1635 = vmatprep.subr.mxu0 0.0
    %1636 = vmatpush1.msra.mxu0 0.0
    %1637 = vmatprep.subr.mxu0 0.0
    %1638 = vmatpush1.msra.mxu0 0.0
    %1639 = vmatprep.subr.mxu0 0.0
    %1640 = vmatpush1.msra.mxu0 0.0
    %1641 = vmatprep.subr.mxu0 0.0
    %1642 = vmatpush1.msra.mxu0 0.0
    %1643 = vmatprep.subr.mxu0 0.0
    %1644 = vmatpush1.msra.mxu0 0.0
    %1645 = vmatprep.subr.mxu0 0.0
    %1646 = vmatpush1.msra.mxu0 0.0
    %1647 = vmatprep.mubr.f32.mxu0 0.0
    %1648 = vmatmul.mubr.f32.gmra.mrb[0].mxu0 %v1581
    %v1649 = vpop.f32.mrb[0].mxu0
    %v1650 = vadd.f32 %v1573, %v1649
    %v1651 = vpop.f32.mrb[0].mxu0
    %v1652 = vadd.f32 %v1577, %v1651
    %1653 = vdwg.mxu0
    %v1655 = vrot.slane %v1650, 4
    %v1657 = vadd.f32 %v170, %v1655
    %v1658 = vsub.f32 0.0, %v1657
    %v1659 = vmul.f32 %v1658, 1.442695
    %v1660 = vpow.pop %v1659
    %v1661 = vadd.f32 %v1660, 1.0
    %v1662 = vrcp.pop %v1661
    %v1663 = vmul.f32 1.0, %v1662
    %1664 = vrot.lane.b32.xlu0 %v1655, 64
    %v1665 = vpop.permute.xlu0 %1664
    %v1667 = vmul.f32 %v1663, %v1665
    %1669 = vrot.lane.b32.xlu0 %v1667, 64
    %v1670 = vpop.permute.xlu0 %1669
    %v1672 = vadd.f32 %v170, %v1670
    %v1673 = vtanh.pop %v1672
    %v1674 = vsub.f32 1.0, %v1663
    %1676 = vrot.lane.b32.xlu0 %v1673, 96
    %v1677 = vpop.permute.xlu0 %1676
    %v1679 = vmul.f32 %v1674, %v1677
    %v1680 = vrot.slane %v1526, 4
    %v1682 = vmul.f32 %v1663, %v1680
    %v1683 = vadd.f32 %v1679, %v1682
    %v1684 = vadd.f32 %v152, %v1650
    %v1685 = vsub.f32 0.0, %v1684
    %v1686 = vmul.f32 %v1685, 1.442695
    %v1687 = vpow.pop %v1686
    %v1688 = vadd.f32 %v1687, 1.0
    %v1689 = vrcp.pop %v1688
    %v1690 = vmul.f32 1.0, %v1689
    %v1691 = vadd.f32 %v154, %v1652
    %v1692 = vsub.f32 0.0, %v1691
    %v1693 = vmul.f32 %v1692, 1.442695
    %v1694 = vpow.pop %v1693
    %v1695 = vadd.f32 %v1694, 1.0
    %v1696 = vrcp.pop %v1695
    %v1697 = vmul.f32 1.0, %v1696
    %1699 = vrot.lane.b32.xlu0 %v1652, 64
    %v1700 = vpop.permute.xlu0 %1699
    %v1702 = vmul.f32 %v1690, %v1700
    %1704 = vrot.lane.b32.xlu0 %v1702, 64
    %v1705 = vpop.permute.xlu0 %1704
    %v1707 = vadd.f32 %v154, %v1705
    %v1708 = vtanh.pop %v1707
    %v1709 = vsub.f32 1.0, %v1697
    %1711 = vrot.lane.b32.xlu0 %v1708, 96
    %v1712 = vpop.permute.xlu0 %1711
    %v1714 = vmul.f32 %v1709, %v1712
    %v1715 = vmul.f32 %v1697, %v1530
    %v1716 = vadd.f32 %v1714, %v1715
    %v1718 = vrot.slane %v1683, 4
    %1719 = vrot.lane.b32.xlu0 %v1718, 96
    %v1720 = vpop.permute.xlu0 %1719
    %v1722 = vsel %vm352, %v1720, %v1545
    %v1723 = vsel %vm346, %v1716, %v1530
    %v1724 = vsel %vm352, %v1720, 0.0
    %1725 = vst.msk [vmem:[#allocation5 + $0x1c] sm:$0xf] %vm361, %v1724
    %v1726 = vsel %vm346, %v1716, 0.0
    %1728 = vrot.lane.b32.xlu0 %v1726, 32
    %v1729 = vpop.permute.xlu0 %1728
    %1731 = vst.msk [vmem:[#allocation5] sm:$0xf] %vm367, %v1729
    %1733 = vrot.lane.b32.xlu0 %v1723, 32
    %v1734 = vpop.permute.xlu0 %1733
    %v1736 = vsel %vm72, %v1722, %v1734
    %v1737 = vld [vmem:[%s6] sm:$0xff]
    %v1738 = vld [vmem:[%s6 + $0x8] sm:$0xff]
    %v1739 = vld [vmem:[%s6 + $0x10] sm:$0xff]
    %v1740 = vld [vmem:[%s6 + $0x18] sm:$0xff]
    %v1741 = vld [vmem:[%s6 + $0x20] sm:$0xff]
    %v1742 = vld [vmem:[%s6 + $0x28] sm:$0xff]
    %v1743 = vld [vmem:[%s6 + $0x30] sm:$0xff]
    %v1744 = vld [vmem:[%s6 + $0x38] sm:$0xff]
    %v1745 = vld [vmem:[%s7] sm:$0x1]
    %v1747 = vlaneseq
    %v1748 = vshrl.u32 %v1747, 7
    %v1749 = vsub.s32 0, %v1748
    %v1750 = vrot.slane %v1745, %v1749
    %v1753 = vsel %vm202, %v1736, 0
    %1755 = vmatprep.subr.mxu0 0.0
    %1756 = vmatpush1.msra.mxu0 %v1737
    %1757 = vmatprep.subr.mxu0 0.0
    %1758 = vmatpush1.msra.mxu0 %v1738
    %1759 = vmatprep.subr.mxu0 0.0
    %1760 = vmatpush1.msra.mxu0 %v1739
    %1761 = vmatprep.subr.mxu0 0.0
    %1762 = vmatpush1.msra.mxu0 %v1740
    %1763 = vmatprep.subr.mxu0 0.0
    %1764 = vmatpush1.msra.mxu0 %v1741
    %1765 = vmatprep.subr.mxu0 0.0
    %1766 = vmatpush1.msra.mxu0 %v1742
    %1767 = vmatprep.subr.mxu0 0.0
    %1768 = vmatpush1.msra.mxu0 %v1743
    %1769 = vmatprep.subr.mxu0 0.0
    %1770 = vmatpush1.msra.mxu0 %v1744
    %1771 = vmatprep.subr.mxu0 0.0
    %1772 = vmatpush1.msra.mxu0 0.0
    %1773 = vmatprep.subr.mxu0 0.0
    %1774 = vmatpush1.msra.mxu0 0.0
    %1775 = vmatprep.subr.mxu0 0.0
    %1776 = vmatpush1.msra.mxu0 0.0
    %1777 = vmatprep.subr.mxu0 0.0
    %1778 = vmatpush1.msra.mxu0 0.0
    %1779 = vmatprep.subr.mxu0 0.0
    %1780 = vmatpush1.msra.mxu0 0.0
    %1781 = vmatprep.subr.mxu0 0.0
    %1782 = vmatpush1.msra.mxu0 0.0
    %1783 = vmatprep.subr.mxu0 0.0
    %1784 = vmatpush1.msra.mxu0 0.0
    %1785 = vmatprep.subr.mxu0 0.0
    %1786 = vmatpush1.msra.mxu0 0.0
    %1787 = vmatprep.subr.mxu0 0.0
    %1788 = vmatpush1.msra.mxu0 0.0
    %1789 = vmatprep.subr.mxu0 0.0
    %1790 = vmatpush1.msra.mxu0 0.0
    %1791 = vmatprep.subr.mxu0 0.0
    %1792 = vmatpush1.msra.mxu0 0.0
    %1793 = vmatprep.subr.mxu0 0.0
    %1794 = vmatpush1.msra.mxu0 0.0
    %1795 = vmatprep.subr.mxu0 0.0
    %1796 = vmatpush1.msra.mxu0 0.0
    %1797 = vmatprep.subr.mxu0 0.0
    %1798 = vmatpush1.msra.mxu0 0.0
    %1799 = vmatprep.subr.mxu0 0.0
    %1800 = vmatpush1.msra.mxu0 0.0
    %1801 = vmatprep.subr.mxu0 0.0
    %1802 = vmatpush1.msra.mxu0 0.0
    %1803 = vmatprep.subr.mxu0 0.0
    %1804 = vmatpush1.msra.mxu0 0.0
    %1805 = vmatprep.subr.mxu0 0.0
    %1806 = vmatpush1.msra.mxu0 0.0
    %1807 = vmatprep.subr.mxu0 0.0
    %1808 = vmatpush1.msra.mxu0 0.0
    %1809 = vmatprep.subr.mxu0 0.0
    %1810 = vmatpush1.msra.mxu0 0.0
    %1811 = vmatprep.subr.mxu0 0.0
    %1812 = vmatpush1.msra.mxu0 0.0
    %1813 = vmatprep.subr.mxu0 0.0
    %1814 = vmatpush1.msra.mxu0 0.0
    %1815 = vmatprep.subr.mxu0 0.0
    %1816 = vmatpush1.msra.mxu0 0.0
    %1817 = vmatprep.subr.mxu0 0.0
    %1818 = vmatpush1.msra.mxu0 0.0
    %1819 = vmatprep.mubr.f32.mxu0 0.0
    %1820 = vmatmul.mubr.f32.gmra.mrb[0].mxu0 %v1753
    %v1821 = vpop.f32.mrb[0].mxu0
    %v1822 = vadd.f32 %v1750, %v1821
    %v1823 = vpop.f32.mrb[0].mxu0
    %1824 = vdwg.mxu0
    %v1825 = vtanh.pop %v1822
    %1826 = vst.msk [vmem:[#allocation6] sm:$0xf] %vm361, %v1825
    // Predicated region
    $region38: #{tpu_custom_call.1} parent=1 // pred_check
      _
    $region39: #{tpu_custom_call.1} parent=1 // pred_check_branch
      %1828 = sbr.rel (0) target = $region41
    $region40: #{tpu_custom_call.1} parent=1 // pred_region
      %s1830 = ssub.s32 512, 512
      %1831 = vsyncadd [#allocation4], %s1830
      %s1832 = sshll.u32 [#allocation5], 4
      %s1833 = int_to_ptr.vmem [resolvable:$true] %s1832
      %1838 = dma.vmem_to_hbm [thread:$0]  %s1833, 512, %s8, [#allocation4], 128, 128, 8
    $region41: #{tpu_custom_call.1} parent=1 // pred_fallthru
      _
    // Predicated region
    $region42: #{tpu_custom_call.1} parent=1 // pred_check
      _
    $region43: #{tpu_custom_call.1} parent=1 // pred_check_branch
      %1840 = sbr.rel (0) target = $region45
    $region44: #{tpu_custom_call.1} parent=1 // pred_region
      %s1842 = ssub.s32 64, 64
      %1843 = vsyncadd [#allocation7], %s1842
      %s1845 = sshll.u32 [#allocation6], 4
      %s1846 = int_to_ptr.vmem [resolvable:$true] %s1845
      %1848 = dma.vmem_to_hbm [thread:$0]  %s1846, 64, %s9, [#allocation7]
    $region45: #{tpu_custom_call.1} parent=1 // pred_fallthru
      _
    // Predicated region
    $region46: #{tpu_custom_call.1} parent=1 // pred_check
      _
    $region47: #{tpu_custom_call.1} parent=1 // pred_check_branch
      %1850 = sbr.rel (0) target = $region49
    $region48: #{tpu_custom_call.1} parent=1 // pred_region
      %1851 = dma.done [#allocation4], 512
    $region49: #{tpu_custom_call.1} parent=1 // pred_fallthru
      _
    // Predicated region
    $region50: #{tpu_custom_call.1} parent=1 // pred_check
      _
    $region51: #{tpu_custom_call.1} parent=1 // pred_check_branch
      %1853 = sbr.rel (0) target = $region53
    $region52: #{tpu_custom_call.1} parent=1 // pred_region
      %1854 = dma.done [#allocation7], 64
    $region53: #{tpu_custom_call.1} parent=1 // pred_fallthru
      _
    %1855 = vsyncpa [#allocation3], 1
    %1856 = vsyncpa [#allocation4], 1
    %1857 = vsyncpa [#allocation7], 1

</llo_original>
